<compile_context>
chip_gen: v7x
topology: tpu7x:2x2x1
jax: 0.10.0
libtpu: 0.0.40
codegen_flags: <defaults>
</compile_context>

<pallas_src>
import functools

import jax
import jax.numpy as jnp
from jax import lax
from jax.experimental import pallas as pl
from jax.experimental.pallas import tpu as pltpu


def _round_up(x, m):
    return (x + m - 1) // m * m


# ----------------------------------------------------------------------------
# Fused multi-layer LSTM + output Linear kernel.
# Grid: (batch tiles ["parallel"], time blocks ["arbitrary" / sequential]).
# ----------------------------------------------------------------------------
def _fused_lstm_kernel(x_ref, wx_ref, wh_ref, b_ref, h0_ref, c0_ref, wo_ref, bo_ref,
                       logits_ref, hN_ref, cN_ref,
                       gx_ref, h_ref,
                       *, n_layers, ts, bt, seq_len, h_pad, kx, need_mask):
    t_blk = pl.program_id(1)

    # Initialize the VMEM-resident recurrent carries once per batch tile.
    @pl.when(t_blk == 0)
    def _():
        hN_ref[...] = h0_ref[...]
        cN_ref[...] = c0_ref[...]

    for l in range(n_layers):
        # ---- Hoisted input projection for the WHOLE time block (layer-major):
        #      one (Ts*Bt, K) @ (K, 4H_pad) matmul, bias folded in once.
        if l == 0:
            xin = x_ref[...].reshape(ts * bt, kx)                 # bf16
            w_x = wx_ref[l]                                       # (Kx, 4H_pad) bf16
        else:
            xin = h_ref[...].reshape(ts * bt, h_pad)              # bf16 prev-layer h
            w_x = wx_ref[l]
            if h_pad < kx:                                        # static
                w_x = w_x[:h_pad, :]
        gx = jnp.dot(xin, w_x, preferred_element_type=jnp.float32) + b_ref[l]
        gx_ref[...] = gx.reshape(ts, bt, 4 * h_pad)

        # ---- Serial recurrence: only h_prev @ W_hh stays on the critical path.
        w_h = wh_ref[l]                                           # (H_pad, 4H_pad) bf16
        h_prev0 = hN_ref[l]                                       # (Bt, H_pad) f32
        c_prev0 = cN_ref[l]

        def step(s, carry):
            h_prev, c_prev = carry
            gates = gx_ref[s] + jnp.dot(h_prev.astype(jnp.bfloat16), w_h,
                                        preferred_element_type=jnp.float32)
            # 128-lane aligned gate slices (i | f | g | o), f32 elementwise math.
            i_g = jax.nn.sigmoid(gates[:, 0 * h_pad:1 * h_pad])
            f_g = jax.nn.sigmoid(gates[:, 1 * h_pad:2 * h_pad])
            g_g = jnp.tanh(gates[:, 2 * h_pad:3 * h_pad])
            o_g = jax.nn.sigmoid(gates[:, 3 * h_pad:4 * h_pad])
            c_nxt = f_g * c_prev + i_g * g_g
            h_nxt = o_g * jnp.tanh(c_nxt)
            if need_mask:                                         # static: only if S % Ts != 0
                valid = (t_blk * ts + s) < seq_len
                h_nxt = jnp.where(valid, h_nxt, h_prev)
                c_nxt = jnp.where(valid, c_nxt, c_prev)
            h_ref[s] = h_nxt.astype(jnp.bfloat16)                 # stage for next layer / Linear
            return h_nxt, c_nxt

        h_last, c_last = lax.fori_loop(0, ts, step, (h_prev0, c_prev0), unroll=True)
        hN_ref[l] = h_last
        cN_ref[l] = c_last

    # ---- Hoisted output Linear: one (Ts*Bt, H_pad) @ (H_pad, V_pad) matmul
    #      + a single lane-dense block store.
    logits = jnp.dot(h_ref[...].reshape(ts * bt, h_pad), wo_ref[...],
                     preferred_element_type=jnp.float32) + bo_ref[...]
    logits_ref[...] = logits.reshape(ts, bt, -1)


# ----------------------------------------------------------------------------
# Full module forward (mirrors LSTM.forward(x, states))
# ----------------------------------------------------------------------------
def lstm_module_forward(params, x_bf, states, *, ts_max=32):
    """x_bf: (B, S, char_length) batch-first; states = (h, c), each (L, B, H).
    Returns (logits (B*S, char_length), (hN, cN))."""
    h0_all, c0_all = states
    B, S, I = x_bf.shape
    L = len(params["lstm"])
    H = h0_all.shape[-1]
    V = params["out_w"].shape[0]

    H_pad = _round_up(H, 128)
    I_pad = _round_up(I, 128)
    V_pad = _round_up(V, 128)
    Kx = max(I_pad, H_pad)            # uniform row count for stacked W_x
    B_pad = _round_up(B, 16)          # bf16 sublane packing
    # At most 2 batch tiles: enough to feed v7x's two TensorCores without
    # shrinking the recurrent matmul's M on single-core v5e/v6e.
    if B_pad >= 32 and B_pad % 32 == 0:
        n_bblk, Bt = 2, B_pad // 2
    else:
        n_bblk, Bt = 1, B_pad
    Ts = max(1, min(ts_max, S))
    n_blk = pl.cdiv(S, Ts)
    S_pad = n_blk * Ts
    need_mask = (S_pad != S)

    def pad_gate_cols(w):
        # w: (rows, 4H) -> (rows, 4*H_pad), each gate block zero-padded to H_pad lanes
        parts = [jnp.pad(w[:, k * H:(k + 1) * H], ((0, 0), (0, H_pad - H)))
                 for k in range(4)]
        return jnp.concatenate(parts, axis=1)

    # ---- padded, stacked LSTM weights (W_x and W_hh kept separate) ----
    wx_list, wh_list, b_list = [], [], []
    for l, lp in enumerate(params["lstm"]):
        in_dim = I if l == 0 else H
        w_x = pad_gate_cols(jnp.asarray(lp["w_ih"], jnp.float32).T)   # (in_dim, 4H_pad)
        w_x = jnp.pad(w_x, ((0, Kx - in_dim), (0, 0)))
        w_h = pad_gate_cols(jnp.asarray(lp["w_hh"], jnp.float32).T)   # (H, 4H_pad)
        w_h = jnp.pad(w_h, ((0, H_pad - H), (0, 0)))
        b = (jnp.asarray(lp["b_ih"], jnp.float32)
             + jnp.asarray(lp["b_hh"], jnp.float32)).reshape(1, 4 * H)
        wx_list.append(w_x)
        wh_list.append(w_h)
        b_list.append(pad_gate_cols(b))
    wx_all = jnp.stack(wx_list).astype(jnp.bfloat16)                  # (L, Kx, 4H_pad)
    wh_all = jnp.stack(wh_list).astype(jnp.bfloat16)                  # (L, H_pad, 4H_pad)
    b_all = jnp.stack(b_list)                                         # (L, 1, 4H_pad) f32

    # ---- output Linear weights ----
    wo = jnp.asarray(params["out_w"], jnp.float32).T                  # (H, V)
    wo = jnp.pad(wo, ((0, H_pad - H), (0, V_pad - V))).astype(jnp.bfloat16)
    bo = jnp.pad(jnp.asarray(params["out_b"], jnp.float32).reshape(1, V),
                 ((0, 0), (0, V_pad - V)))

    # ---- activations / states (time-major, padded; cast to bf16 before moving) ----
    x_tm = jnp.transpose(jnp.asarray(x_bf, jnp.bfloat16), (1, 0, 2))  # (S, B, I)
    x_tm = jnp.pad(x_tm, ((0, S_pad - S), (0, B_pad - B), (0, Kx - I)))
    h0 = jnp.pad(jnp.asarray(h0_all, jnp.float32),
                 ((0, 0), (0, B_pad - B), (0, H_pad - H)))
    c0 = jnp.pad(jnp.asarray(c0_all, jnp.float32),
                 ((0, 0), (0, B_pad - B), (0, H_pad - H)))

    kernel = functools.partial(_fused_lstm_kernel, n_layers=L, ts=Ts, bt=Bt,
                               seq_len=S, h_pad=H_pad, kx=Kx, need_mask=need_mask)

    logits_pad, hN_pad, cN_pad = pl.pallas_call(
        kernel,
        out_shape=(
            jax.ShapeDtypeStruct((S_pad, B_pad, V_pad), jnp.float32),
            jax.ShapeDtypeStruct((L, B_pad, H_pad), jnp.float32),
            jax.ShapeDtypeStruct((L, B_pad, H_pad), jnp.float32),
        ),
        grid_spec=pltpu.PrefetchScalarGridSpec(
            num_scalar_prefetch=0,
            grid=(n_bblk, n_blk),
            in_specs=[
                pl.BlockSpec((Ts, Bt, Kx), lambda b, t: (t, b, 0)),           # x block
                pl.BlockSpec((L, Kx, 4 * H_pad), lambda b, t: (0, 0, 0)),     # W_x (const)
                pl.BlockSpec((L, H_pad, 4 * H_pad), lambda b, t: (0, 0, 0)),  # W_hh (const)
                pl.BlockSpec((L, 1, 4 * H_pad), lambda b, t: (0, 0, 0)),      # bias (const)
                pl.BlockSpec((L, Bt, H_pad), lambda b, t: (0, b, 0)),         # h0
                pl.BlockSpec((L, Bt, H_pad), lambda b, t: (0, b, 0)),         # c0
                pl.BlockSpec((H_pad, V_pad), lambda b, t: (0, 0)),            # W_out^T (const)
                pl.BlockSpec((1, V_pad), lambda b, t: (0, 0)),                # b_out (const)
            ],
            out_specs=[
                pl.BlockSpec((Ts, Bt, V_pad), lambda b, t: (t, b, 0)),        # logits
                pl.BlockSpec((L, Bt, H_pad), lambda b, t: (0, b, 0)),         # hN (carry)
                pl.BlockSpec((L, Bt, H_pad), lambda b, t: (0, b, 0)),         # cN (carry)
            ],
            scratch_shapes=[
                pltpu.VMEM((Ts, Bt, 4 * H_pad), jnp.float32),   # hoisted gate pre-activations
                pltpu.VMEM((Ts, Bt, H_pad), jnp.bfloat16),      # per-layer h for the block
            ],
        ),
        compiler_params=pltpu.CompilerParams(
            dimension_semantics=("parallel", "arbitrary")),   # batch parallel, time sequential
    )(x_tm, wx_all, wh_all, b_all, h0, c0, wo, bo)

    # TODO(synk): emit logits batch-major / bf16 from the kernel to drop this
    # extra HBM pass (needs an in-kernel (Ts,B)->(B,Ts) transpose); negligible
    # for char-sized vocabularies, so kept in the wrapper for robustness.
    logits = jnp.transpose(logits_pad[:S, :B, :V], (1, 0, 2)).reshape(B * S, V)
    hN = hN_pad[:, :B, :H]
    cN = cN_pad[:, :B, :H]
    return logits, (hN, cN)


# ----------------------------------------------------------------------------
# Pure-JAX reference (mirrors the kernel's bf16-matmul / f32-elementwise math)
# ----------------------------------------------------------------------------
def _ref_forward(params, x_bf, states):
    h0_all, c0_all = states
    B, S, _ = x_bf.shape
    layer_in = jnp.asarray(x_bf, jnp.float32)
    hNs, cNs = [], []
    for l, lp in enumerate(params["lstm"]):
        H = lp["w_hh"].shape[1]
        w_x = jnp.asarray(lp["w_ih"], jnp.float32).T.astype(jnp.bfloat16)
        w_h = jnp.asarray(lp["w_hh"], jnp.float32).T.astype(jnp.bfloat16)
        b = lp["b_ih"] + lp["b_hh"]
        h = h0_all[l]
        c = c0_all[l]
        outs = []
        for t in range(S):
            g = (jnp.dot(layer_in[:, t, :].astype(jnp.bfloat16), w_x,
                         preferred_element_type=jnp.float32)
                 + jnp.dot(h.astype(jnp.bfloat16), w_h,
                           preferred_element_type=jnp.float32) + b)
            i = jax.nn.sigmoid(g[:, 0 * H:1 * H])
            f = jax.nn.sigmoid(g[:, 1 * H:2 * H])
            gg = jnp.tanh(g[:, 2 * H:3 * H])
            o = jax.nn.sigmoid(g[:, 3 * H:4 * H])
            c = f * c + i * gg
            h = o * jnp.tanh(c)
            outs.append(h)
        layer_in = jnp.stack(outs, axis=1)
        hNs.append(h)
        cNs.append(c)
    flat = layer_in.reshape(B * S, -1)
    logits = jnp.dot(flat.astype(jnp.bfloat16),
                     jnp.asarray(params["out_w"], jnp.float32).T.astype(jnp.bfloat16),
                     preferred_element_type=jnp.float32) + params["out_b"]
    return logits, (jnp.stack(hNs), jnp.stack(cNs))


# ----------------------------------------------------------------------------
# Deterministic parameter init (PyTorch default: U(-1/sqrt(H), 1/sqrt(H)))
# ----------------------------------------------------------------------------
def init_params(key, char_length, hidden_size, n_layers):
    bound = 1.0 / jnp.sqrt(hidden_size)
    params = {"lstm": []}
    for l in range(n_layers):
        in_dim = char_length if l == 0 else hidden_size
        key, k1, k2, k3, k4 = jax.random.split(key, 5)
        params["lstm"].append({
            "w_ih": jax.random.uniform(k1, (4 * hidden_size, in_dim),
                                       jnp.float32, -bound, bound),
            "w_hh": jax.random.uniform(k2, (4 * hidden_size, hidden_size),
                                       jnp.float32, -bound, bound),
            "b_ih": jax.random.uniform(k3, (4 * hidden_size,),
                                       jnp.float32, -bound, bound),
            "b_hh": jax.random.uniform(k4, (4 * hidden_size,),
                                       jnp.float32, -bound, bound),
        })
    key, k5, k6 = jax.random.split(key, 3)
    params["out_w"] = jax.random.uniform(k5, (char_length, hidden_size),
                                         jnp.float32, -bound, bound)
    params["out_b"] = jax.random.uniform(k6, (char_length,),
                                         jnp.float32, -bound, bound)
    return params


if __name__ == "__main__":
    char_length = 32   # one-hot vocab size (LSTM input size & output classes)
    hidden_size = 32
    n_layers = 2
    batch = 2
    seq = 8

    key = jax.random.PRNGKey(0)
    pkey, xkey = jax.random.split(key)
    params = init_params(pkey, char_length, hidden_size, n_layers)

    x = jax.random.normal(xkey, (batch, seq, char_length), jnp.float32)
    # init_states(batch): zero hidden/cell
    states = (jnp.zeros((n_layers, batch, hidden_size), jnp.float32),
              jnp.zeros((n_layers, batch, hidden_size), jnp.float32))

    logits, (hN, cN) = lstm_module_forward(params, x, states)
    logits = jax.block_until_ready(logits)
    hN = jax.block_until_ready(hN)
    cN = jax.block_until_ready(cN)

    assert logits.shape == (batch * seq, char_length)
    assert hN.shape == (n_layers, batch, hidden_size)
    assert cN.shape == (n_layers, batch, hidden_size)

    # Correctness check against a pure-JAX reference with matching precision.
    ref_logits, (ref_h, ref_c) = _ref_forward(params, x, states)
    assert jnp.allclose(logits, ref_logits, atol=2e-3, rtol=2e-3)
    assert jnp.allclose(hN, ref_h, atol=2e-3, rtol=2e-3)
    assert jnp.allclose(cN, ref_c, atol=2e-3, rtol=2e-3)

    print("KERNEL_OK")
</pallas_src>

<mosaic_0001>
module attributes {stable_mosaic.version = 11 : i64} {
  func.func @_fused_lstm_kernel(%arg0: i32, %arg1: i32, %arg2: memref<8x16x128xbf16, #tpu.memory_space<vmem>>, %arg3: memref<2x128x512xbf16, #tpu.memory_space<vmem>>, %arg4: memref<2x128x512xbf16, #tpu.memory_space<vmem>>, %arg5: memref<2x1x512xf32, #tpu.memory_space<vmem>>, %arg6: memref<2x16x128xf32, #tpu.memory_space<vmem>>, %arg7: memref<2x16x128xf32, #tpu.memory_space<vmem>>, %arg8: memref<128x128xbf16, #tpu.memory_space<vmem>>, %arg9: memref<1x128xf32, #tpu.memory_space<vmem>>, %arg10: memref<8x16x128xf32, #tpu.memory_space<vmem>>, %arg11: memref<2x16x128xf32, #tpu.memory_space<vmem>>, %arg12: memref<2x16x128xf32, #tpu.memory_space<vmem>>, %arg13: memref<8x16x512xf32, #tpu.memory_space<vmem>>, %arg14: memref<8x16x128xbf16, #tpu.memory_space<vmem>>) attributes {dimension_semantics = [#tpu.dimension_semantics<parallel>, #tpu.dimension_semantics<arbitrary>], iteration_bounds = array<i64: 1, 1>, scalar_prefetch = 0 : i64, scratch_operands = 2 : i64, tpu.core_type = #tpu.core_type<tc>, window_params = [{transform_indices = @transform_0, window_bounds = array<i64: 8, 16, 128>}, {pipeline_mode = #tpu.pipeline_mode<synchronous>, transform_indices = @transform_1, window_bounds = array<i64: 2, 128, 512>}, {pipeline_mode = #tpu.pipeline_mode<synchronous>, transform_indices = @transform_2, window_bounds = array<i64: 2, 128, 512>}, {pipeline_mode = #tpu.pipeline_mode<synchronous>, transform_indices = @transform_3, window_bounds = array<i64: 2, 1, 512>}, {transform_indices = @transform_4, window_bounds = array<i64: 2, 16, 128>}, {transform_indices = @transform_5, window_bounds = array<i64: 2, 16, 128>}, {pipeline_mode = #tpu.pipeline_mode<synchronous>, transform_indices = @transform_6, window_bounds = array<i64: 128, 128>}, {pipeline_mode = #tpu.pipeline_mode<synchronous>, transform_indices = @transform_7, window_bounds = array<i64: 1, 128>}, {transform_indices = @transform_8, window_bounds = array<i64: 8, 16, 128>}, {transform_indices = @transform_9, window_bounds = array<i64: 2, 16, 128>}, {transform_indices = @transform_10, window_bounds = array<i64: 2, 16, 128>}]} {
    %c0_i32 = arith.constant 0 : i32
    %0 = arith.cmpi eq, %arg1, %c0_i32 : i32
    %1 = arith.extui %0 : i1 to i32
    %c0_i32_0 = arith.constant 0 : i32
    %2 = arith.cmpi ne, %1, %c0_i32_0 : i32
    scf.if %2 {
      %c0_203 = arith.constant 0 : index
      %c0_204 = arith.constant 0 : index
      %c0_205 = arith.constant 0 : index
      %634 = vector.load %arg6[%c0_203, %c0_204, %c0_205] : memref<2x16x128xf32, #tpu.memory_space<vmem>>, vector<2x16x128xf32>
      %c0_206 = arith.constant 0 : index
      %c0_207 = arith.constant 0 : index
      %c0_208 = arith.constant 0 : index
      %635 = vector.load %arg11[%c0_206, %c0_207, %c0_208] : memref<2x16x128xf32, #tpu.memory_space<vmem>>, vector<2x16x128xf32>
      tpu.vector_store %arg11[%c0_206, %c0_207, %c0_208], %634 {strides = array<i32>} : memref<2x16x128xf32, #tpu.memory_space<vmem>>, vector<2x16x128xf32>,
      %c0_209 = arith.constant 0 : index
      %c0_210 = arith.constant 0 : index
      %c0_211 = arith.constant 0 : index
      %636 = vector.load %arg7[%c0_209, %c0_210, %c0_211] : memref<2x16x128xf32, #tpu.memory_space<vmem>>, vector<2x16x128xf32>
      %c0_212 = arith.constant 0 : index
      %c0_213 = arith.constant 0 : index
      %c0_214 = arith.constant 0 : index
      %637 = vector.load %arg12[%c0_212, %c0_213, %c0_214] : memref<2x16x128xf32, #tpu.memory_space<vmem>>, vector<2x16x128xf32>
      tpu.vector_store %arg12[%c0_212, %c0_213, %c0_214], %636 {strides = array<i32>} : memref<2x16x128xf32, #tpu.memory_space<vmem>>, vector<2x16x128xf32>,
    } else {
    }
    %c0 = arith.constant 0 : index
    %c0_1 = arith.constant 0 : index
    %c0_2 = arith.constant 0 : index
    %3 = vector.load %arg2[%c0, %c0_1, %c0_2] : memref<8x16x128xbf16, #tpu.memory_space<vmem>>, vector<8x16x128xbf16>
    %4 = vector.shape_cast %3 : vector<8x16x128xbf16> to vector<128x128xbf16>
    %c0_3 = arith.constant 0 : index
    %c0_4 = arith.constant 0 : index
    %c0_5 = arith.constant 0 : index
    %5 = vector.load %arg3[%c0_3, %c0_4, %c0_5] : memref<2x128x512xbf16, #tpu.memory_space<vmem>>, vector<1x128x512xbf16>
    %6 = vector.shape_cast %5 : vector<1x128x512xbf16> to vector<128x512xbf16>
    %cst = arith.constant dense<0.000000e+00> : vector<128x512xf32>
    %7 = tpu.matmul %4, %6, %cst {dimension_numbers = #tpu.dot_dimension_numbers<[1], [0], [0], [1], [0, 0, 1, 1], [], []>} : vector<128x128xbf16>, vector<128x512xbf16>, vector<128x512xf32> -> vector<128x512xf32>
    %c0_6 = arith.constant 0 : index
    %c0_7 = arith.constant 0 : index
    %c0_8 = arith.constant 0 : index
    %8 = vector.load %arg5[%c0_6, %c0_7, %c0_8] : memref<2x1x512xf32, #tpu.memory_space<vmem>>, vector<1x1x512xf32>
    %9 = vector.shape_cast %8 : vector<1x1x512xf32> to vector<1x512xf32>
    %10 = vector.broadcast %9 : vector<1x512xf32> to vector<128x512xf32>
    %11 = arith.addf %7, %10 : vector<128x512xf32>
    %12 = vector.shape_cast %11 : vector<128x512xf32> to vector<8x16x512xf32>
    %c0_9 = arith.constant 0 : index
    %c0_10 = arith.constant 0 : index
    %c0_11 = arith.constant 0 : index
    %13 = vector.load %arg13[%c0_9, %c0_10, %c0_11] : memref<8x16x512xf32, #tpu.memory_space<vmem>>, vector<8x16x512xf32>
    tpu.vector_store %arg13[%c0_9, %c0_10, %c0_11], %12 {strides = array<i32>} : memref<8x16x512xf32, #tpu.memory_space<vmem>>, vector<8x16x512xf32>,
    %c0_12 = arith.constant 0 : index
    %c0_13 = arith.constant 0 : index
    %c0_14 = arith.constant 0 : index
    %14 = vector.load %arg4[%c0_12, %c0_13, %c0_14] : memref<2x128x512xbf16, #tpu.memory_space<vmem>>, vector<1x128x512xbf16>
    %15 = vector.shape_cast %14 : vector<1x128x512xbf16> to vector<128x512xbf16>
    %c0_15 = arith.constant 0 : index
    %c0_16 = arith.constant 0 : index
    %c0_17 = arith.constant 0 : index
    %16 = vector.load %arg11[%c0_15, %c0_16, %c0_17] : memref<2x16x128xf32, #tpu.memory_space<vmem>>, vector<1x16x128xf32>
    %17 = vector.shape_cast %16 : vector<1x16x128xf32> to vector<16x128xf32>
    %c0_18 = arith.constant 0 : index
    %c0_19 = arith.constant 0 : index
    %c0_20 = arith.constant 0 : index
    %18 = vector.load %arg12[%c0_18, %c0_19, %c0_20] : memref<2x16x128xf32, #tpu.memory_space<vmem>>, vector<1x16x128xf32>
    %19 = vector.shape_cast %18 : vector<1x16x128xf32> to vector<16x128xf32>
    %c0_i32_21 = arith.constant 0 : i32
    %20 = arith.index_cast %c0_i32_21 : i32 to index
    %c0_22 = arith.constant 0 : index
    %c0_23 = arith.constant 0 : index
    %21 = vector.load %arg13[%20, %c0_22, %c0_23] : memref<8x16x512xf32, #tpu.memory_space<vmem>>, vector<1x16x512xf32>
    %22 = vector.shape_cast %21 : vector<1x16x512xf32> to vector<16x512xf32>
    %23 = arith.truncf %17 : vector<16x128xf32> to vector<16x128xbf16>
    %cst_24 = arith.constant dense<0.000000e+00> : vector<16x512xf32>
    %24 = tpu.matmul %23, %15, %cst_24 {dimension_numbers = #tpu.dot_dimension_numbers<[1], [0], [0], [1], [0, 0, 1, 1], [], []>} : vector<16x128xbf16>, vector<128x512xbf16>, vector<16x512xf32> -> vector<16x512xf32>
    %25 = arith.addf %22, %24 : vector<16x512xf32>
    %26 = vector.extract_strided_slice %25 {offsets = [0, 0], sizes = [16, 128], strides = [1, 1]} : vector<16x512xf32> to vector<16x128xf32>
    %27 = arith.negf %26 : vector<16x128xf32>
    %28 = math.exp %27 : vector<16x128xf32>
    %cst_25 = arith.constant 1.000000e+00 : f32
    %29 = vector.broadcast %cst_25 : f32 to vector<16x128xf32>
    %30 = arith.addf %29, %28 : vector<16x128xf32>
    %31 = arith.divf %29, %30 : vector<16x128xf32>
    %32 = vector.extract_strided_slice %25 {offsets = [0, 128], sizes = [16, 128], strides = [1, 1]} : vector<16x512xf32> to vector<16x128xf32>
    %33 = arith.negf %32 : vector<16x128xf32>
    %34 = math.exp %33 : vector<16x128xf32>
    %cst_26 = arith.constant 1.000000e+00 : f32
    %35 = vector.broadcast %cst_26 : f32 to vector<16x128xf32>
    %36 = arith.addf %35, %34 : vector<16x128xf32>
    %37 = arith.divf %35, %36 : vector<16x128xf32>
    %38 = vector.extract_strided_slice %25 {offsets = [0, 256], sizes = [16, 128], strides = [1, 1]} : vector<16x512xf32> to vector<16x128xf32>
    %39 = math.tanh %38 : vector<16x128xf32>
    %40 = vector.extract_strided_slice %25 {offsets = [0, 384], sizes = [16, 128], strides = [1, 1]} : vector<16x512xf32> to vector<16x128xf32>
    %41 = arith.negf %40 : vector<16x128xf32>
    %42 = math.exp %41 : vector<16x128xf32>
    %cst_27 = arith.constant 1.000000e+00 : f32
    %43 = vector.broadcast %cst_27 : f32 to vector<16x128xf32>
    %44 = arith.addf %43, %42 : vector<16x128xf32>
    %45 = arith.divf %43, %44 : vector<16x128xf32>
    %46 = arith.mulf %37, %19 : vector<16x128xf32>
    %47 = arith.mulf %31, %39 : vector<16x128xf32>
    %48 = arith.addf %46, %47 : vector<16x128xf32>
    %49 = math.tanh %48 : vector<16x128xf32>
    %50 = arith.mulf %45, %49 : vector<16x128xf32>
    %51 = arith.truncf %50 : vector<16x128xf32> to vector<16x128xbf16>
    %52 = arith.index_cast %c0_i32_21 : i32 to index
    %c0_28 = arith.constant 0 : index
    %c0_29 = arith.constant 0 : index
    %53 = vector.load %arg14[%52, %c0_28, %c0_29] : memref<8x16x128xbf16, #tpu.memory_space<vmem>>, vector<1x16x128xbf16>
    %54 = vector.shape_cast %53 : vector<1x16x128xbf16> to vector<16x128xbf16>
    %55 = vector.shape_cast %51 : vector<16x128xbf16> to vector<1x16x128xbf16>
    tpu.vector_store %arg14[%52, %c0_28, %c0_29], %55 {strides = array<i32>} : memref<8x16x128xbf16, #tpu.memory_space<vmem>>, vector<1x16x128xbf16>,
    %c1_i32 = arith.constant 1 : i32
    %56 = arith.index_cast %c1_i32 : i32 to index
    %c0_30 = arith.constant 0 : index
    %c0_31 = arith.constant 0 : index
    %57 = vector.load %arg13[%56, %c0_30, %c0_31] : memref<8x16x512xf32, #tpu.memory_space<vmem>>, vector<1x16x512xf32>
    %58 = vector.shape_cast %57 : vector<1x16x512xf32> to vector<16x512xf32>
    %59 = arith.truncf %50 : vector<16x128xf32> to vector<16x128xbf16>
    %cst_32 = arith.constant dense<0.000000e+00> : vector<16x512xf32>
    %60 = tpu.matmul %59, %15, %cst_32 {dimension_numbers = #tpu.dot_dimension_numbers<[1], [0], [0], [1], [0, 0, 1, 1], [], []>} : vector<16x128xbf16>, vector<128x512xbf16>, vector<16x512xf32> -> vector<16x512xf32>
    %61 = arith.addf %58, %60 : vector<16x512xf32>
    %62 = vector.extract_strided_slice %61 {offsets = [0, 0], sizes = [16, 128], strides = [1, 1]} : vector<16x512xf32> to vector<16x128xf32>
    %63 = arith.negf %62 : vector<16x128xf32>
    %64 = math.exp %63 : vector<16x128xf32>
    %cst_33 = arith.constant 1.000000e+00 : f32
    %65 = vector.broadcast %cst_33 : f32 to vector<16x128xf32>
    %66 = arith.addf %65, %64 : vector<16x128xf32>
    %67 = arith.divf %65, %66 : vector<16x128xf32>
    %68 = vector.extract_strided_slice %61 {offsets = [0, 128], sizes = [16, 128], strides = [1, 1]} : vector<16x512xf32> to vector<16x128xf32>
    %69 = arith.negf %68 : vector<16x128xf32>
    %70 = math.exp %69 : vector<16x128xf32>
    %cst_34 = arith.constant 1.000000e+00 : f32
    %71 = vector.broadcast %cst_34 : f32 to vector<16x128xf32>
    %72 = arith.addf %71, %70 : vector<16x128xf32>
    %73 = arith.divf %71, %72 : vector<16x128xf32>
    %74 = vector.extract_strided_slice %61 {offsets = [0, 256], sizes = [16, 128], strides = [1, 1]} : vector<16x512xf32> to vector<16x128xf32>
    %75 = math.tanh %74 : vector<16x128xf32>
    %76 = vector.extract_strided_slice %61 {offsets = [0, 384], sizes = [16, 128], strides = [1, 1]} : vector<16x512xf32> to vector<16x128xf32>
    %77 = arith.negf %76 : vector<16x128xf32>
    %78 = math.exp %77 : vector<16x128xf32>
    %cst_35 = arith.constant 1.000000e+00 : f32
    %79 = vector.broadcast %cst_35 : f32 to vector<16x128xf32>
    %80 = arith.addf %79, %78 : vector<16x128xf32>
    %81 = arith.divf %79, %80 : vector<16x128xf32>
    %82 = arith.mulf %73, %48 : vector<16x128xf32>
    %83 = arith.mulf %67, %75 : vector<16x128xf32>
    %84 = arith.addf %82, %83 : vector<16x128xf32>
    %85 = math.tanh %84 : vector<16x128xf32>
    %86 = arith.mulf %81, %85 : vector<16x128xf32>
    %87 = arith.truncf %86 : vector<16x128xf32> to vector<16x128xbf16>
    %88 = arith.index_cast %c1_i32 : i32 to index
    %c0_36 = arith.constant 0 : index
    %c0_37 = arith.constant 0 : index
    %89 = vector.load %arg14[%88, %c0_36, %c0_37] : memref<8x16x128xbf16, #tpu.memory_space<vmem>>, vector<1x16x128xbf16>
    %90 = vector.shape_cast %89 : vector<1x16x128xbf16> to vector<16x128xbf16>
    %91 = vector.shape_cast %87 : vector<16x128xbf16> to vector<1x16x128xbf16>
    tpu.vector_store %arg14[%88, %c0_36, %c0_37], %91 {strides = array<i32>} : memref<8x16x128xbf16, #tpu.memory_space<vmem>>, vector<1x16x128xbf16>,
    %c2_i32 = arith.constant 2 : i32
    %92 = arith.index_cast %c2_i32 : i32 to index
    %c0_38 = arith.constant 0 : index
    %c0_39 = arith.constant 0 : index
    %93 = vector.load %arg13[%92, %c0_38, %c0_39] : memref<8x16x512xf32, #tpu.memory_space<vmem>>, vector<1x16x512xf32>
    %94 = vector.shape_cast %93 : vector<1x16x512xf32> to vector<16x512xf32>
    %95 = arith.truncf %86 : vector<16x128xf32> to vector<16x128xbf16>
    %cst_40 = arith.constant dense<0.000000e+00> : vector<16x512xf32>
    %96 = tpu.matmul %95, %15, %cst_40 {dimension_numbers = #tpu.dot_dimension_numbers<[1], [0], [0], [1], [0, 0, 1, 1], [], []>} : vector<16x128xbf16>, vector<128x512xbf16>, vector<16x512xf32> -> vector<16x512xf32>
    %97 = arith.addf %94, %96 : vector<16x512xf32>
    %98 = vector.extract_strided_slice %97 {offsets = [0, 0], sizes = [16, 128], strides = [1, 1]} : vector<16x512xf32> to vector<16x128xf32>
    %99 = arith.negf %98 : vector<16x128xf32>
    %100 = math.exp %99 : vector<16x128xf32>
    %cst_41 = arith.constant 1.000000e+00 : f32
    %101 = vector.broadcast %cst_41 : f32 to vector<16x128xf32>
    %102 = arith.addf %101, %100 : vector<16x128xf32>
    %103 = arith.divf %101, %102 : vector<16x128xf32>
    %104 = vector.extract_strided_slice %97 {offsets = [0, 128], sizes = [16, 128], strides = [1, 1]} : vector<16x512xf32> to vector<16x128xf32>
    %105 = arith.negf %104 : vector<16x128xf32>
    %106 = math.exp %105 : vector<16x128xf32>
    %cst_42 = arith.constant 1.000000e+00 : f32
    %107 = vector.broadcast %cst_42 : f32 to vector<16x128xf32>
    %108 = arith.addf %107, %106 : vector<16x128xf32>
    %109 = arith.divf %107, %108 : vector<16x128xf32>
    %110 = vector.extract_strided_slice %97 {offsets = [0, 256], sizes = [16, 128], strides = [1, 1]} : vector<16x512xf32> to vector<16x128xf32>
    %111 = math.tanh %110 : vector<16x128xf32>
    %112 = vector.extract_strided_slice %97 {offsets = [0, 384], sizes = [16, 128], strides = [1, 1]} : vector<16x512xf32> to vector<16x128xf32>
    %113 = arith.negf %112 : vector<16x128xf32>
    %114 = math.exp %113 : vector<16x128xf32>
    %cst_43 = arith.constant 1.000000e+00 : f32
    %115 = vector.broadcast %cst_43 : f32 to vector<16x128xf32>
    %116 = arith.addf %115, %114 : vector<16x128xf32>
    %117 = arith.divf %115, %116 : vector<16x128xf32>
    %118 = arith.mulf %109, %84 : vector<16x128xf32>
    %119 = arith.mulf %103, %111 : vector<16x128xf32>
    %120 = arith.addf %118, %119 : vector<16x128xf32>
    %121 = math.tanh %120 : vector<16x128xf32>
    %122 = arith.mulf %117, %121 : vector<16x128xf32>
    %123 = arith.truncf %122 : vector<16x128xf32> to vector<16x128xbf16>
    %124 = arith.index_cast %c2_i32 : i32 to index
    %c0_44 = arith.constant 0 : index
    %c0_45 = arith.constant 0 : index
    %125 = vector.load %arg14[%124, %c0_44, %c0_45] : memref<8x16x128xbf16, #tpu.memory_space<vmem>>, vector<1x16x128xbf16>
    %126 = vector.shape_cast %125 : vector<1x16x128xbf16> to vector<16x128xbf16>
    %127 = vector.shape_cast %123 : vector<16x128xbf16> to vector<1x16x128xbf16>
    tpu.vector_store %arg14[%124, %c0_44, %c0_45], %127 {strides = array<i32>} : memref<8x16x128xbf16, #tpu.memory_space<vmem>>, vector<1x16x128xbf16>,
    %c3_i32 = arith.constant 3 : i32
    %128 = arith.index_cast %c3_i32 : i32 to index
    %c0_46 = arith.constant 0 : index
    %c0_47 = arith.constant 0 : index
    %129 = vector.load %arg13[%128, %c0_46, %c0_47] : memref<8x16x512xf32, #tpu.memory_space<vmem>>, vector<1x16x512xf32>
    %130 = vector.shape_cast %129 : vector<1x16x512xf32> to vector<16x512xf32>
    %131 = arith.truncf %122 : vector<16x128xf32> to vector<16x128xbf16>
    %cst_48 = arith.constant dense<0.000000e+00> : vector<16x512xf32>
    %132 = tpu.matmul %131, %15, %cst_48 {dimension_numbers = #tpu.dot_dimension_numbers<[1], [0], [0], [1], [0, 0, 1, 1], [], []>} : vector<16x128xbf16>, vector<128x512xbf16>, vector<16x512xf32> -> vector<16x512xf32>
    %133 = arith.addf %130, %132 : vector<16x512xf32>
    %134 = vector.extract_strided_slice %133 {offsets = [0, 0], sizes = [16, 128], strides = [1, 1]} : vector<16x512xf32> to vector<16x128xf32>
    %135 = arith.negf %134 : vector<16x128xf32>
    %136 = math.exp %135 : vector<16x128xf32>
    %cst_49 = arith.constant 1.000000e+00 : f32
    %137 = vector.broadcast %cst_49 : f32 to vector<16x128xf32>
    %138 = arith.addf %137, %136 : vector<16x128xf32>
    %139 = arith.divf %137, %138 : vector<16x128xf32>
    %140 = vector.extract_strided_slice %133 {offsets = [0, 128], sizes = [16, 128], strides = [1, 1]} : vector<16x512xf32> to vector<16x128xf32>
    %141 = arith.negf %140 : vector<16x128xf32>
    %142 = math.exp %141 : vector<16x128xf32>
    %cst_50 = arith.constant 1.000000e+00 : f32
    %143 = vector.broadcast %cst_50 : f32 to vector<16x128xf32>
    %144 = arith.addf %143, %142 : vector<16x128xf32>
    %145 = arith.divf %143, %144 : vector<16x128xf32>
    %146 = vector.extract_strided_slice %133 {offsets = [0, 256], sizes = [16, 128], strides = [1, 1]} : vector<16x512xf32> to vector<16x128xf32>
    %147 = math.tanh %146 : vector<16x128xf32>
    %148 = vector.extract_strided_slice %133 {offsets = [0, 384], sizes = [16, 128], strides = [1, 1]} : vector<16x512xf32> to vector<16x128xf32>
    %149 = arith.negf %148 : vector<16x128xf32>
    %150 = math.exp %149 : vector<16x128xf32>
    %cst_51 = arith.constant 1.000000e+00 : f32
    %151 = vector.broadcast %cst_51 : f32 to vector<16x128xf32>
    %152 = arith.addf %151, %150 : vector<16x128xf32>
    %153 = arith.divf %151, %152 : vector<16x128xf32>
    %154 = arith.mulf %145, %120 : vector<16x128xf32>
    %155 = arith.mulf %139, %147 : vector<16x128xf32>
    %156 = arith.addf %154, %155 : vector<16x128xf32>
    %157 = math.tanh %156 : vector<16x128xf32>
    %158 = arith.mulf %153, %157 : vector<16x128xf32>
    %159 = arith.truncf %158 : vector<16x128xf32> to vector<16x128xbf16>
    %160 = arith.index_cast %c3_i32 : i32 to index
    %c0_52 = arith.constant 0 : index
    %c0_53 = arith.constant 0 : index
    %161 = vector.load %arg14[%160, %c0_52, %c0_53] : memref<8x16x128xbf16, #tpu.memory_space<vmem>>, vector<1x16x128xbf16>
    %162 = vector.shape_cast %161 : vector<1x16x128xbf16> to vector<16x128xbf16>
    %163 = vector.shape_cast %159 : vector<16x128xbf16> to vector<1x16x128xbf16>
    tpu.vector_store %arg14[%160, %c0_52, %c0_53], %163 {strides = array<i32>} : memref<8x16x128xbf16, #tpu.memory_space<vmem>>, vector<1x16x128xbf16>,
    %c4_i32 = arith.constant 4 : i32
    %164 = arith.index_cast %c4_i32 : i32 to index
    %c0_54 = arith.constant 0 : index
    %c0_55 = arith.constant 0 : index
    %165 = vector.load %arg13[%164, %c0_54, %c0_55] : memref<8x16x512xf32, #tpu.memory_space<vmem>>, vector<1x16x512xf32>
    %166 = vector.shape_cast %165 : vector<1x16x512xf32> to vector<16x512xf32>
    %167 = arith.truncf %158 : vector<16x128xf32> to vector<16x128xbf16>
    %cst_56 = arith.constant dense<0.000000e+00> : vector<16x512xf32>
    %168 = tpu.matmul %167, %15, %cst_56 {dimension_numbers = #tpu.dot_dimension_numbers<[1], [0], [0], [1], [0, 0, 1, 1], [], []>} : vector<16x128xbf16>, vector<128x512xbf16>, vector<16x512xf32> -> vector<16x512xf32>
    %169 = arith.addf %166, %168 : vector<16x512xf32>
    %170 = vector.extract_strided_slice %169 {offsets = [0, 0], sizes = [16, 128], strides = [1, 1]} : vector<16x512xf32> to vector<16x128xf32>
    %171 = arith.negf %170 : vector<16x128xf32>
    %172 = math.exp %171 : vector<16x128xf32>
    %cst_57 = arith.constant 1.000000e+00 : f32
    %173 = vector.broadcast %cst_57 : f32 to vector<16x128xf32>
    %174 = arith.addf %173, %172 : vector<16x128xf32>
    %175 = arith.divf %173, %174 : vector<16x128xf32>
    %176 = vector.extract_strided_slice %169 {offsets = [0, 128], sizes = [16, 128], strides = [1, 1]} : vector<16x512xf32> to vector<16x128xf32>
    %177 = arith.negf %176 : vector<16x128xf32>
    %178 = math.exp %177 : vector<16x128xf32>
    %cst_58 = arith.constant 1.000000e+00 : f32
    %179 = vector.broadcast %cst_58 : f32 to vector<16x128xf32>
    %180 = arith.addf %179, %178 : vector<16x128xf32>
    %181 = arith.divf %179, %180 : vector<16x128xf32>
    %182 = vector.extract_strided_slice %169 {offsets = [0, 256], sizes = [16, 128], strides = [1, 1]} : vector<16x512xf32> to vector<16x128xf32>
    %183 = math.tanh %182 : vector<16x128xf32>
    %184 = vector.extract_strided_slice %169 {offsets = [0, 384], sizes = [16, 128], strides = [1, 1]} : vector<16x512xf32> to vector<16x128xf32>
    %185 = arith.negf %184 : vector<16x128xf32>
    %186 = math.exp %185 : vector<16x128xf32>
    %cst_59 = arith.constant 1.000000e+00 : f32
    %187 = vector.broadcast %cst_59 : f32 to vector<16x128xf32>
    %188 = arith.addf %187, %186 : vector<16x128xf32>
    %189 = arith.divf %187, %188 : vector<16x128xf32>
    %190 = arith.mulf %181, %156 : vector<16x128xf32>
    %191 = arith.mulf %175, %183 : vector<16x128xf32>
    %192 = arith.addf %190, %191 : vector<16x128xf32>
    %193 = math.tanh %192 : vector<16x128xf32>
    %194 = arith.mulf %189, %193 : vector<16x128xf32>
    %195 = arith.truncf %194 : vector<16x128xf32> to vector<16x128xbf16>
    %196 = arith.index_cast %c4_i32 : i32 to index
    %c0_60 = arith.constant 0 : index
    %c0_61 = arith.constant 0 : index
    %197 = vector.load %arg14[%196, %c0_60, %c0_61] : memref<8x16x128xbf16, #tpu.memory_space<vmem>>, vector<1x16x128xbf16>
    %198 = vector.shape_cast %197 : vector<1x16x128xbf16> to vector<16x128xbf16>
    %199 = vector.shape_cast %195 : vector<16x128xbf16> to vector<1x16x128xbf16>
    tpu.vector_store %arg14[%196, %c0_60, %c0_61], %199 {strides = array<i32>} : memref<8x16x128xbf16, #tpu.memory_space<vmem>>, vector<1x16x128xbf16>,
    %c5_i32 = arith.constant 5 : i32
    %200 = arith.index_cast %c5_i32 : i32 to index
    %c0_62 = arith.constant 0 : index
    %c0_63 = arith.constant 0 : index
    %201 = vector.load %arg13[%200, %c0_62, %c0_63] : memref<8x16x512xf32, #tpu.memory_space<vmem>>, vector<1x16x512xf32>
    %202 = vector.shape_cast %201 : vector<1x16x512xf32> to vector<16x512xf32>
    %203 = arith.truncf %194 : vector<16x128xf32> to vector<16x128xbf16>
    %cst_64 = arith.constant dense<0.000000e+00> : vector<16x512xf32>
    %204 = tpu.matmul %203, %15, %cst_64 {dimension_numbers = #tpu.dot_dimension_numbers<[1], [0], [0], [1], [0, 0, 1, 1], [], []>} : vector<16x128xbf16>, vector<128x512xbf16>, vector<16x512xf32> -> vector<16x512xf32>
    %205 = arith.addf %202, %204 : vector<16x512xf32>
    %206 = vector.extract_strided_slice %205 {offsets = [0, 0], sizes = [16, 128], strides = [1, 1]} : vector<16x512xf32> to vector<16x128xf32>
    %207 = arith.negf %206 : vector<16x128xf32>
    %208 = math.exp %207 : vector<16x128xf32>
    %cst_65 = arith.constant 1.000000e+00 : f32
    %209 = vector.broadcast %cst_65 : f32 to vector<16x128xf32>
    %210 = arith.addf %209, %208 : vector<16x128xf32>
    %211 = arith.divf %209, %210 : vector<16x128xf32>
    %212 = vector.extract_strided_slice %205 {offsets = [0, 128], sizes = [16, 128], strides = [1, 1]} : vector<16x512xf32> to vector<16x128xf32>
    %213 = arith.negf %212 : vector<16x128xf32>
    %214 = math.exp %213 : vector<16x128xf32>
    %cst_66 = arith.constant 1.000000e+00 : f32
    %215 = vector.broadcast %cst_66 : f32 to vector<16x128xf32>
    %216 = arith.addf %215, %214 : vector<16x128xf32>
    %217 = arith.divf %215, %216 : vector<16x128xf32>
    %218 = vector.extract_strided_slice %205 {offsets = [0, 256], sizes = [16, 128], strides = [1, 1]} : vector<16x512xf32> to vector<16x128xf32>
    %219 = math.tanh %218 : vector<16x128xf32>
    %220 = vector.extract_strided_slice %205 {offsets = [0, 384], sizes = [16, 128], strides = [1, 1]} : vector<16x512xf32> to vector<16x128xf32>
    %221 = arith.negf %220 : vector<16x128xf32>
    %222 = math.exp %221 : vector<16x128xf32>
    %cst_67 = arith.constant 1.000000e+00 : f32
    %223 = vector.broadcast %cst_67 : f32 to vector<16x128xf32>
    %224 = arith.addf %223, %222 : vector<16x128xf32>
    %225 = arith.divf %223, %224 : vector<16x128xf32>
    %226 = arith.mulf %217, %192 : vector<16x128xf32>
    %227 = arith.mulf %211, %219 : vector<16x128xf32>
    %228 = arith.addf %226, %227 : vector<16x128xf32>
    %229 = math.tanh %228 : vector<16x128xf32>
    %230 = arith.mulf %225, %229 : vector<16x128xf32>
    %231 = arith.truncf %230 : vector<16x128xf32> to vector<16x128xbf16>
    %232 = arith.index_cast %c5_i32 : i32 to index
    %c0_68 = arith.constant 0 : index
    %c0_69 = arith.constant 0 : index
    %233 = vector.load %arg14[%232, %c0_68, %c0_69] : memref<8x16x128xbf16, #tpu.memory_space<vmem>>, vector<1x16x128xbf16>
    %234 = vector.shape_cast %233 : vector<1x16x128xbf16> to vector<16x128xbf16>
    %235 = vector.shape_cast %231 : vector<16x128xbf16> to vector<1x16x128xbf16>
    tpu.vector_store %arg14[%232, %c0_68, %c0_69], %235 {strides = array<i32>} : memref<8x16x128xbf16, #tpu.memory_space<vmem>>, vector<1x16x128xbf16>,
    %c6_i32 = arith.constant 6 : i32
    %236 = arith.index_cast %c6_i32 : i32 to index
    %c0_70 = arith.constant 0 : index
    %c0_71 = arith.constant 0 : index
    %237 = vector.load %arg13[%236, %c0_70, %c0_71] : memref<8x16x512xf32, #tpu.memory_space<vmem>>, vector<1x16x512xf32>
    %238 = vector.shape_cast %237 : vector<1x16x512xf32> to vector<16x512xf32>
    %239 = arith.truncf %230 : vector<16x128xf32> to vector<16x128xbf16>
    %cst_72 = arith.constant dense<0.000000e+00> : vector<16x512xf32>
    %240 = tpu.matmul %239, %15, %cst_72 {dimension_numbers = #tpu.dot_dimension_numbers<[1], [0], [0], [1], [0, 0, 1, 1], [], []>} : vector<16x128xbf16>, vector<128x512xbf16>, vector<16x512xf32> -> vector<16x512xf32>
    %241 = arith.addf %238, %240 : vector<16x512xf32>
    %242 = vector.extract_strided_slice %241 {offsets = [0, 0], sizes = [16, 128], strides = [1, 1]} : vector<16x512xf32> to vector<16x128xf32>
    %243 = arith.negf %242 : vector<16x128xf32>
    %244 = math.exp %243 : vector<16x128xf32>
    %cst_73 = arith.constant 1.000000e+00 : f32
    %245 = vector.broadcast %cst_73 : f32 to vector<16x128xf32>
    %246 = arith.addf %245, %244 : vector<16x128xf32>
    %247 = arith.divf %245, %246 : vector<16x128xf32>
    %248 = vector.extract_strided_slice %241 {offsets = [0, 128], sizes = [16, 128], strides = [1, 1]} : vector<16x512xf32> to vector<16x128xf32>
    %249 = arith.negf %248 : vector<16x128xf32>
    %250 = math.exp %249 : vector<16x128xf32>
    %cst_74 = arith.constant 1.000000e+00 : f32
    %251 = vector.broadcast %cst_74 : f32 to vector<16x128xf32>
    %252 = arith.addf %251, %250 : vector<16x128xf32>
    %253 = arith.divf %251, %252 : vector<16x128xf32>
    %254 = vector.extract_strided_slice %241 {offsets = [0, 256], sizes = [16, 128], strides = [1, 1]} : vector<16x512xf32> to vector<16x128xf32>
    %255 = math.tanh %254 : vector<16x128xf32>
    %256 = vector.extract_strided_slice %241 {offsets = [0, 384], sizes = [16, 128], strides = [1, 1]} : vector<16x512xf32> to vector<16x128xf32>
    %257 = arith.negf %256 : vector<16x128xf32>
    %258 = math.exp %257 : vector<16x128xf32>
    %cst_75 = arith.constant 1.000000e+00 : f32
    %259 = vector.broadcast %cst_75 : f32 to vector<16x128xf32>
    %260 = arith.addf %259, %258 : vector<16x128xf32>
    %261 = arith.divf %259, %260 : vector<16x128xf32>
    %262 = arith.mulf %253, %228 : vector<16x128xf32>
    %263 = arith.mulf %247, %255 : vector<16x128xf32>
    %264 = arith.addf %262, %263 : vector<16x128xf32>
    %265 = math.tanh %264 : vector<16x128xf32>
    %266 = arith.mulf %261, %265 : vector<16x128xf32>
    %267 = arith.truncf %266 : vector<16x128xf32> to vector<16x128xbf16>
    %268 = arith.index_cast %c6_i32 : i32 to index
    %c0_76 = arith.constant 0 : index
    %c0_77 = arith.constant 0 : index
    %269 = vector.load %arg14[%268, %c0_76, %c0_77] : memref<8x16x128xbf16, #tpu.memory_space<vmem>>, vector<1x16x128xbf16>
    %270 = vector.shape_cast %269 : vector<1x16x128xbf16> to vector<16x128xbf16>
    %271 = vector.shape_cast %267 : vector<16x128xbf16> to vector<1x16x128xbf16>
    tpu.vector_store %arg14[%268, %c0_76, %c0_77], %271 {strides = array<i32>} : memref<8x16x128xbf16, #tpu.memory_space<vmem>>, vector<1x16x128xbf16>,
    %c7_i32 = arith.constant 7 : i32
    %272 = arith.index_cast %c7_i32 : i32 to index
    %c0_78 = arith.constant 0 : index
    %c0_79 = arith.constant 0 : index
    %273 = vector.load %arg13[%272, %c0_78, %c0_79] : memref<8x16x512xf32, #tpu.memory_space<vmem>>, vector<1x16x512xf32>
    %274 = vector.shape_cast %273 : vector<1x16x512xf32> to vector<16x512xf32>
    %275 = arith.truncf %266 : vector<16x128xf32> to vector<16x128xbf16>
    %cst_80 = arith.constant dense<0.000000e+00> : vector<16x512xf32>
    %276 = tpu.matmul %275, %15, %cst_80 {dimension_numbers = #tpu.dot_dimension_numbers<[1], [0], [0], [1], [0, 0, 1, 1], [], []>} : vector<16x128xbf16>, vector<128x512xbf16>, vector<16x512xf32> -> vector<16x512xf32>
    %277 = arith.addf %274, %276 : vector<16x512xf32>
    %278 = vector.extract_strided_slice %277 {offsets = [0, 0], sizes = [16, 128], strides = [1, 1]} : vector<16x512xf32> to vector<16x128xf32>
    %279 = arith.negf %278 : vector<16x128xf32>
    %280 = math.exp %279 : vector<16x128xf32>
    %cst_81 = arith.constant 1.000000e+00 : f32
    %281 = vector.broadcast %cst_81 : f32 to vector<16x128xf32>
    %282 = arith.addf %281, %280 : vector<16x128xf32>
    %283 = arith.divf %281, %282 : vector<16x128xf32>
    %284 = vector.extract_strided_slice %277 {offsets = [0, 128], sizes = [16, 128], strides = [1, 1]} : vector<16x512xf32> to vector<16x128xf32>
    %285 = arith.negf %284 : vector<16x128xf32>
    %286 = math.exp %285 : vector<16x128xf32>
    %cst_82 = arith.constant 1.000000e+00 : f32
    %287 = vector.broadcast %cst_82 : f32 to vector<16x128xf32>
    %288 = arith.addf %287, %286 : vector<16x128xf32>
    %289 = arith.divf %287, %288 : vector<16x128xf32>
    %290 = vector.extract_strided_slice %277 {offsets = [0, 256], sizes = [16, 128], strides = [1, 1]} : vector<16x512xf32> to vector<16x128xf32>
    %291 = math.tanh %290 : vector<16x128xf32>
    %292 = vector.extract_strided_slice %277 {offsets = [0, 384], sizes = [16, 128], strides = [1, 1]} : vector<16x512xf32> to vector<16x128xf32>
    %293 = arith.negf %292 : vector<16x128xf32>
    %294 = math.exp %293 : vector<16x128xf32>
    %cst_83 = arith.constant 1.000000e+00 : f32
    %295 = vector.broadcast %cst_83 : f32 to vector<16x128xf32>
    %296 = arith.addf %295, %294 : vector<16x128xf32>
    %297 = arith.divf %295, %296 : vector<16x128xf32>
    %298 = arith.mulf %289, %264 : vector<16x128xf32>
    %299 = arith.mulf %283, %291 : vector<16x128xf32>
    %300 = arith.addf %298, %299 : vector<16x128xf32>
    %301 = math.tanh %300 : vector<16x128xf32>
    %302 = arith.mulf %297, %301 : vector<16x128xf32>
    %303 = arith.truncf %302 : vector<16x128xf32> to vector<16x128xbf16>
    %304 = arith.index_cast %c7_i32 : i32 to index
    %c0_84 = arith.constant 0 : index
    %c0_85 = arith.constant 0 : index
    %305 = vector.load %arg14[%304, %c0_84, %c0_85] : memref<8x16x128xbf16, #tpu.memory_space<vmem>>, vector<1x16x128xbf16>
    %306 = vector.shape_cast %305 : vector<1x16x128xbf16> to vector<16x128xbf16>
    %307 = vector.shape_cast %303 : vector<16x128xbf16> to vector<1x16x128xbf16>
    tpu.vector_store %arg14[%304, %c0_84, %c0_85], %307 {strides = array<i32>} : memref<8x16x128xbf16, #tpu.memory_space<vmem>>, vector<1x16x128xbf16>,
    %c8_i32 = arith.constant 8 : i32
    %c0_86 = arith.constant 0 : index
    %c0_87 = arith.constant 0 : index
    %c0_88 = arith.constant 0 : index
    %308 = vector.load %arg11[%c0_86, %c0_87, %c0_88] : memref<2x16x128xf32, #tpu.memory_space<vmem>>, vector<1x16x128xf32>
    %309 = vector.shape_cast %308 : vector<1x16x128xf32> to vector<16x128xf32>
    %310 = vector.shape_cast %302 : vector<16x128xf32> to vector<1x16x128xf32>
    tpu.vector_store %arg11[%c0_86, %c0_87, %c0_88], %310 {strides = array<i32>} : memref<2x16x128xf32, #tpu.memory_space<vmem>>, vector<1x16x128xf32>,
    %c0_89 = arith.constant 0 : index
    %c0_90 = arith.constant 0 : index
    %c0_91 = arith.constant 0 : index
    %311 = vector.load %arg12[%c0_89, %c0_90, %c0_91] : memref<2x16x128xf32, #tpu.memory_space<vmem>>, vector<1x16x128xf32>
    %312 = vector.shape_cast %311 : vector<1x16x128xf32> to vector<16x128xf32>
    %313 = vector.shape_cast %300 : vector<16x128xf32> to vector<1x16x128xf32>
    tpu.vector_store %arg12[%c0_89, %c0_90, %c0_91], %313 {strides = array<i32>} : memref<2x16x128xf32, #tpu.memory_space<vmem>>, vector<1x16x128xf32>,
    %c0_92 = arith.constant 0 : index
    %c0_93 = arith.constant 0 : index
    %c0_94 = arith.constant 0 : index
    %314 = vector.load %arg14[%c0_92, %c0_93, %c0_94] : memref<8x16x128xbf16, #tpu.memory_space<vmem>>, vector<8x16x128xbf16>
    %315 = vector.shape_cast %314 : vector<8x16x128xbf16> to vector<128x128xbf16>
    %c1 = arith.constant 1 : index
    %c0_95 = arith.constant 0 : index
    %c0_96 = arith.constant 0 : index
    %316 = vector.load %arg3[%c1, %c0_95, %c0_96] : memref<2x128x512xbf16, #tpu.memory_space<vmem>>, vector<1x128x512xbf16>
    %317 = vector.shape_cast %316 : vector<1x128x512xbf16> to vector<128x512xbf16>
    %cst_97 = arith.constant dense<0.000000e+00> : vector<128x512xf32>
    %318 = tpu.matmul %315, %317, %cst_97 {dimension_numbers = #tpu.dot_dimension_numbers<[1], [0], [0], [1], [0, 0, 1, 1], [], []>} : vector<128x128xbf16>, vector<128x512xbf16>, vector<128x512xf32> -> vector<128x512xf32>
    %c1_98 = arith.constant 1 : index
    %c0_99 = arith.constant 0 : index
    %c0_100 = arith.constant 0 : index
    %319 = vector.load %arg5[%c1_98, %c0_99, %c0_100] : memref<2x1x512xf32, #tpu.memory_space<vmem>>, vector<1x1x512xf32>
    %320 = vector.shape_cast %319 : vector<1x1x512xf32> to vector<1x512xf32>
    %321 = vector.broadcast %320 : vector<1x512xf32> to vector<128x512xf32>
    %322 = arith.addf %318, %321 : vector<128x512xf32>
    %323 = vector.shape_cast %322 : vector<128x512xf32> to vector<8x16x512xf32>
    %c0_101 = arith.constant 0 : index
    %c0_102 = arith.constant 0 : index
    %c0_103 = arith.constant 0 : index
    %324 = vector.load %arg13[%c0_101, %c0_102, %c0_103] : memref<8x16x512xf32, #tpu.memory_space<vmem>>, vector<8x16x512xf32>
    tpu.vector_store %arg13[%c0_101, %c0_102, %c0_103], %323 {strides = array<i32>} : memref<8x16x512xf32, #tpu.memory_space<vmem>>, vector<8x16x512xf32>,
    %c1_104 = arith.constant 1 : index
    %c0_105 = arith.constant 0 : index
    %c0_106 = arith.constant 0 : index
    %325 = vector.load %arg4[%c1_104, %c0_105, %c0_106] : memref<2x128x512xbf16, #tpu.memory_space<vmem>>, vector<1x128x512xbf16>
    %326 = vector.shape_cast %325 : vector<1x128x512xbf16> to vector<128x512xbf16>
    %c1_107 = arith.constant 1 : index
    %c0_108 = arith.constant 0 : index
    %c0_109 = arith.constant 0 : index
    %327 = vector.load %arg11[%c1_107, %c0_108, %c0_109] : memref<2x16x128xf32, #tpu.memory_space<vmem>>, vector<1x16x128xf32>
    %328 = vector.shape_cast %327 : vector<1x16x128xf32> to vector<16x128xf32>
    %c1_110 = arith.constant 1 : index
    %c0_111 = arith.constant 0 : index
    %c0_112 = arith.constant 0 : index
    %329 = vector.load %arg12[%c1_110, %c0_111, %c0_112] : memref<2x16x128xf32, #tpu.memory_space<vmem>>, vector<1x16x128xf32>
    %330 = vector.shape_cast %329 : vector<1x16x128xf32> to vector<16x128xf32>
    %c0_i32_113 = arith.constant 0 : i32
    %331 = arith.index_cast %c0_i32_113 : i32 to index
    %c0_114 = arith.constant 0 : index
    %c0_115 = arith.constant 0 : index
    %332 = vector.load %arg13[%331, %c0_114, %c0_115] : memref<8x16x512xf32, #tpu.memory_space<vmem>>, vector<1x16x512xf32>
    %333 = vector.shape_cast %332 : vector<1x16x512xf32> to vector<16x512xf32>
    %334 = arith.truncf %328 : vector<16x128xf32> to vector<16x128xbf16>
    %cst_116 = arith.constant dense<0.000000e+00> : vector<16x512xf32>
    %335 = tpu.matmul %334, %326, %cst_116 {dimension_numbers = #tpu.dot_dimension_numbers<[1], [0], [0], [1], [0, 0, 1, 1], [], []>} : vector<16x128xbf16>, vector<128x512xbf16>, vector<16x512xf32> -> vector<16x512xf32>
    %336 = arith.addf %333, %335 : vector<16x512xf32>
    %337 = vector.extract_strided_slice %336 {offsets = [0, 0], sizes = [16, 128], strides = [1, 1]} : vector<16x512xf32> to vector<16x128xf32>
    %338 = arith.negf %337 : vector<16x128xf32>
    %339 = math.exp %338 : vector<16x128xf32>
    %cst_117 = arith.constant 1.000000e+00 : f32
    %340 = vector.broadcast %cst_117 : f32 to vector<16x128xf32>
    %341 = arith.addf %340, %339 : vector<16x128xf32>
    %342 = arith.divf %340, %341 : vector<16x128xf32>
    %343 = vector.extract_strided_slice %336 {offsets = [0, 128], sizes = [16, 128], strides = [1, 1]} : vector<16x512xf32> to vector<16x128xf32>
    %344 = arith.negf %343 : vector<16x128xf32>
    %345 = math.exp %344 : vector<16x128xf32>
    %cst_118 = arith.constant 1.000000e+00 : f32
    %346 = vector.broadcast %cst_118 : f32 to vector<16x128xf32>
    %347 = arith.addf %346, %345 : vector<16x128xf32>
    %348 = arith.divf %346, %347 : vector<16x128xf32>
    %349 = vector.extract_strided_slice %336 {offsets = [0, 256], sizes = [16, 128], strides = [1, 1]} : vector<16x512xf32> to vector<16x128xf32>
    %350 = math.tanh %349 : vector<16x128xf32>
    %351 = vector.extract_strided_slice %336 {offsets = [0, 384], sizes = [16, 128], strides = [1, 1]} : vector<16x512xf32> to vector<16x128xf32>
    %352 = arith.negf %351 : vector<16x128xf32>
    %353 = math.exp %352 : vector<16x128xf32>
    %cst_119 = arith.constant 1.000000e+00 : f32
    %354 = vector.broadcast %cst_119 : f32 to vector<16x128xf32>
    %355 = arith.addf %354, %353 : vector<16x128xf32>
    %356 = arith.divf %354, %355 : vector<16x128xf32>
    %357 = arith.mulf %348, %330 : vector<16x128xf32>
    %358 = arith.mulf %342, %350 : vector<16x128xf32>
    %359 = arith.addf %357, %358 : vector<16x128xf32>
    %360 = math.tanh %359 : vector<16x128xf32>
    %361 = arith.mulf %356, %360 : vector<16x128xf32>
    %362 = arith.truncf %361 : vector<16x128xf32> to vector<16x128xbf16>
    %363 = arith.index_cast %c0_i32_113 : i32 to index
    %c0_120 = arith.constant 0 : index
    %c0_121 = arith.constant 0 : index
    %364 = vector.load %arg14[%363, %c0_120, %c0_121] : memref<8x16x128xbf16, #tpu.memory_space<vmem>>, vector<1x16x128xbf16>
    %365 = vector.shape_cast %364 : vector<1x16x128xbf16> to vector<16x128xbf16>
    %366 = vector.shape_cast %362 : vector<16x128xbf16> to vector<1x16x128xbf16>
    tpu.vector_store %arg14[%363, %c0_120, %c0_121], %366 {strides = array<i32>} : memref<8x16x128xbf16, #tpu.memory_space<vmem>>, vector<1x16x128xbf16>,
    %c1_i32_122 = arith.constant 1 : i32
    %367 = arith.index_cast %c1_i32_122 : i32 to index
    %c0_123 = arith.constant 0 : index
    %c0_124 = arith.constant 0 : index
    %368 = vector.load %arg13[%367, %c0_123, %c0_124] : memref<8x16x512xf32, #tpu.memory_space<vmem>>, vector<1x16x512xf32>
    %369 = vector.shape_cast %368 : vector<1x16x512xf32> to vector<16x512xf32>
    %370 = arith.truncf %361 : vector<16x128xf32> to vector<16x128xbf16>
    %cst_125 = arith.constant dense<0.000000e+00> : vector<16x512xf32>
    %371 = tpu.matmul %370, %326, %cst_125 {dimension_numbers = #tpu.dot_dimension_numbers<[1], [0], [0], [1], [0, 0, 1, 1], [], []>} : vector<16x128xbf16>, vector<128x512xbf16>, vector<16x512xf32> -> vector<16x512xf32>
    %372 = arith.addf %369, %371 : vector<16x512xf32>
    %373 = vector.extract_strided_slice %372 {offsets = [0, 0], sizes = [16, 128], strides = [1, 1]} : vector<16x512xf32> to vector<16x128xf32>
    %374 = arith.negf %373 : vector<16x128xf32>
    %375 = math.exp %374 : vector<16x128xf32>
    %cst_126 = arith.constant 1.000000e+00 : f32
    %376 = vector.broadcast %cst_126 : f32 to vector<16x128xf32>
    %377 = arith.addf %376, %375 : vector<16x128xf32>
    %378 = arith.divf %376, %377 : vector<16x128xf32>
    %379 = vector.extract_strided_slice %372 {offsets = [0, 128], sizes = [16, 128], strides = [1, 1]} : vector<16x512xf32> to vector<16x128xf32>
    %380 = arith.negf %379 : vector<16x128xf32>
    %381 = math.exp %380 : vector<16x128xf32>
    %cst_127 = arith.constant 1.000000e+00 : f32
    %382 = vector.broadcast %cst_127 : f32 to vector<16x128xf32>
    %383 = arith.addf %382, %381 : vector<16x128xf32>
    %384 = arith.divf %382, %383 : vector<16x128xf32>
    %385 = vector.extract_strided_slice %372 {offsets = [0, 256], sizes = [16, 128], strides = [1, 1]} : vector<16x512xf32> to vector<16x128xf32>
    %386 = math.tanh %385 : vector<16x128xf32>
    %387 = vector.extract_strided_slice %372 {offsets = [0, 384], sizes = [16, 128], strides = [1, 1]} : vector<16x512xf32> to vector<16x128xf32>
    %388 = arith.negf %387 : vector<16x128xf32>
    %389 = math.exp %388 : vector<16x128xf32>
    %cst_128 = arith.constant 1.000000e+00 : f32
    %390 = vector.broadcast %cst_128 : f32 to vector<16x128xf32>
    %391 = arith.addf %390, %389 : vector<16x128xf32>
    %392 = arith.divf %390, %391 : vector<16x128xf32>
    %393 = arith.mulf %384, %359 : vector<16x128xf32>
    %394 = arith.mulf %378, %386 : vector<16x128xf32>
    %395 = arith.addf %393, %394 : vector<16x128xf32>
    %396 = math.tanh %395 : vector<16x128xf32>
    %397 = arith.mulf %392, %396 : vector<16x128xf32>
    %398 = arith.truncf %397 : vector<16x128xf32> to vector<16x128xbf16>
    %399 = arith.index_cast %c1_i32_122 : i32 to index
    %c0_129 = arith.constant 0 : index
    %c0_130 = arith.constant 0 : index
    %400 = vector.load %arg14[%399, %c0_129, %c0_130] : memref<8x16x128xbf16, #tpu.memory_space<vmem>>, vector<1x16x128xbf16>
    %401 = vector.shape_cast %400 : vector<1x16x128xbf16> to vector<16x128xbf16>
    %402 = vector.shape_cast %398 : vector<16x128xbf16> to vector<1x16x128xbf16>
    tpu.vector_store %arg14[%399, %c0_129, %c0_130], %402 {strides = array<i32>} : memref<8x16x128xbf16, #tpu.memory_space<vmem>>, vector<1x16x128xbf16>,
    %c2_i32_131 = arith.constant 2 : i32
    %403 = arith.index_cast %c2_i32_131 : i32 to index
    %c0_132 = arith.constant 0 : index
    %c0_133 = arith.constant 0 : index
    %404 = vector.load %arg13[%403, %c0_132, %c0_133] : memref<8x16x512xf32, #tpu.memory_space<vmem>>, vector<1x16x512xf32>
    %405 = vector.shape_cast %404 : vector<1x16x512xf32> to vector<16x512xf32>
    %406 = arith.truncf %397 : vector<16x128xf32> to vector<16x128xbf16>
    %cst_134 = arith.constant dense<0.000000e+00> : vector<16x512xf32>
    %407 = tpu.matmul %406, %326, %cst_134 {dimension_numbers = #tpu.dot_dimension_numbers<[1], [0], [0], [1], [0, 0, 1, 1], [], []>} : vector<16x128xbf16>, vector<128x512xbf16>, vector<16x512xf32> -> vector<16x512xf32>
    %408 = arith.addf %405, %407 : vector<16x512xf32>
    %409 = vector.extract_strided_slice %408 {offsets = [0, 0], sizes = [16, 128], strides = [1, 1]} : vector<16x512xf32> to vector<16x128xf32>
    %410 = arith.negf %409 : vector<16x128xf32>
    %411 = math.exp %410 : vector<16x128xf32>
    %cst_135 = arith.constant 1.000000e+00 : f32
    %412 = vector.broadcast %cst_135 : f32 to vector<16x128xf32>
    %413 = arith.addf %412, %411 : vector<16x128xf32>
    %414 = arith.divf %412, %413 : vector<16x128xf32>
    %415 = vector.extract_strided_slice %408 {offsets = [0, 128], sizes = [16, 128], strides = [1, 1]} : vector<16x512xf32> to vector<16x128xf32>
    %416 = arith.negf %415 : vector<16x128xf32>
    %417 = math.exp %416 : vector<16x128xf32>
    %cst_136 = arith.constant 1.000000e+00 : f32
    %418 = vector.broadcast %cst_136 : f32 to vector<16x128xf32>
    %419 = arith.addf %418, %417 : vector<16x128xf32>
    %420 = arith.divf %418, %419 : vector<16x128xf32>
    %421 = vector.extract_strided_slice %408 {offsets = [0, 256], sizes = [16, 128], strides = [1, 1]} : vector<16x512xf32> to vector<16x128xf32>
    %422 = math.tanh %421 : vector<16x128xf32>
    %423 = vector.extract_strided_slice %408 {offsets = [0, 384], sizes = [16, 128], strides = [1, 1]} : vector<16x512xf32> to vector<16x128xf32>
    %424 = arith.negf %423 : vector<16x128xf32>
    %425 = math.exp %424 : vector<16x128xf32>
    %cst_137 = arith.constant 1.000000e+00 : f32
    %426 = vector.broadcast %cst_137 : f32 to vector<16x128xf32>
    %427 = arith.addf %426, %425 : vector<16x128xf32>
    %428 = arith.divf %426, %427 : vector<16x128xf32>
    %429 = arith.mulf %420, %395 : vector<16x128xf32>
    %430 = arith.mulf %414, %422 : vector<16x128xf32>
    %431 = arith.addf %429, %430 : vector<16x128xf32>
    %432 = math.tanh %431 : vector<16x128xf32>
    %433 = arith.mulf %428, %432 : vector<16x128xf32>
    %434 = arith.truncf %433 : vector<16x128xf32> to vector<16x128xbf16>
    %435 = arith.index_cast %c2_i32_131 : i32 to index
    %c0_138 = arith.constant 0 : index
    %c0_139 = arith.constant 0 : index
    %436 = vector.load %arg14[%435, %c0_138, %c0_139] : memref<8x16x128xbf16, #tpu.memory_space<vmem>>, vector<1x16x128xbf16>
    %437 = vector.shape_cast %436 : vector<1x16x128xbf16> to vector<16x128xbf16>
    %438 = vector.shape_cast %434 : vector<16x128xbf16> to vector<1x16x128xbf16>
    tpu.vector_store %arg14[%435, %c0_138, %c0_139], %438 {strides = array<i32>} : memref<8x16x128xbf16, #tpu.memory_space<vmem>>, vector<1x16x128xbf16>,
    %c3_i32_140 = arith.constant 3 : i32
    %439 = arith.index_cast %c3_i32_140 : i32 to index
    %c0_141 = arith.constant 0 : index
    %c0_142 = arith.constant 0 : index
    %440 = vector.load %arg13[%439, %c0_141, %c0_142] : memref<8x16x512xf32, #tpu.memory_space<vmem>>, vector<1x16x512xf32>
    %441 = vector.shape_cast %440 : vector<1x16x512xf32> to vector<16x512xf32>
    %442 = arith.truncf %433 : vector<16x128xf32> to vector<16x128xbf16>
    %cst_143 = arith.constant dense<0.000000e+00> : vector<16x512xf32>
    %443 = tpu.matmul %442, %326, %cst_143 {dimension_numbers = #tpu.dot_dimension_numbers<[1], [0], [0], [1], [0, 0, 1, 1], [], []>} : vector<16x128xbf16>, vector<128x512xbf16>, vector<16x512xf32> -> vector<16x512xf32>
    %444 = arith.addf %441, %443 : vector<16x512xf32>
    %445 = vector.extract_strided_slice %444 {offsets = [0, 0], sizes = [16, 128], strides = [1, 1]} : vector<16x512xf32> to vector<16x128xf32>
    %446 = arith.negf %445 : vector<16x128xf32>
    %447 = math.exp %446 : vector<16x128xf32>
    %cst_144 = arith.constant 1.000000e+00 : f32
    %448 = vector.broadcast %cst_144 : f32 to vector<16x128xf32>
    %449 = arith.addf %448, %447 : vector<16x128xf32>
    %450 = arith.divf %448, %449 : vector<16x128xf32>
    %451 = vector.extract_strided_slice %444 {offsets = [0, 128], sizes = [16, 128], strides = [1, 1]} : vector<16x512xf32> to vector<16x128xf32>
    %452 = arith.negf %451 : vector<16x128xf32>
    %453 = math.exp %452 : vector<16x128xf32>
    %cst_145 = arith.constant 1.000000e+00 : f32
    %454 = vector.broadcast %cst_145 : f32 to vector<16x128xf32>
    %455 = arith.addf %454, %453 : vector<16x128xf32>
    %456 = arith.divf %454, %455 : vector<16x128xf32>
    %457 = vector.extract_strided_slice %444 {offsets = [0, 256], sizes = [16, 128], strides = [1, 1]} : vector<16x512xf32> to vector<16x128xf32>
    %458 = math.tanh %457 : vector<16x128xf32>
    %459 = vector.extract_strided_slice %444 {offsets = [0, 384], sizes = [16, 128], strides = [1, 1]} : vector<16x512xf32> to vector<16x128xf32>
    %460 = arith.negf %459 : vector<16x128xf32>
    %461 = math.exp %460 : vector<16x128xf32>
    %cst_146 = arith.constant 1.000000e+00 : f32
    %462 = vector.broadcast %cst_146 : f32 to vector<16x128xf32>
    %463 = arith.addf %462, %461 : vector<16x128xf32>
    %464 = arith.divf %462, %463 : vector<16x128xf32>
    %465 = arith.mulf %456, %431 : vector<16x128xf32>
    %466 = arith.mulf %450, %458 : vector<16x128xf32>
    %467 = arith.addf %465, %466 : vector<16x128xf32>
    %468 = math.tanh %467 : vector<16x128xf32>
    %469 = arith.mulf %464, %468 : vector<16x128xf32>
    %470 = arith.truncf %469 : vector<16x128xf32> to vector<16x128xbf16>
    %471 = arith.index_cast %c3_i32_140 : i32 to index
    %c0_147 = arith.constant 0 : index
    %c0_148 = arith.constant 0 : index
    %472 = vector.load %arg14[%471, %c0_147, %c0_148] : memref<8x16x128xbf16, #tpu.memory_space<vmem>>, vector<1x16x128xbf16>
    %473 = vector.shape_cast %472 : vector<1x16x128xbf16> to vector<16x128xbf16>
    %474 = vector.shape_cast %470 : vector<16x128xbf16> to vector<1x16x128xbf16>
    tpu.vector_store %arg14[%471, %c0_147, %c0_148], %474 {strides = array<i32>} : memref<8x16x128xbf16, #tpu.memory_space<vmem>>, vector<1x16x128xbf16>,
    %c4_i32_149 = arith.constant 4 : i32
    %475 = arith.index_cast %c4_i32_149 : i32 to index
    %c0_150 = arith.constant 0 : index
    %c0_151 = arith.constant 0 : index
    %476 = vector.load %arg13[%475, %c0_150, %c0_151] : memref<8x16x512xf32, #tpu.memory_space<vmem>>, vector<1x16x512xf32>
    %477 = vector.shape_cast %476 : vector<1x16x512xf32> to vector<16x512xf32>
    %478 = arith.truncf %469 : vector<16x128xf32> to vector<16x128xbf16>
    %cst_152 = arith.constant dense<0.000000e+00> : vector<16x512xf32>
    %479 = tpu.matmul %478, %326, %cst_152 {dimension_numbers = #tpu.dot_dimension_numbers<[1], [0], [0], [1], [0, 0, 1, 1], [], []>} : vector<16x128xbf16>, vector<128x512xbf16>, vector<16x512xf32> -> vector<16x512xf32>
    %480 = arith.addf %477, %479 : vector<16x512xf32>
    %481 = vector.extract_strided_slice %480 {offsets = [0, 0], sizes = [16, 128], strides = [1, 1]} : vector<16x512xf32> to vector<16x128xf32>
    %482 = arith.negf %481 : vector<16x128xf32>
    %483 = math.exp %482 : vector<16x128xf32>
    %cst_153 = arith.constant 1.000000e+00 : f32
    %484 = vector.broadcast %cst_153 : f32 to vector<16x128xf32>
    %485 = arith.addf %484, %483 : vector<16x128xf32>
    %486 = arith.divf %484, %485 : vector<16x128xf32>
    %487 = vector.extract_strided_slice %480 {offsets = [0, 128], sizes = [16, 128], strides = [1, 1]} : vector<16x512xf32> to vector<16x128xf32>
    %488 = arith.negf %487 : vector<16x128xf32>
    %489 = math.exp %488 : vector<16x128xf32>
    %cst_154 = arith.constant 1.000000e+00 : f32
    %490 = vector.broadcast %cst_154 : f32 to vector<16x128xf32>
    %491 = arith.addf %490, %489 : vector<16x128xf32>
    %492 = arith.divf %490, %491 : vector<16x128xf32>
    %493 = vector.extract_strided_slice %480 {offsets = [0, 256], sizes = [16, 128], strides = [1, 1]} : vector<16x512xf32> to vector<16x128xf32>
    %494 = math.tanh %493 : vector<16x128xf32>
    %495 = vector.extract_strided_slice %480 {offsets = [0, 384], sizes = [16, 128], strides = [1, 1]} : vector<16x512xf32> to vector<16x128xf32>
    %496 = arith.negf %495 : vector<16x128xf32>
    %497 = math.exp %496 : vector<16x128xf32>
    %cst_155 = arith.constant 1.000000e+00 : f32
    %498 = vector.broadcast %cst_155 : f32 to vector<16x128xf32>
    %499 = arith.addf %498, %497 : vector<16x128xf32>
    %500 = arith.divf %498, %499 : vector<16x128xf32>
    %501 = arith.mulf %492, %467 : vector<16x128xf32>
    %502 = arith.mulf %486, %494 : vector<16x128xf32>
    %503 = arith.addf %501, %502 : vector<16x128xf32>
    %504 = math.tanh %503 : vector<16x128xf32>
    %505 = arith.mulf %500, %504 : vector<16x128xf32>
    %506 = arith.truncf %505 : vector<16x128xf32> to vector<16x128xbf16>
    %507 = arith.index_cast %c4_i32_149 : i32 to index
    %c0_156 = arith.constant 0 : index
    %c0_157 = arith.constant 0 : index
    %508 = vector.load %arg14[%507, %c0_156, %c0_157] : memref<8x16x128xbf16, #tpu.memory_space<vmem>>, vector<1x16x128xbf16>
    %509 = vector.shape_cast %508 : vector<1x16x128xbf16> to vector<16x128xbf16>
    %510 = vector.shape_cast %506 : vector<16x128xbf16> to vector<1x16x128xbf16>
    tpu.vector_store %arg14[%507, %c0_156, %c0_157], %510 {strides = array<i32>} : memref<8x16x128xbf16, #tpu.memory_space<vmem>>, vector<1x16x128xbf16>,
    %c5_i32_158 = arith.constant 5 : i32
    %511 = arith.index_cast %c5_i32_158 : i32 to index
    %c0_159 = arith.constant 0 : index
    %c0_160 = arith.constant 0 : index
    %512 = vector.load %arg13[%511, %c0_159, %c0_160] : memref<8x16x512xf32, #tpu.memory_space<vmem>>, vector<1x16x512xf32>
    %513 = vector.shape_cast %512 : vector<1x16x512xf32> to vector<16x512xf32>
    %514 = arith.truncf %505 : vector<16x128xf32> to vector<16x128xbf16>
    %cst_161 = arith.constant dense<0.000000e+00> : vector<16x512xf32>
    %515 = tpu.matmul %514, %326, %cst_161 {dimension_numbers = #tpu.dot_dimension_numbers<[1], [0], [0], [1], [0, 0, 1, 1], [], []>} : vector<16x128xbf16>, vector<128x512xbf16>, vector<16x512xf32> -> vector<16x512xf32>
    %516 = arith.addf %513, %515 : vector<16x512xf32>
    %517 = vector.extract_strided_slice %516 {offsets = [0, 0], sizes = [16, 128], strides = [1, 1]} : vector<16x512xf32> to vector<16x128xf32>
    %518 = arith.negf %517 : vector<16x128xf32>
    %519 = math.exp %518 : vector<16x128xf32>
    %cst_162 = arith.constant 1.000000e+00 : f32
    %520 = vector.broadcast %cst_162 : f32 to vector<16x128xf32>
    %521 = arith.addf %520, %519 : vector<16x128xf32>
    %522 = arith.divf %520, %521 : vector<16x128xf32>
    %523 = vector.extract_strided_slice %516 {offsets = [0, 128], sizes = [16, 128], strides = [1, 1]} : vector<16x512xf32> to vector<16x128xf32>
    %524 = arith.negf %523 : vector<16x128xf32>
    %525 = math.exp %524 : vector<16x128xf32>
    %cst_163 = arith.constant 1.000000e+00 : f32
    %526 = vector.broadcast %cst_163 : f32 to vector<16x128xf32>
    %527 = arith.addf %526, %525 : vector<16x128xf32>
    %528 = arith.divf %526, %527 : vector<16x128xf32>
    %529 = vector.extract_strided_slice %516 {offsets = [0, 256], sizes = [16, 128], strides = [1, 1]} : vector<16x512xf32> to vector<16x128xf32>
    %530 = math.tanh %529 : vector<16x128xf32>
    %531 = vector.extract_strided_slice %516 {offsets = [0, 384], sizes = [16, 128], strides = [1, 1]} : vector<16x512xf32> to vector<16x128xf32>
    %532 = arith.negf %531 : vector<16x128xf32>
    %533 = math.exp %532 : vector<16x128xf32>
    %cst_164 = arith.constant 1.000000e+00 : f32
    %534 = vector.broadcast %cst_164 : f32 to vector<16x128xf32>
    %535 = arith.addf %534, %533 : vector<16x128xf32>
    %536 = arith.divf %534, %535 : vector<16x128xf32>
    %537 = arith.mulf %528, %503 : vector<16x128xf32>
    %538 = arith.mulf %522, %530 : vector<16x128xf32>
    %539 = arith.addf %537, %538 : vector<16x128xf32>
    %540 = math.tanh %539 : vector<16x128xf32>
    %541 = arith.mulf %536, %540 : vector<16x128xf32>
    %542 = arith.truncf %541 : vector<16x128xf32> to vector<16x128xbf16>
    %543 = arith.index_cast %c5_i32_158 : i32 to index
    %c0_165 = arith.constant 0 : index
    %c0_166 = arith.constant 0 : index
    %544 = vector.load %arg14[%543, %c0_165, %c0_166] : memref<8x16x128xbf16, #tpu.memory_space<vmem>>, vector<1x16x128xbf16>
    %545 = vector.shape_cast %544 : vector<1x16x128xbf16> to vector<16x128xbf16>
    %546 = vector.shape_cast %542 : vector<16x128xbf16> to vector<1x16x128xbf16>
    tpu.vector_store %arg14[%543, %c0_165, %c0_166], %546 {strides = array<i32>} : memref<8x16x128xbf16, #tpu.memory_space<vmem>>, vector<1x16x128xbf16>,
    %c6_i32_167 = arith.constant 6 : i32
    %547 = arith.index_cast %c6_i32_167 : i32 to index
    %c0_168 = arith.constant 0 : index
    %c0_169 = arith.constant 0 : index
    %548 = vector.load %arg13[%547, %c0_168, %c0_169] : memref<8x16x512xf32, #tpu.memory_space<vmem>>, vector<1x16x512xf32>
    %549 = vector.shape_cast %548 : vector<1x16x512xf32> to vector<16x512xf32>
    %550 = arith.truncf %541 : vector<16x128xf32> to vector<16x128xbf16>
    %cst_170 = arith.constant dense<0.000000e+00> : vector<16x512xf32>
    %551 = tpu.matmul %550, %326, %cst_170 {dimension_numbers = #tpu.dot_dimension_numbers<[1], [0], [0], [1], [0, 0, 1, 1], [], []>} : vector<16x128xbf16>, vector<128x512xbf16>, vector<16x512xf32> -> vector<16x512xf32>
    %552 = arith.addf %549, %551 : vector<16x512xf32>
    %553 = vector.extract_strided_slice %552 {offsets = [0, 0], sizes = [16, 128], strides = [1, 1]} : vector<16x512xf32> to vector<16x128xf32>
    %554 = arith.negf %553 : vector<16x128xf32>
    %555 = math.exp %554 : vector<16x128xf32>
    %cst_171 = arith.constant 1.000000e+00 : f32
    %556 = vector.broadcast %cst_171 : f32 to vector<16x128xf32>
    %557 = arith.addf %556, %555 : vector<16x128xf32>
    %558 = arith.divf %556, %557 : vector<16x128xf32>
    %559 = vector.extract_strided_slice %552 {offsets = [0, 128], sizes = [16, 128], strides = [1, 1]} : vector<16x512xf32> to vector<16x128xf32>
    %560 = arith.negf %559 : vector<16x128xf32>
    %561 = math.exp %560 : vector<16x128xf32>
    %cst_172 = arith.constant 1.000000e+00 : f32
    %562 = vector.broadcast %cst_172 : f32 to vector<16x128xf32>
    %563 = arith.addf %562, %561 : vector<16x128xf32>
    %564 = arith.divf %562, %563 : vector<16x128xf32>
    %565 = vector.extract_strided_slice %552 {offsets = [0, 256], sizes = [16, 128], strides = [1, 1]} : vector<16x512xf32> to vector<16x128xf32>
    %566 = math.tanh %565 : vector<16x128xf32>
    %567 = vector.extract_strided_slice %552 {offsets = [0, 384], sizes = [16, 128], strides = [1, 1]} : vector<16x512xf32> to vector<16x128xf32>
    %568 = arith.negf %567 : vector<16x128xf32>
    %569 = math.exp %568 : vector<16x128xf32>
    %cst_173 = arith.constant 1.000000e+00 : f32
    %570 = vector.broadcast %cst_173 : f32 to vector<16x128xf32>
    %571 = arith.addf %570, %569 : vector<16x128xf32>
    %572 = arith.divf %570, %571 : vector<16x128xf32>
    %573 = arith.mulf %564, %539 : vector<16x128xf32>
    %574 = arith.mulf %558, %566 : vector<16x128xf32>
    %575 = arith.addf %573, %574 : vector<16x128xf32>
    %576 = math.tanh %575 : vector<16x128xf32>
    %577 = arith.mulf %572, %576 : vector<16x128xf32>
    %578 = arith.truncf %577 : vector<16x128xf32> to vector<16x128xbf16>
    %579 = arith.index_cast %c6_i32_167 : i32 to index
    %c0_174 = arith.constant 0 : index
    %c0_175 = arith.constant 0 : index
    %580 = vector.load %arg14[%579, %c0_174, %c0_175] : memref<8x16x128xbf16, #tpu.memory_space<vmem>>, vector<1x16x128xbf16>
    %581 = vector.shape_cast %580 : vector<1x16x128xbf16> to vector<16x128xbf16>
    %582 = vector.shape_cast %578 : vector<16x128xbf16> to vector<1x16x128xbf16>
    tpu.vector_store %arg14[%579, %c0_174, %c0_175], %582 {strides = array<i32>} : memref<8x16x128xbf16, #tpu.memory_space<vmem>>, vector<1x16x128xbf16>,
    %c7_i32_176 = arith.constant 7 : i32
    %583 = arith.index_cast %c7_i32_176 : i32 to index
    %c0_177 = arith.constant 0 : index
    %c0_178 = arith.constant 0 : index
    %584 = vector.load %arg13[%583, %c0_177, %c0_178] : memref<8x16x512xf32, #tpu.memory_space<vmem>>, vector<1x16x512xf32>
    %585 = vector.shape_cast %584 : vector<1x16x512xf32> to vector<16x512xf32>
    %586 = arith.truncf %577 : vector<16x128xf32> to vector<16x128xbf16>
    %cst_179 = arith.constant dense<0.000000e+00> : vector<16x512xf32>
    %587 = tpu.matmul %586, %326, %cst_179 {dimension_numbers = #tpu.dot_dimension_numbers<[1], [0], [0], [1], [0, 0, 1, 1], [], []>} : vector<16x128xbf16>, vector<128x512xbf16>, vector<16x512xf32> -> vector<16x512xf32>
    %588 = arith.addf %585, %587 : vector<16x512xf32>
    %589 = vector.extract_strided_slice %588 {offsets = [0, 0], sizes = [16, 128], strides = [1, 1]} : vector<16x512xf32> to vector<16x128xf32>
    %590 = arith.negf %589 : vector<16x128xf32>
    %591 = math.exp %590 : vector<16x128xf32>
    %cst_180 = arith.constant 1.000000e+00 : f32
    %592 = vector.broadcast %cst_180 : f32 to vector<16x128xf32>
    %593 = arith.addf %592, %591 : vector<16x128xf32>
    %594 = arith.divf %592, %593 : vector<16x128xf32>
    %595 = vector.extract_strided_slice %588 {offsets = [0, 128], sizes = [16, 128], strides = [1, 1]} : vector<16x512xf32> to vector<16x128xf32>
    %596 = arith.negf %595 : vector<16x128xf32>
    %597 = math.exp %596 : vector<16x128xf32>
    %cst_181 = arith.constant 1.000000e+00 : f32
    %598 = vector.broadcast %cst_181 : f32 to vector<16x128xf32>
    %599 = arith.addf %598, %597 : vector<16x128xf32>
    %600 = arith.divf %598, %599 : vector<16x128xf32>
    %601 = vector.extract_strided_slice %588 {offsets = [0, 256], sizes = [16, 128], strides = [1, 1]} : vector<16x512xf32> to vector<16x128xf32>
    %602 = math.tanh %601 : vector<16x128xf32>
    %603 = vector.extract_strided_slice %588 {offsets = [0, 384], sizes = [16, 128], strides = [1, 1]} : vector<16x512xf32> to vector<16x128xf32>
    %604 = arith.negf %603 : vector<16x128xf32>
    %605 = math.exp %604 : vector<16x128xf32>
    %cst_182 = arith.constant 1.000000e+00 : f32
    %606 = vector.broadcast %cst_182 : f32 to vector<16x128xf32>
    %607 = arith.addf %606, %605 : vector<16x128xf32>
    %608 = arith.divf %606, %607 : vector<16x128xf32>
    %609 = arith.mulf %600, %575 : vector<16x128xf32>
    %610 = arith.mulf %594, %602 : vector<16x128xf32>
    %611 = arith.addf %609, %610 : vector<16x128xf32>
    %612 = math.tanh %611 : vector<16x128xf32>
    %613 = arith.mulf %608, %612 : vector<16x128xf32>
    %614 = arith.truncf %613 : vector<16x128xf32> to vector<16x128xbf16>
    %615 = arith.index_cast %c7_i32_176 : i32 to index
    %c0_183 = arith.constant 0 : index
    %c0_184 = arith.constant 0 : index
    %616 = vector.load %arg14[%615, %c0_183, %c0_184] : memref<8x16x128xbf16, #tpu.memory_space<vmem>>, vector<1x16x128xbf16>
    %617 = vector.shape_cast %616 : vector<1x16x128xbf16> to vector<16x128xbf16>
    %618 = vector.shape_cast %614 : vector<16x128xbf16> to vector<1x16x128xbf16>
    tpu.vector_store %arg14[%615, %c0_183, %c0_184], %618 {strides = array<i32>} : memref<8x16x128xbf16, #tpu.memory_space<vmem>>, vector<1x16x128xbf16>,
    %c8_i32_185 = arith.constant 8 : i32
    %c1_186 = arith.constant 1 : index
    %c0_187 = arith.constant 0 : index
    %c0_188 = arith.constant 0 : index
    %619 = vector.load %arg11[%c1_186, %c0_187, %c0_188] : memref<2x16x128xf32, #tpu.memory_space<vmem>>, vector<1x16x128xf32>
    %620 = vector.shape_cast %619 : vector<1x16x128xf32> to vector<16x128xf32>
    %621 = vector.shape_cast %613 : vector<16x128xf32> to vector<1x16x128xf32>
    tpu.vector_store %arg11[%c1_186, %c0_187, %c0_188], %621 {strides = array<i32>} : memref<2x16x128xf32, #tpu.memory_space<vmem>>, vector<1x16x128xf32>,
    %c1_189 = arith.constant 1 : index
    %c0_190 = arith.constant 0 : index
    %c0_191 = arith.constant 0 : index
    %622 = vector.load %arg12[%c1_189, %c0_190, %c0_191] : memref<2x16x128xf32, #tpu.memory_space<vmem>>, vector<1x16x128xf32>
    %623 = vector.shape_cast %622 : vector<1x16x128xf32> to vector<16x128xf32>
    %624 = vector.shape_cast %611 : vector<16x128xf32> to vector<1x16x128xf32>
    tpu.vector_store %arg12[%c1_189, %c0_190, %c0_191], %624 {strides = array<i32>} : memref<2x16x128xf32, #tpu.memory_space<vmem>>, vector<1x16x128xf32>,
    %c0_192 = arith.constant 0 : index
    %c0_193 = arith.constant 0 : index
    %c0_194 = arith.constant 0 : index
    %625 = vector.load %arg14[%c0_192, %c0_193, %c0_194] : memref<8x16x128xbf16, #tpu.memory_space<vmem>>, vector<8x16x128xbf16>
    %626 = vector.shape_cast %625 : vector<8x16x128xbf16> to vector<128x128xbf16>
    %c0_195 = arith.constant 0 : index
    %c0_196 = arith.constant 0 : index
    %627 = vector.load %arg8[%c0_195, %c0_196] : memref<128x128xbf16, #tpu.memory_space<vmem>>, vector<128x128xbf16>
    %cst_197 = arith.constant dense<0.000000e+00> : vector<128x128xf32>
    %628 = tpu.matmul %626, %627, %cst_197 {dimension_numbers = #tpu.dot_dimension_numbers<[1], [0], [0], [1], [0, 0, 1, 1], [], []>} : vector<128x128xbf16>, vector<128x128xbf16>, vector<128x128xf32> -> vector<128x128xf32>
    %c0_198 = arith.constant 0 : index
    %c0_199 = arith.constant 0 : index
    %629 = vector.load %arg9[%c0_198, %c0_199] : memref<1x128xf32, #tpu.memory_space<vmem>>, vector<1x128xf32>
    %630 = vector.broadcast %629 : vector<1x128xf32> to vector<128x128xf32>
    %631 = arith.addf %628, %630 : vector<128x128xf32>
    %632 = vector.shape_cast %631 : vector<128x128xf32> to vector<8x16x128xf32>
    %c0_200 = arith.constant 0 : index
    %c0_201 = arith.constant 0 : index
    %c0_202 = arith.constant 0 : index
    %633 = vector.load %arg10[%c0_200, %c0_201, %c0_202] : memref<8x16x128xf32, #tpu.memory_space<vmem>>, vector<8x16x128xf32>
    tpu.vector_store %arg10[%c0_200, %c0_201, %c0_202], %632 {strides = array<i32>} : memref<8x16x128xf32, #tpu.memory_space<vmem>>, vector<8x16x128xf32>,
    return
  }
  func.func @transform_0(%arg0: i32, %arg1: i32) -> (i32, i32, i32) {
    %c0_i32 = arith.constant 0 : i32
    %c0_i32_0 = arith.constant 0 : i32
    return %arg1, %arg0, %c0_i32 : i32, i32, i32
  }
  func.func @transform_1(%arg0: i32, %arg1: i32) -> (i32, i32, i32) {
    %c0_i32 = arith.constant 0 : i32
    %c0_i32_0 = arith.constant 0 : i32
    %c0_i32_1 = arith.constant 0 : i32
    %c0_i32_2 = arith.constant 0 : i32
    return %c0_i32, %c0_i32_0, %c0_i32_1 : i32, i32, i32
  }
  func.func @transform_2(%arg0: i32, %arg1: i32) -> (i32, i32, i32) {
    %c0_i32 = arith.constant 0 : i32
    %c0_i32_0 = arith.constant 0 : i32
    %c0_i32_1 = arith.constant 0 : i32
    %c0_i32_2 = arith.constant 0 : i32
    return %c0_i32, %c0_i32_0, %c0_i32_1 : i32, i32, i32
  }
  func.func @transform_3(%arg0: i32, %arg1: i32) -> (i32, i32, i32) {
    %c0_i32 = arith.constant 0 : i32
    %c0_i32_0 = arith.constant 0 : i32
    %c0_i32_1 = arith.constant 0 : i32
    %c0_i32_2 = arith.constant 0 : i32
    return %c0_i32, %c0_i32_0, %c0_i32_1 : i32, i32, i32
  }
  func.func @transform_4(%arg0: i32, %arg1: i32) -> (i32, i32, i32) {
    %c0_i32 = arith.constant 0 : i32
    %c0_i32_0 = arith.constant 0 : i32
    %c0_i32_1 = arith.constant 0 : i32
    return %c0_i32, %arg0, %c0_i32_0 : i32, i32, i32
  }
  func.func @transform_5(%arg0: i32, %arg1: i32) -> (i32, i32, i32) {
    %c0_i32 = arith.constant 0 : i32
    %c0_i32_0 = arith.constant 0 : i32
    %c0_i32_1 = arith.constant 0 : i32
    return %c0_i32, %arg0, %c0_i32_0 : i32, i32, i32
  }
  func.func @transform_6(%arg0: i32, %arg1: i32) -> (i32, i32) {
    %c0_i32 = arith.constant 0 : i32
    %c0_i32_0 = arith.constant 0 : i32
    %c0_i32_1 = arith.constant 0 : i32
    return %c0_i32, %c0_i32_0 : i32, i32
  }
  func.func @transform_7(%arg0: i32, %arg1: i32) -> (i32, i32) {
    %c0_i32 = arith.constant 0 : i32
    %c0_i32_0 = arith.constant 0 : i32
    %c0_i32_1 = arith.constant 0 : i32
    return %c0_i32, %c0_i32_0 : i32, i32
  }
  func.func @transform_8(%arg0: i32, %arg1: i32) -> (i32, i32, i32) {
    %c0_i32 = arith.constant 0 : i32
    %c0_i32_0 = arith.constant 0 : i32
    return %arg1, %arg0, %c0_i32 : i32, i32, i32
  }
  func.func @transform_9(%arg0: i32, %arg1: i32) -> (i32, i32, i32) {
    %c0_i32 = arith.constant 0 : i32
    %c0_i32_0 = arith.constant 0 : i32
    %c0_i32_1 = arith.constant 0 : i32
    return %c0_i32, %arg0, %c0_i32_0 : i32, i32, i32
  }
  func.func @transform_10(%arg0: i32, %arg1: i32) -> (i32, i32, i32) {
    %c0_i32 = arith.constant 0 : i32
    %c0_i32_0 = arith.constant 0 : i32
    %c0_i32_1 = arith.constant 0 : i32
    return %c0_i32, %arg0, %c0_i32_0 : i32, i32, i32
  }
}

</mosaic_0001>

<llo_original>
// kernel: tpu_custom_call.1
$region0: #{tpu_custom_call.1}
  #allocation0 [shape = 'u32[]', space=smem, size = 0x4, offset = 0x4, fixed_abs, tag = 'smem constant byte address 0x4 - core index']
  #allocation1 [shape = 'u32[144,128]{1,0:T(1,128)}', space=vmem, size = 0x12000, scoped, tag = 'internal scratch']
  #allocation2 [shape = 'f32[8,16,512]{2,1,0:T(8,128)}', space=vmem, size = 0x40000, scoped, tag = 'scratch operand']
  #allocation3 [shape = 'bf16[8,16,128]{2,1,0:T(16,128)(2,1)}', space=vmem, size = 0x8000, scoped, tag = 'scratch operand']
  %s0 = inlined_call_operand.hbm [shape: bf16[8,16,128], index: 0, kind: input, shape index: {}]
  %s1 = inlined_call_operand.hbm [shape: bf16[2,128,512], index: 1, kind: input, shape index: {}]
  %s2 = inlined_call_operand.hbm [shape: bf16[2,128,512], index: 2, kind: input, shape index: {}]
  %s3 = inlined_call_operand.vmem [shape: f32[2,1,512], index: 3, kind: input, shape index: {}]
  %s4 = inlined_call_operand.hbm [shape: f32[2,16,128], index: 4, kind: input, shape index: {}]
  %s5 = inlined_call_operand.hbm [shape: f32[2,16,128], index: 5, kind: input, shape index: {}]
  %s6 = inlined_call_operand.hbm [shape: bf16[128,128], index: 6, kind: input, shape index: {}]
  %s7 = inlined_call_operand.vmem [shape: f32[1,128], index: 7, kind: input, shape index: {}]
  %s8 = inlined_call_operand.hbm [shape: f32[8,16,128], index: 8, kind: output, shape index: {0}]
  %s9 = inlined_call_operand.hbm [shape: f32[2,16,128], index: 9, kind: output, shape index: {1}]
  %s10 = inlined_call_operand.hbm [shape: f32[2,16,128], index: 10, kind: output, shape index: {2}]
  %11 = xla_tuple %s8, %s9, %s10
  %s12 = sld [smem:[#allocation0]]
  $region86: #{tpu_custom_call.1} parent=0
    _
  %s14 = ssub.s32 1, %s12
  %s15 = scalar_select 0, %s14, %s12
  $region1: #{tpu_custom_call.1} parent=0
    #allocation4 [shape = 'u8[32768]{0}', space=vmem, size = 0x8000, scoped, tag = 'input window, operand 0, single buffered']
    #allocation5 [shape = 's32[1]{0}', space=sflag, size = 0x4, scoped, tag = 'scoped memory for tpu_custom_call.1']
    #allocation6 [shape = 's32[1]{0}', space=sflag, size = 0x4, scoped, tag = 'scoped memory for tpu_custom_call.1']
    #allocation7 [shape = 'u8[262144]{0}', space=vmem, size = 0x40000, scoped, tag = 'input window, operand 1, single buffered']
    #allocation8 [shape = 's32[1]{0}', space=sflag, size = 0x4, scoped, tag = 'scoped memory for tpu_custom_call.1']
    #allocation9 [shape = 'u8[262144]{0}', space=vmem, size = 0x40000, scoped, tag = 'input window, operand 2, single buffered']
    #allocation10 [shape = 'u8[16384]{0}', space=vmem, size = 0x4000, scoped, tag = 'input window, operand 4, single buffered']
    #allocation11 [shape = 's32[1]{0}', space=sflag, size = 0x4, scoped, tag = 'scoped memory for tpu_custom_call.1']
    #allocation12 [shape = 'u8[16384]{0}', space=vmem, size = 0x4000, scoped, tag = 'input window, operand 5, single buffered']
    #allocation13 [shape = 'u8[32768]{0}', space=vmem, size = 0x8000, scoped, tag = 'input window, operand 6, single buffered']
    #allocation14 [shape = 's32[1]{0}', space=sflag, size = 0x4, scoped, tag = 'scoped memory for tpu_custom_call.1']
    #allocation15 [shape = 'u8[65536]{0}', space=vmem, size = 0x10000, scoped, tag = 'output window, operand 0, single buffered']
    #allocation16 [shape = 'u8[16384]{0}', space=vmem, size = 0x4000, scoped, tag = 'output window, operand 1, single buffered']
    #allocation17 [shape = 's32[1]{0}', space=sflag, size = 0x4, scoped, tag = 'scoped memory for tpu_custom_call.1']
    #allocation18 [shape = 'u8[16384]{0}', space=vmem, size = 0x4000, scoped, tag = 'output window, operand 2, single buffered']
    %16 = vsyncpa [#allocation5], 0
    %17 = vsyncpa [#allocation8], 0
    %18 = vsyncpa [#allocation11], 0
    %19 = vsyncpa [#allocation14], 0
    %20 = vsyncpa [#allocation6], 0
    %21 = vsyncpa [#allocation17], 0
    // Predicated region
    $region2: #{tpu_custom_call.1} parent=1 // pred_check
      _
    $region3: #{tpu_custom_call.1} parent=1 // pred_check_branch
      %23 = sbr.rel (0) target = $region5
    $region4: #{tpu_custom_call.1} parent=1 // pred_region
      %s25 = ssub.s32 1024, 1024
      %26 = vsyncadd [#allocation5], %s25
      %s27 = sshll.u32 [#allocation4], 4
      %s28 = int_to_ptr.vmem [resolvable:$true] %s27
      %33 = dma.hbm_to_vmem [thread:$0]  %s0, 1024, %s28, [#allocation5], 64, 64, 4
    $region5: #{tpu_custom_call.1} parent=1 // pred_fallthru
      _
    // Predicated region
    $region6: #{tpu_custom_call.1} parent=1 // pred_check
      _
    $region7: #{tpu_custom_call.1} parent=1 // pred_check_branch
      %35 = sbr.rel (0) target = $region9
    $region8: #{tpu_custom_call.1} parent=1 // pred_region
      %s37 = ssub.s32 8192, 8192
      %38 = vsyncadd [#allocation8], %s37
      %s39 = sshll.u32 [#allocation7], 4
      %s40 = int_to_ptr.vmem [resolvable:$true] %s39
      %45 = dma.hbm_to_vmem [thread:$0]  %s1, 8192, %s40, [#allocation8], 256, 256, 16
    $region9: #{tpu_custom_call.1} parent=1 // pred_fallthru
      _
    // Predicated region
    $region10: #{tpu_custom_call.1} parent=1 // pred_check
      _
    $region11: #{tpu_custom_call.1} parent=1 // pred_check_branch
      %47 = sbr.rel (0) target = $region13
    $region12: #{tpu_custom_call.1} parent=1 // pred_region
      %s49 = ssub.s32 8192, 8192
      %50 = vsyncadd [#allocation8], %s49
      %s51 = sshll.u32 [#allocation9], 4
      %s52 = int_to_ptr.vmem [resolvable:$true] %s51
      %57 = dma.hbm_to_vmem [thread:$0]  %s2, 8192, %s52, [#allocation8], 256, 256, 16
    $region13: #{tpu_custom_call.1} parent=1 // pred_fallthru
      _
    // Predicated region
    $region14: #{tpu_custom_call.1} parent=1 // pred_check
      _
    $region15: #{tpu_custom_call.1} parent=1 // pred_check_branch
      %59 = sbr.rel (0) target = $region17
    $region16: #{tpu_custom_call.1} parent=1 // pred_region
      _
    $region17: #{tpu_custom_call.1} parent=1 // pred_fallthru
      _
    // Predicated region
    $region18: #{tpu_custom_call.1} parent=1 // pred_check
      _
    $region19: #{tpu_custom_call.1} parent=1 // pred_check_branch
      %61 = sbr.rel (0) target = $region21
    $region20: #{tpu_custom_call.1} parent=1 // pred_region
      %s63 = ssub.s32 512, 512
      %64 = vsyncadd [#allocation11], %s63
      %s65 = sshll.u32 [#allocation10], 4
      %s66 = int_to_ptr.vmem [resolvable:$true] %s65
      %71 = dma.hbm_to_vmem [thread:$0]  %s4, 512, %s66, [#allocation11], 128, 128, 8
    $region21: #{tpu_custom_call.1} parent=1 // pred_fallthru
      _
    // Predicated region
    $region22: #{tpu_custom_call.1} parent=1 // pred_check
      _
    $region23: #{tpu_custom_call.1} parent=1 // pred_check_branch
      %73 = sbr.rel (0) target = $region25
    $region24: #{tpu_custom_call.1} parent=1 // pred_region
      %s75 = ssub.s32 512, 512
      %76 = vsyncadd [#allocation11], %s75
      %s77 = sshll.u32 [#allocation12], 4
      %s78 = int_to_ptr.vmem [resolvable:$true] %s77
      %83 = dma.hbm_to_vmem [thread:$0]  %s5, 512, %s78, [#allocation11], 128, 128, 8
    $region25: #{tpu_custom_call.1} parent=1 // pred_fallthru
      _
    // Predicated region
    $region26: #{tpu_custom_call.1} parent=1 // pred_check
      _
    $region27: #{tpu_custom_call.1} parent=1 // pred_check_branch
      %85 = sbr.rel (0) target = $region29
    $region28: #{tpu_custom_call.1} parent=1 // pred_region
      %s87 = ssub.s32 1024, 1024
      %88 = vsyncadd [#allocation14], %s87
      %s89 = sshll.u32 [#allocation13], 4
      %s90 = int_to_ptr.vmem [resolvable:$true] %s89
      %95 = dma.hbm_to_vmem [thread:$0]  %s6, 1024, %s90, [#allocation14], 64, 64, 4
    $region29: #{tpu_custom_call.1} parent=1 // pred_fallthru
      _
    // Predicated region
    $region30: #{tpu_custom_call.1} parent=1 // pred_check
      _
    $region31: #{tpu_custom_call.1} parent=1 // pred_check_branch
      %97 = sbr.rel (0) target = $region33
    $region32: #{tpu_custom_call.1} parent=1 // pred_region
      _
    $region33: #{tpu_custom_call.1} parent=1 // pred_fallthru
      _
    // Predicated region
    $region34: #{tpu_custom_call.1} parent=1 // pred_check
      _
    $region35: #{tpu_custom_call.1} parent=1 // pred_check_branch
      %99 = sbr.rel (0) target = $region37
    $region36: #{tpu_custom_call.1} parent=1 // pred_region
      %100 = dma.done [#allocation5], 1024
    $region37: #{tpu_custom_call.1} parent=1 // pred_fallthru
      _
    // Predicated region
    $region38: #{tpu_custom_call.1} parent=1 // pred_check
      _
    $region39: #{tpu_custom_call.1} parent=1 // pred_check_branch
      %102 = sbr.rel (0) target = $region41
    $region40: #{tpu_custom_call.1} parent=1 // pred_region
      %103 = dma.done [#allocation8], 8192
    $region41: #{tpu_custom_call.1} parent=1 // pred_fallthru
      _
    // Predicated region
    $region42: #{tpu_custom_call.1} parent=1 // pred_check
      _
    $region43: #{tpu_custom_call.1} parent=1 // pred_check_branch
      %105 = sbr.rel (0) target = $region45
    $region44: #{tpu_custom_call.1} parent=1 // pred_region
      %106 = dma.done [#allocation8], 8192
    $region45: #{tpu_custom_call.1} parent=1 // pred_fallthru
      _
    // Predicated region
    $region46: #{tpu_custom_call.1} parent=1 // pred_check
      _
    $region47: #{tpu_custom_call.1} parent=1 // pred_check_branch
      %108 = sbr.rel (0) target = $region49
    $region48: #{tpu_custom_call.1} parent=1 // pred_region
      %109 = dma.done [#allocation11], 512
    $region49: #{tpu_custom_call.1} parent=1 // pred_fallthru
      _
    // Predicated region
    $region50: #{tpu_custom_call.1} parent=1 // pred_check
      _
    $region51: #{tpu_custom_call.1} parent=1 // pred_check_branch
      %111 = sbr.rel (0) target = $region53
    $region52: #{tpu_custom_call.1} parent=1 // pred_region
      %112 = dma.done [#allocation11], 512
    $region53: #{tpu_custom_call.1} parent=1 // pred_fallthru
      _
    // Predicated region
    $region54: #{tpu_custom_call.1} parent=1 // pred_check
      _
    $region55: #{tpu_custom_call.1} parent=1 // pred_check_branch
      %114 = sbr.rel (0) target = $region57
    $region56: #{tpu_custom_call.1} parent=1 // pred_region
      %115 = dma.done [#allocation14], 1024
    $region57: #{tpu_custom_call.1} parent=1 // pred_fallthru
      _
    %p117 = scmp.eq.s32.totalorder 0, 0
    // Predicated region
    $region58: #{tpu_custom_call.1} parent=1 // pred_check
      %p118 = pneg %p117
    $region59: #{tpu_custom_call.1} parent=1 // pred_check_branch
      %120 = sbr.rel (%p118) target = $region61
    $region60: #{tpu_custom_call.1} parent=1 // pred_region
      %v121 = vld [vmem:[#allocation10] sm:$0xff]
      %v122 = vld [vmem:[#allocation10 + $0x8] sm:$0xff]
      %v123 = vld [vmem:[#allocation10 + $0x10] sm:$0xff]
      %v124 = vld [vmem:[#allocation10 + $0x18] sm:$0xff]
      %125 = vst [vmem:[#allocation16] sm:$0xff] %v121
      %126 = vst [vmem:[#allocation16 + $0x8] sm:$0xff] %v122
      %127 = vst [vmem:[#allocation16 + $0x10] sm:$0xff] %v123
      %128 = vst [vmem:[#allocation16 + $0x18] sm:$0xff] %v124
      %v129 = vld [vmem:[#allocation12] sm:$0xff]
      %v130 = vld [vmem:[#allocation12 + $0x8] sm:$0xff]
      %v131 = vld [vmem:[#allocation12 + $0x10] sm:$0xff]
      %v132 = vld [vmem:[#allocation12 + $0x18] sm:$0xff]
      %133 = vst [vmem:[#allocation18] sm:$0xff] %v129
      %134 = vst [vmem:[#allocation18 + $0x8] sm:$0xff] %v130
      %135 = vst [vmem:[#allocation18 + $0x10] sm:$0xff] %v131
      %136 = vst [vmem:[#allocation18 + $0x18] sm:$0xff] %v132
    $region61: #{tpu_custom_call.1} parent=1 // pred_fallthru
      _
    %v137 = vld [vmem:[#allocation4] sm:$0xf]
    %v138 = vld [vmem:[#allocation4 + $0x4] sm:$0xf]
    %v139 = vld [vmem:[#allocation4 + $0x8] sm:$0xf]
    %v140 = vld [vmem:[#allocation4 + $0xc] sm:$0xf]
    %v141 = vld [vmem:[#allocation4 + $0x10] sm:$0xf]
    %v142 = vld [vmem:[#allocation4 + $0x14] sm:$0xf]
    %v143 = vld [vmem:[#allocation4 + $0x18] sm:$0xf]
    %v144 = vld [vmem:[#allocation4 + $0x1c] sm:$0xf]
    %v145 = vld [vmem:[#allocation4 + $0x20] sm:$0xf]
    %v146 = vld [vmem:[#allocation4 + $0x24] sm:$0xf]
    %v147 = vld [vmem:[#allocation4 + $0x28] sm:$0xf]
    %v148 = vld [vmem:[#allocation4 + $0x2c] sm:$0xf]
    %v149 = vld [vmem:[#allocation4 + $0x30] sm:$0xf]
    %v150 = vld [vmem:[#allocation4 + $0x34] sm:$0xf]
    %v151 = vld [vmem:[#allocation4 + $0x38] sm:$0xf]
    %v152 = vld [vmem:[#allocation4 + $0x3c] sm:$0xf]
    %v153 = vld [vmem:[#allocation7] sm:$0xff]
    %v154 = vld [vmem:[#allocation7 + $0x8] sm:$0xff]
    %v155 = vld [vmem:[#allocation7 + $0x10] sm:$0xff]
    %v156 = vld [vmem:[#allocation7 + $0x18] sm:$0xff]
    %v157 = vld [vmem:[#allocation7 + $0x20] sm:$0xff]
    %v158 = vld [vmem:[#allocation7 + $0x28] sm:$0xff]
    %v159 = vld [vmem:[#allocation7 + $0x30] sm:$0xff]
    %v160 = vld [vmem:[#allocation7 + $0x38] sm:$0xff]
    %v161 = vld [vmem:[#allocation7 + $0x40] sm:$0xff]
    %v162 = vld [vmem:[#allocation7 + $0x48] sm:$0xff]
    %v163 = vld [vmem:[#allocation7 + $0x50] sm:$0xff]
    %v164 = vld [vmem:[#allocation7 + $0x58] sm:$0xff]
    %v165 = vld [vmem:[#allocation7 + $0x60] sm:$0xff]
    %v166 = vld [vmem:[#allocation7 + $0x68] sm:$0xff]
    %v167 = vld [vmem:[#allocation7 + $0x70] sm:$0xff]
    %v168 = vld [vmem:[#allocation7 + $0x78] sm:$0xff]
    %v169 = vld [vmem:[#allocation7 + $0x80] sm:$0xff]
    %v170 = vld [vmem:[#allocation7 + $0x88] sm:$0xff]
    %v171 = vld [vmem:[#allocation7 + $0x90] sm:$0xff]
    %v172 = vld [vmem:[#allocation7 + $0x98] sm:$0xff]
    %v173 = vld [vmem:[#allocation7 + $0xa0] sm:$0xff]
    %v174 = vld [vmem:[#allocation7 + $0xa8] sm:$0xff]
    %v175 = vld [vmem:[#allocation7 + $0xb0] sm:$0xff]
    %v176 = vld [vmem:[#allocation7 + $0xb8] sm:$0xff]
    %v177 = vld [vmem:[#allocation7 + $0xc0] sm:$0xff]
    %v178 = vld [vmem:[#allocation7 + $0xc8] sm:$0xff]
    %v179 = vld [vmem:[#allocation7 + $0xd0] sm:$0xff]
    %v180 = vld [vmem:[#allocation7 + $0xd8] sm:$0xff]
    %v181 = vld [vmem:[#allocation7 + $0xe0] sm:$0xff]
    %v182 = vld [vmem:[#allocation7 + $0xe8] sm:$0xff]
    %v183 = vld [vmem:[#allocation7 + $0xf0] sm:$0xff]
    %v184 = vld [vmem:[#allocation7 + $0xf8] sm:$0xff]
    %v185 = vld [vmem:[%s3] sm:$0xf]
    %v187 = vlaneseq
    %v188 = vshrl.u32 %v187, 7
    %v189 = vsub.s32 0, %v188
    %v190 = vrot.slane %v185, %v189
    %v191 = vlaneseq
    %v192 = vshrl.u32 %v191, 7
    %v193 = vsub.s32 1, %v192
    %v194 = vrot.slane %v185, %v193
    %v195 = vlaneseq
    %v196 = vshrl.u32 %v195, 7
    %v197 = vsub.s32 2, %v196
    %v198 = vrot.slane %v185, %v197
    %v199 = vlaneseq
    %v200 = vshrl.u32 %v199, 7
    %v201 = vsub.s32 3, %v200
    %v202 = vrot.slane %v185, %v201
    %v223 = vunpack.c.l.b16 %v137
    %v224 = vunpack.c.l.b16 %v138
    %v225 = vunpack.c.l.b16 %v139
    %v226 = vunpack.c.l.b16 %v140
    %v227 = vunpack.c.l.b16 %v141
    %v228 = vunpack.c.l.b16 %v142
    %v229 = vunpack.c.l.b16 %v143
    %v230 = vunpack.c.l.b16 %v144
    %v231 = vunpack.c.l.b16 %v145
    %v232 = vunpack.c.l.b16 %v146
    %v233 = vunpack.c.l.b16 %v147
    %v234 = vunpack.c.l.b16 %v148
    %v235 = vunpack.c.l.b16 %v149
    %v236 = vunpack.c.l.b16 %v150
    %v237 = vunpack.c.l.b16 %v151
    %v238 = vunpack.c.l.b16 %v152
    %v239 = vpack.c.b16 %v224, %v223
    %v240 = vpack.c.b16 %v226, %v225
    %v241 = vpack.c.b16 %v228, %v227
    %v242 = vpack.c.b16 %v230, %v229
    %v243 = vpack.c.b16 %v232, %v231
    %v244 = vpack.c.b16 %v234, %v233
    %v245 = vpack.c.b16 %v236, %v235
    %v246 = vpack.c.b16 %v238, %v237
    %v287 = vunpack.c.l.b16 %v153
    %v288 = vunpack.c.h.b16 %v153
    %v289 = vunpack.c.l.b16 %v154
    %v290 = vunpack.c.h.b16 %v154
    %v291 = vunpack.c.l.b16 %v155
    %v292 = vunpack.c.h.b16 %v155
    %v293 = vunpack.c.l.b16 %v156
    %v294 = vunpack.c.h.b16 %v156
    %v295 = vunpack.c.l.b16 %v157
    %v296 = vunpack.c.h.b16 %v157
    %v297 = vunpack.c.l.b16 %v158
    %v298 = vunpack.c.h.b16 %v158
    %v299 = vunpack.c.l.b16 %v159
    %v300 = vunpack.c.h.b16 %v159
    %v301 = vunpack.c.l.b16 %v160
    %v302 = vunpack.c.h.b16 %v160
    %v303 = vunpack.c.l.b16 %v161
    %v304 = vunpack.c.h.b16 %v161
    %v305 = vunpack.c.l.b16 %v162
    %v306 = vunpack.c.h.b16 %v162
    %v307 = vunpack.c.l.b16 %v163
    %v308 = vunpack.c.h.b16 %v163
    %v309 = vunpack.c.l.b16 %v164
    %v310 = vunpack.c.h.b16 %v164
    %v311 = vunpack.c.l.b16 %v165
    %v312 = vunpack.c.h.b16 %v165
    %v313 = vunpack.c.l.b16 %v166
    %v314 = vunpack.c.h.b16 %v166
    %v315 = vunpack.c.l.b16 %v167
    %v316 = vunpack.c.h.b16 %v167
    %v317 = vunpack.c.l.b16 %v168
    %v318 = vunpack.c.h.b16 %v168
    %v319 = vunpack.c.l.b16 %v169
    %v320 = vunpack.c.h.b16 %v169
    %v321 = vunpack.c.l.b16 %v170
    %v322 = vunpack.c.h.b16 %v170
    %v323 = vunpack.c.l.b16 %v171
    %v324 = vunpack.c.h.b16 %v171
    %v325 = vunpack.c.l.b16 %v172
    %v326 = vunpack.c.h.b16 %v172
    %v327 = vunpack.c.l.b16 %v173
    %v328 = vunpack.c.h.b16 %v173
    %v329 = vunpack.c.l.b16 %v174
    %v330 = vunpack.c.h.b16 %v174
    %v331 = vunpack.c.l.b16 %v175
    %v332 = vunpack.c.h.b16 %v175
    %v333 = vunpack.c.l.b16 %v176
    %v334 = vunpack.c.h.b16 %v176
    %v335 = vunpack.c.l.b16 %v177
    %v336 = vunpack.c.h.b16 %v177
    %v337 = vunpack.c.l.b16 %v178
    %v338 = vunpack.c.h.b16 %v178
    %v339 = vunpack.c.l.b16 %v179
    %v340 = vunpack.c.h.b16 %v179
    %v341 = vunpack.c.l.b16 %v180
    %v342 = vunpack.c.h.b16 %v180
    %v343 = vunpack.c.l.b16 %v181
    %v344 = vunpack.c.h.b16 %v181
    %v345 = vunpack.c.l.b16 %v182
    %v346 = vunpack.c.h.b16 %v182
    %v347 = vunpack.c.l.b16 %v183
    %v348 = vunpack.c.h.b16 %v183
    %v349 = vunpack.c.l.b16 %v184
    %v350 = vunpack.c.h.b16 %v184
    %v351 = vpack.c.b16 %v291, %v287
    %v352 = vpack.c.b16 %v292, %v288
    %v353 = vpack.c.b16 %v293, %v289
    %v354 = vpack.c.b16 %v294, %v290
    %v355 = vpack.c.b16 %v299, %v295
    %v356 = vpack.c.b16 %v300, %v296
    %v357 = vpack.c.b16 %v301, %v297
    %v358 = vpack.c.b16 %v302, %v298
    %v359 = vpack.c.b16 %v307, %v303
    %v360 = vpack.c.b16 %v308, %v304
    %v361 = vpack.c.b16 %v309, %v305
    %v362 = vpack.c.b16 %v310, %v306
    %v363 = vpack.c.b16 %v315, %v311
    %v364 = vpack.c.b16 %v316, %v312
    %v365 = vpack.c.b16 %v317, %v313
    %v366 = vpack.c.b16 %v318, %v314
    %v367 = vpack.c.b16 %v323, %v319
    %v368 = vpack.c.b16 %v324, %v320
    %v369 = vpack.c.b16 %v325, %v321
    %v370 = vpack.c.b16 %v326, %v322
    %v371 = vpack.c.b16 %v331, %v327
    %v372 = vpack.c.b16 %v332, %v328
    %v373 = vpack.c.b16 %v333, %v329
    %v374 = vpack.c.b16 %v334, %v330
    %v375 = vpack.c.b16 %v339, %v335
    %v376 = vpack.c.b16 %v340, %v336
    %v377 = vpack.c.b16 %v341, %v337
    %v378 = vpack.c.b16 %v342, %v338
    %v379 = vpack.c.b16 %v347, %v343
    %v380 = vpack.c.b16 %v348, %v344
    %v381 = vpack.c.b16 %v349, %v345
    %v382 = vpack.c.b16 %v350, %v346
    %415 = vmatprep.subr.bf16.mxu0 %v352
    %416 = vmatpush1.bf16.msra.mxu0 %v351
    %417 = vmatprep.subr.bf16.mxu0 %v356
    %418 = vmatpush1.bf16.msra.mxu0 %v355
    %419 = vmatprep.subr.bf16.mxu0 %v360
    %420 = vmatpush1.bf16.msra.mxu0 %v359
    %421 = vmatprep.subr.bf16.mxu0 %v364
    %422 = vmatpush1.bf16.msra.mxu0 %v363
    %423 = vmatprep.subr.bf16.mxu0 %v368
    %424 = vmatpush1.bf16.msra.mxu0 %v367
    %425 = vmatprep.subr.bf16.mxu0 %v372
    %426 = vmatpush1.bf16.msra.mxu0 %v371
    %427 = vmatprep.subr.bf16.mxu0 %v376
    %428 = vmatpush1.bf16.msra.mxu0 %v375
    %429 = vmatprep.subr.bf16.mxu0 %v380
    %430 = vmatpush1.bf16.msra.mxu0 %v379
    %431 = vmatprep.subr.bf16.mxu0 0
    %432 = vmatpush1.bf16.msra.mxu0 0
    %433 = vmatprep.subr.bf16.mxu0 0
    %434 = vmatpush1.bf16.msra.mxu0 0
    %435 = vmatprep.subr.bf16.mxu0 0
    %436 = vmatpush1.bf16.msra.mxu0 0
    %437 = vmatprep.subr.bf16.mxu0 0
    %438 = vmatpush1.bf16.msra.mxu0 0
    %439 = vmatprep.subr.bf16.mxu0 0
    %440 = vmatpush1.bf16.msra.mxu0 0
    %441 = vmatprep.subr.bf16.mxu0 0
    %442 = vmatpush1.bf16.msra.mxu0 0
    %443 = vmatprep.subr.bf16.mxu0 0
    %444 = vmatpush1.bf16.msra.mxu0 0
    %445 = vmatprep.subr.bf16.mxu0 0
    %446 = vmatpush1.bf16.msra.mxu0 0
    %447 = vmatprep.mubr.bf16.mxu0 0
    %448 = vmatmul.mubr.bf16.gmra.mrb[0].mxu0 %v239
    %v449 = vpop.f32.mrb[0].mxu0
    %v450 = vadd.f32 %v190, %v449
    %v451 = vpop.f32.mrb[0].mxu0
    %v452 = vadd.f32 %v194, %v451
    %v453 = vpop.f32.mrb[0].mxu0
    %v454 = vadd.f32 %v190, %v453
    %v455 = vpop.f32.mrb[0].mxu0
    %v456 = vadd.f32 %v194, %v455
    %457 = vmatprep.mubr.bf16.mxu0 0
    %458 = vmatmul.mubr.bf16.gmra.mrb[0].mxu0 %v240
    %v459 = vpop.f32.mrb[0].mxu0
    %v460 = vadd.f32 %v190, %v459
    %v461 = vpop.f32.mrb[0].mxu0
    %v462 = vadd.f32 %v194, %v461
    %v463 = vpop.f32.mrb[0].mxu0
    %v464 = vadd.f32 %v190, %v463
    %v465 = vpop.f32.mrb[0].mxu0
    %v466 = vadd.f32 %v194, %v465
    %467 = vmatprep.mubr.bf16.mxu0 0
    %468 = vmatmul.mubr.bf16.gmra.mrb[0].mxu0 %v241
    %v469 = vpop.f32.mrb[0].mxu0
    %v470 = vadd.f32 %v190, %v469
    %v471 = vpop.f32.mrb[0].mxu0
    %v472 = vadd.f32 %v194, %v471
    %v473 = vpop.f32.mrb[0].mxu0
    %v474 = vadd.f32 %v190, %v473
    %v475 = vpop.f32.mrb[0].mxu0
    %v476 = vadd.f32 %v194, %v475
    %477 = vmatprep.mubr.bf16.mxu0 0
    %478 = vmatmul.mubr.bf16.gmra.mrb[0].mxu0 %v242
    %v479 = vpop.f32.mrb[0].mxu0
    %v480 = vadd.f32 %v190, %v479
    %v481 = vpop.f32.mrb[0].mxu0
    %v482 = vadd.f32 %v194, %v481
    %v483 = vpop.f32.mrb[0].mxu0
    %v484 = vadd.f32 %v190, %v483
    %v485 = vpop.f32.mrb[0].mxu0
    %v486 = vadd.f32 %v194, %v485
    %487 = vmatprep.mubr.bf16.mxu0 0
    %488 = vmatmul.mubr.bf16.gmra.mrb[0].mxu0 %v243
    %v489 = vpop.f32.mrb[0].mxu0
    %v490 = vadd.f32 %v190, %v489
    %v491 = vpop.f32.mrb[0].mxu0
    %v492 = vadd.f32 %v194, %v491
    %v493 = vpop.f32.mrb[0].mxu0
    %v494 = vadd.f32 %v190, %v493
    %v495 = vpop.f32.mrb[0].mxu0
    %v496 = vadd.f32 %v194, %v495
    %497 = vmatprep.mubr.bf16.mxu0 0
    %498 = vmatmul.mubr.bf16.gmra.mrb[0].mxu0 %v244
    %v499 = vpop.f32.mrb[0].mxu0
    %v500 = vadd.f32 %v190, %v499
    %v501 = vpop.f32.mrb[0].mxu0
    %v502 = vadd.f32 %v194, %v501
    %v503 = vpop.f32.mrb[0].mxu0
    %v504 = vadd.f32 %v190, %v503
    %v505 = vpop.f32.mrb[0].mxu0
    %v506 = vadd.f32 %v194, %v505
    %507 = vmatprep.mubr.bf16.mxu0 0
    %508 = vmatmul.mubr.bf16.gmra.mrb[0].mxu0 %v245
    %v509 = vpop.f32.mrb[0].mxu0
    %v510 = vadd.f32 %v190, %v509
    %v511 = vpop.f32.mrb[0].mxu0
    %v512 = vadd.f32 %v194, %v511
    %v513 = vpop.f32.mrb[0].mxu0
    %v514 = vadd.f32 %v190, %v513
    %v515 = vpop.f32.mrb[0].mxu0
    %v516 = vadd.f32 %v194, %v515
    %517 = vmatprep.mubr.bf16.mxu0 0
    %518 = vmatmul.mubr.bf16.gmra.mrb[0].mxu0 %v246
    %v519 = vpop.f32.mrb[0].mxu0
    %v520 = vadd.f32 %v190, %v519
    %v521 = vpop.f32.mrb[0].mxu0
    %v522 = vadd.f32 %v194, %v521
    %v523 = vpop.f32.mrb[0].mxu0
    %v524 = vadd.f32 %v190, %v523
    %v525 = vpop.f32.mrb[0].mxu0
    %v526 = vadd.f32 %v194, %v525
    %527 = vdwg.mxu0
    %528 = vmatprep.subr.bf16.mxu0 %v354
    %529 = vmatpush1.bf16.msra.mxu0 %v353
    %530 = vmatprep.subr.bf16.mxu0 %v358
    %531 = vmatpush1.bf16.msra.mxu0 %v357
    %532 = vmatprep.subr.bf16.mxu0 %v362
    %533 = vmatpush1.bf16.msra.mxu0 %v361
    %534 = vmatprep.subr.bf16.mxu0 %v366
    %535 = vmatpush1.bf16.msra.mxu0 %v365
    %536 = vmatprep.subr.bf16.mxu0 %v370
    %537 = vmatpush1.bf16.msra.mxu0 %v369
    %538 = vmatprep.subr.bf16.mxu0 %v374
    %539 = vmatpush1.bf16.msra.mxu0 %v373
    %540 = vmatprep.subr.bf16.mxu0 %v378
    %541 = vmatpush1.bf16.msra.mxu0 %v377
    %542 = vmatprep.subr.bf16.mxu0 %v382
    %543 = vmatpush1.bf16.msra.mxu0 %v381
    %544 = vmatprep.subr.bf16.mxu0 0
    %545 = vmatpush1.bf16.msra.mxu0 0
    %546 = vmatprep.subr.bf16.mxu0 0
    %547 = vmatpush1.bf16.msra.mxu0 0
    %548 = vmatprep.subr.bf16.mxu0 0
    %549 = vmatpush1.bf16.msra.mxu0 0
    %550 = vmatprep.subr.bf16.mxu0 0
    %551 = vmatpush1.bf16.msra.mxu0 0
    %552 = vmatprep.subr.bf16.mxu0 0
    %553 = vmatpush1.bf16.msra.mxu0 0
    %554 = vmatprep.subr.bf16.mxu0 0
    %555 = vmatpush1.bf16.msra.mxu0 0
    %556 = vmatprep.subr.bf16.mxu0 0
    %557 = vmatpush1.bf16.msra.mxu0 0
    %558 = vmatprep.subr.bf16.mxu0 0
    %559 = vmatpush1.bf16.msra.mxu0 0
    %560 = vmatprep.mubr.bf16.mxu0 0
    %561 = vmatmul.mubr.bf16.gmra.mrb[0].mxu0 %v239
    %v562 = vpop.f32.mrb[0].mxu0
    %v563 = vadd.f32 %v198, %v562
    %v564 = vpop.f32.mrb[0].mxu0
    %v565 = vadd.f32 %v202, %v564
    %v566 = vpop.f32.mrb[0].mxu0
    %v567 = vadd.f32 %v198, %v566
    %v568 = vpop.f32.mrb[0].mxu0
    %v569 = vadd.f32 %v202, %v568
    %570 = vmatprep.mubr.bf16.mxu0 0
    %571 = vmatmul.mubr.bf16.gmra.mrb[0].mxu0 %v240
    %v572 = vpop.f32.mrb[0].mxu0
    %v573 = vadd.f32 %v198, %v572
    %v574 = vpop.f32.mrb[0].mxu0
    %v575 = vadd.f32 %v202, %v574
    %v576 = vpop.f32.mrb[0].mxu0
    %v577 = vadd.f32 %v198, %v576
    %v578 = vpop.f32.mrb[0].mxu0
    %v579 = vadd.f32 %v202, %v578
    %580 = vmatprep.mubr.bf16.mxu0 0
    %581 = vmatmul.mubr.bf16.gmra.mrb[0].mxu0 %v241
    %v582 = vpop.f32.mrb[0].mxu0
    %v583 = vadd.f32 %v198, %v582
    %v584 = vpop.f32.mrb[0].mxu0
    %v585 = vadd.f32 %v202, %v584
    %v586 = vpop.f32.mrb[0].mxu0
    %v587 = vadd.f32 %v198, %v586
    %v588 = vpop.f32.mrb[0].mxu0
    %v589 = vadd.f32 %v202, %v588
    %590 = vmatprep.mubr.bf16.mxu0 0
    %591 = vmatmul.mubr.bf16.gmra.mrb[0].mxu0 %v242
    %v592 = vpop.f32.mrb[0].mxu0
    %v593 = vadd.f32 %v198, %v592
    %v594 = vpop.f32.mrb[0].mxu0
    %v595 = vadd.f32 %v202, %v594
    %v596 = vpop.f32.mrb[0].mxu0
    %v597 = vadd.f32 %v198, %v596
    %v598 = vpop.f32.mrb[0].mxu0
    %v599 = vadd.f32 %v202, %v598
    %600 = vmatprep.mubr.bf16.mxu0 0
    %601 = vmatmul.mubr.bf16.gmra.mrb[0].mxu0 %v243
    %v602 = vpop.f32.mrb[0].mxu0
    %v603 = vadd.f32 %v198, %v602
    %v604 = vpop.f32.mrb[0].mxu0
    %v605 = vadd.f32 %v202, %v604
    %v606 = vpop.f32.mrb[0].mxu0
    %v607 = vadd.f32 %v198, %v606
    %v608 = vpop.f32.mrb[0].mxu0
    %v609 = vadd.f32 %v202, %v608
    %610 = vmatprep.mubr.bf16.mxu0 0
    %611 = vmatmul.mubr.bf16.gmra.mrb[0].mxu0 %v244
    %v612 = vpop.f32.mrb[0].mxu0
    %v613 = vadd.f32 %v198, %v612
    %v614 = vpop.f32.mrb[0].mxu0
    %v615 = vadd.f32 %v202, %v614
    %v616 = vpop.f32.mrb[0].mxu0
    %v617 = vadd.f32 %v198, %v616
    %v618 = vpop.f32.mrb[0].mxu0
    %v619 = vadd.f32 %v202, %v618
    %620 = vmatprep.mubr.bf16.mxu0 0
    %621 = vmatmul.mubr.bf16.gmra.mrb[0].mxu0 %v245
    %v622 = vpop.f32.mrb[0].mxu0
    %v623 = vadd.f32 %v198, %v622
    %v624 = vpop.f32.mrb[0].mxu0
    %v625 = vadd.f32 %v202, %v624
    %v626 = vpop.f32.mrb[0].mxu0
    %v627 = vadd.f32 %v198, %v626
    %v628 = vpop.f32.mrb[0].mxu0
    %v629 = vadd.f32 %v202, %v628
    %630 = vmatprep.mubr.bf16.mxu0 0
    %631 = vmatmul.mubr.bf16.gmra.mrb[0].mxu0 %v246
    %v632 = vpop.f32.mrb[0].mxu0
    %v633 = vadd.f32 %v198, %v632
    %v634 = vpop.f32.mrb[0].mxu0
    %v635 = vadd.f32 %v202, %v634
    %v636 = vpop.f32.mrb[0].mxu0
    %v637 = vadd.f32 %v198, %v636
    %v638 = vpop.f32.mrb[0].mxu0
    %v639 = vadd.f32 %v202, %v638
    %640 = vdwg.mxu0
    %641 = vst [vmem:[#allocation2] sm:$0xff] %v450
    %642 = vst [vmem:[#allocation2 + $0x8] sm:$0xff] %v452
    %643 = vst [vmem:[#allocation2 + $0x10] sm:$0xff] %v563
    %644 = vst [vmem:[#allocation2 + $0x18] sm:$0xff] %v565
    %645 = vst [vmem:[#allocation2 + $0x20] sm:$0xff] %v454
    %646 = vst [vmem:[#allocation2 + $0x28] sm:$0xff] %v456
    %647 = vst [vmem:[#allocation2 + $0x30] sm:$0xff] %v567
    %648 = vst [vmem:[#allocation2 + $0x38] sm:$0xff] %v569
    %649 = vst [vmem:[#allocation2 + $0x40] sm:$0xff] %v460
    %650 = vst [vmem:[#allocation2 + $0x48] sm:$0xff] %v462
    %651 = vst [vmem:[#allocation2 + $0x50] sm:$0xff] %v573
    %652 = vst [vmem:[#allocation2 + $0x58] sm:$0xff] %v575
    %653 = vst [vmem:[#allocation2 + $0x60] sm:$0xff] %v464
    %654 = vst [vmem:[#allocation2 + $0x68] sm:$0xff] %v466
    %655 = vst [vmem:[#allocation2 + $0x70] sm:$0xff] %v577
    %656 = vst [vmem:[#allocation2 + $0x78] sm:$0xff] %v579
    %657 = vst [vmem:[#allocation2 + $0x80] sm:$0xff] %v470
    %658 = vst [vmem:[#allocation2 + $0x88] sm:$0xff] %v472
    %659 = vst [vmem:[#allocation2 + $0x90] sm:$0xff] %v583
    %660 = vst [vmem:[#allocation2 + $0x98] sm:$0xff] %v585
    %661 = vst [vmem:[#allocation2 + $0xa0] sm:$0xff] %v474
    %662 = vst [vmem:[#allocation2 + $0xa8] sm:$0xff] %v476
    %663 = vst [vmem:[#allocation2 + $0xb0] sm:$0xff] %v587
    %664 = vst [vmem:[#allocation2 + $0xb8] sm:$0xff] %v589
    %665 = vst [vmem:[#allocation2 + $0xc0] sm:$0xff] %v480
    %666 = vst [vmem:[#allocation2 + $0xc8] sm:$0xff] %v482
    %667 = vst [vmem:[#allocation2 + $0xd0] sm:$0xff] %v593
    %668 = vst [vmem:[#allocation2 + $0xd8] sm:$0xff] %v595
    %669 = vst [vmem:[#allocation2 + $0xe0] sm:$0xff] %v484
    %670 = vst [vmem:[#allocation2 + $0xe8] sm:$0xff] %v486
    %671 = vst [vmem:[#allocation2 + $0xf0] sm:$0xff] %v597
    %672 = vst [vmem:[#allocation2 + $0xf8] sm:$0xff] %v599
    %673 = vst [vmem:[#allocation2 + $0x100] sm:$0xff] %v490
    %674 = vst [vmem:[#allocation2 + $0x108] sm:$0xff] %v492
    %675 = vst [vmem:[#allocation2 + $0x110] sm:$0xff] %v603
    %676 = vst [vmem:[#allocation2 + $0x118] sm:$0xff] %v605
    %677 = vst [vmem:[#allocation2 + $0x120] sm:$0xff] %v494
    %678 = vst [vmem:[#allocation2 + $0x128] sm:$0xff] %v496
    %679 = vst [vmem:[#allocation2 + $0x130] sm:$0xff] %v607
    %680 = vst [vmem:[#allocation2 + $0x138] sm:$0xff] %v609
    %681 = vst [vmem:[#allocation2 + $0x140] sm:$0xff] %v500
    %682 = vst [vmem:[#allocation2 + $0x148] sm:$0xff] %v502
    %683 = vst [vmem:[#allocation2 + $0x150] sm:$0xff] %v613
    %684 = vst [vmem:[#allocation2 + $0x158] sm:$0xff] %v615
    %685 = vst [vmem:[#allocation2 + $0x160] sm:$0xff] %v504
    %686 = vst [vmem:[#allocation2 + $0x168] sm:$0xff] %v506
    %687 = vst [vmem:[#allocation2 + $0x170] sm:$0xff] %v617
    %688 = vst [vmem:[#allocation2 + $0x178] sm:$0xff] %v619
    %689 = vst [vmem:[#allocation2 + $0x180] sm:$0xff] %v510
    %690 = vst [vmem:[#allocation2 + $0x188] sm:$0xff] %v512
    %691 = vst [vmem:[#allocation2 + $0x190] sm:$0xff] %v623
    %692 = vst [vmem:[#allocation2 + $0x198] sm:$0xff] %v625
    %693 = vst [vmem:[#allocation2 + $0x1a0] sm:$0xff] %v514
    %694 = vst [vmem:[#allocation2 + $0x1a8] sm:$0xff] %v516
    %695 = vst [vmem:[#allocation2 + $0x1b0] sm:$0xff] %v627
    %696 = vst [vmem:[#allocation2 + $0x1b8] sm:$0xff] %v629
    %697 = vst [vmem:[#allocation2 + $0x1c0] sm:$0xff] %v520
    %698 = vst [vmem:[#allocation2 + $0x1c8] sm:$0xff] %v522
    %699 = vst [vmem:[#allocation2 + $0x1d0] sm:$0xff] %v633
    %700 = vst [vmem:[#allocation2 + $0x1d8] sm:$0xff] %v635
    %701 = vst [vmem:[#allocation2 + $0x1e0] sm:$0xff] %v524
    %702 = vst [vmem:[#allocation2 + $0x1e8] sm:$0xff] %v526
    %703 = vst [vmem:[#allocation2 + $0x1f0] sm:$0xff] %v637
    %704 = vst [vmem:[#allocation2 + $0x1f8] sm:$0xff] %v639
    %v705 = vld [vmem:[#allocation9] sm:$0xff]
    %v706 = vld [vmem:[#allocation9 + $0x8] sm:$0xff]
    %v707 = vld [vmem:[#allocation9 + $0x10] sm:$0xff]
    %v708 = vld [vmem:[#allocation9 + $0x18] sm:$0xff]
    %v709 = vld [vmem:[#allocation9 + $0x20] sm:$0xff]
    %v710 = vld [vmem:[#allocation9 + $0x28] sm:$0xff]
    %v711 = vld [vmem:[#allocation9 + $0x30] sm:$0xff]
    %v712 = vld [vmem:[#allocation9 + $0x38] sm:$0xff]
    %v713 = vld [vmem:[#allocation9 + $0x40] sm:$0xff]
    %v714 = vld [vmem:[#allocation9 + $0x48] sm:$0xff]
    %v715 = vld [vmem:[#allocation9 + $0x50] sm:$0xff]
    %v716 = vld [vmem:[#allocation9 + $0x58] sm:$0xff]
    %v717 = vld [vmem:[#allocation9 + $0x60] sm:$0xff]
    %v718 = vld [vmem:[#allocation9 + $0x68] sm:$0xff]
    %v719 = vld [vmem:[#allocation9 + $0x70] sm:$0xff]
    %v720 = vld [vmem:[#allocation9 + $0x78] sm:$0xff]
    %v721 = vld [vmem:[#allocation9 + $0x80] sm:$0xff]
    %v722 = vld [vmem:[#allocation9 + $0x88] sm:$0xff]
    %v723 = vld [vmem:[#allocation9 + $0x90] sm:$0xff]
    %v724 = vld [vmem:[#allocation9 + $0x98] sm:$0xff]
    %v725 = vld [vmem:[#allocation9 + $0xa0] sm:$0xff]
    %v726 = vld [vmem:[#allocation9 + $0xa8] sm:$0xff]
    %v727 = vld [vmem:[#allocation9 + $0xb0] sm:$0xff]
    %v728 = vld [vmem:[#allocation9 + $0xb8] sm:$0xff]
    %v729 = vld [vmem:[#allocation9 + $0xc0] sm:$0xff]
    %v730 = vld [vmem:[#allocation9 + $0xc8] sm:$0xff]
    %v731 = vld [vmem:[#allocation9 + $0xd0] sm:$0xff]
    %v732 = vld [vmem:[#allocation9 + $0xd8] sm:$0xff]
    %v733 = vld [vmem:[#allocation9 + $0xe0] sm:$0xff]
    %v734 = vld [vmem:[#allocation9 + $0xe8] sm:$0xff]
    %v735 = vld [vmem:[#allocation9 + $0xf0] sm:$0xff]
    %v736 = vld [vmem:[#allocation9 + $0xf8] sm:$0xff]
    %v737 = vld [vmem:[#allocation16] sm:$0xff]
    %v738 = vld [vmem:[#allocation16 + $0x8] sm:$0xff]
    %v739 = vld [vmem:[#allocation18] sm:$0xff]
    %v740 = vld [vmem:[#allocation18 + $0x8] sm:$0xff]
    %v741 = vld [vmem:[#allocation2] sm:$0xff]
    %v742 = vld [vmem:[#allocation2 + $0x8] sm:$0xff]
    %v743 = vld [vmem:[#allocation2 + $0x10] sm:$0xff]
    %v744 = vld [vmem:[#allocation2 + $0x18] sm:$0xff]
    %v745 = vld [vmem:[#allocation2 + $0x20] sm:$0xff]
    %v746 = vld [vmem:[#allocation2 + $0x28] sm:$0xff]
    %v747 = vld [vmem:[#allocation2 + $0x30] sm:$0xff]
    %v748 = vld [vmem:[#allocation2 + $0x38] sm:$0xff]
    %v749 = vpack.c.bf16 %v738, %v737
    %v782 = vunpack.c.l.b16 %v705
    %v783 = vunpack.c.h.b16 %v705
    %v784 = vunpack.c.l.b16 %v706
    %v785 = vunpack.c.h.b16 %v706
    %v786 = vunpack.c.l.b16 %v707
    %v787 = vunpack.c.h.b16 %v707
    %v788 = vunpack.c.l.b16 %v708
    %v789 = vunpack.c.h.b16 %v708
    %v790 = vunpack.c.l.b16 %v709
    %v791 = vunpack.c.h.b16 %v709
    %v792 = vunpack.c.l.b16 %v710
    %v793 = vunpack.c.h.b16 %v710
    %v794 = vunpack.c.l.b16 %v711
    %v795 = vunpack.c.h.b16 %v711
    %v796 = vunpack.c.l.b16 %v712
    %v797 = vunpack.c.h.b16 %v712
    %v798 = vunpack.c.l.b16 %v713
    %v799 = vunpack.c.h.b16 %v713
    %v800 = vunpack.c.l.b16 %v714
    %v801 = vunpack.c.h.b16 %v714
    %v802 = vunpack.c.l.b16 %v715
    %v803 = vunpack.c.h.b16 %v715
    %v804 = vunpack.c.l.b16 %v716
    %v805 = vunpack.c.h.b16 %v716
    %v806 = vunpack.c.l.b16 %v717
    %v807 = vunpack.c.h.b16 %v717
    %v808 = vunpack.c.l.b16 %v718
    %v809 = vunpack.c.h.b16 %v718
    %v810 = vunpack.c.l.b16 %v719
    %v811 = vunpack.c.h.b16 %v719
    %v812 = vunpack.c.l.b16 %v720
    %v813 = vunpack.c.h.b16 %v720
    %v814 = vunpack.c.l.b16 %v721
    %v815 = vunpack.c.h.b16 %v721
    %v816 = vunpack.c.l.b16 %v722
    %v817 = vunpack.c.h.b16 %v722
    %v818 = vunpack.c.l.b16 %v723
    %v819 = vunpack.c.h.b16 %v723
    %v820 = vunpack.c.l.b16 %v724
    %v821 = vunpack.c.h.b16 %v724
    %v822 = vunpack.c.l.b16 %v725
    %v823 = vunpack.c.h.b16 %v725
    %v824 = vunpack.c.l.b16 %v726
    %v825 = vunpack.c.h.b16 %v726
    %v826 = vunpack.c.l.b16 %v727
    %v827 = vunpack.c.h.b16 %v727
    %v828 = vunpack.c.l.b16 %v728
    %v829 = vunpack.c.h.b16 %v728
    %v830 = vunpack.c.l.b16 %v729
    %v831 = vunpack.c.h.b16 %v729
    %v832 = vunpack.c.l.b16 %v730
    %v833 = vunpack.c.h.b16 %v730
    %v834 = vunpack.c.l.b16 %v731
    %v835 = vunpack.c.h.b16 %v731
    %v836 = vunpack.c.l.b16 %v732
    %v837 = vunpack.c.h.b16 %v732
    %v838 = vunpack.c.l.b16 %v733
    %v839 = vunpack.c.h.b16 %v733
    %v840 = vunpack.c.l.b16 %v734
    %v841 = vunpack.c.h.b16 %v734
    %v842 = vunpack.c.l.b16 %v735
    %v843 = vunpack.c.h.b16 %v735
    %v844 = vunpack.c.l.b16 %v736
    %v845 = vunpack.c.h.b16 %v736
    %v846 = vpack.c.b16 %v786, %v782
    %v847 = vpack.c.b16 %v787, %v783
    %v848 = vpack.c.b16 %v788, %v784
    %v849 = vpack.c.b16 %v789, %v785
    %v850 = vpack.c.b16 %v794, %v790
    %v851 = vpack.c.b16 %v795, %v791
    %v852 = vpack.c.b16 %v796, %v792
    %v853 = vpack.c.b16 %v797, %v793
    %v854 = vpack.c.b16 %v802, %v798
    %v855 = vpack.c.b16 %v803, %v799
    %v856 = vpack.c.b16 %v804, %v800
    %v857 = vpack.c.b16 %v805, %v801
    %v858 = vpack.c.b16 %v810, %v806
    %v859 = vpack.c.b16 %v811, %v807
    %v860 = vpack.c.b16 %v812, %v808
    %v861 = vpack.c.b16 %v813, %v809
    %v862 = vpack.c.b16 %v818, %v814
    %v863 = vpack.c.b16 %v819, %v815
    %v864 = vpack.c.b16 %v820, %v816
    %v865 = vpack.c.b16 %v821, %v817
    %v866 = vpack.c.b16 %v826, %v822
    %v867 = vpack.c.b16 %v827, %v823
    %v868 = vpack.c.b16 %v828, %v824
    %v869 = vpack.c.b16 %v829, %v825
    %v870 = vpack.c.b16 %v834, %v830
    %v871 = vpack.c.b16 %v835, %v831
    %v872 = vpack.c.b16 %v836, %v832
    %v873 = vpack.c.b16 %v837, %v833
    %v874 = vpack.c.b16 %v842, %v838
    %v875 = vpack.c.b16 %v843, %v839
    %v876 = vpack.c.b16 %v844, %v840
    %v877 = vpack.c.b16 %v845, %v841
    %910 = vmatprep.subr.bf16.mxu0 %v847
    %911 = vmatpush1.bf16.msra.mxu0 %v846
    %912 = vmatprep.subr.bf16.mxu0 %v851
    %913 = vmatpush1.bf16.msra.mxu0 %v850
    %914 = vmatprep.subr.bf16.mxu0 %v855
    %915 = vmatpush1.bf16.msra.mxu0 %v854
    %916 = vmatprep.subr.bf16.mxu0 %v859
    %917 = vmatpush1.bf16.msra.mxu0 %v858
    %918 = vmatprep.subr.bf16.mxu0 %v863
    %919 = vmatpush1.bf16.msra.mxu0 %v862
    %920 = vmatprep.subr.bf16.mxu0 %v867
    %921 = vmatpush1.bf16.msra.mxu0 %v866
    %922 = vmatprep.subr.bf16.mxu0 %v871
    %923 = vmatpush1.bf16.msra.mxu0 %v870
    %924 = vmatprep.subr.bf16.mxu0 %v875
    %925 = vmatpush1.bf16.msra.mxu0 %v874
    %926 = vmatprep.subr.bf16.mxu0 0
    %927 = vmatpush1.bf16.msra.mxu0 0
    %928 = vmatprep.subr.bf16.mxu0 0
    %929 = vmatpush1.bf16.msra.mxu0 0
    %930 = vmatprep.subr.bf16.mxu0 0
    %931 = vmatpush1.bf16.msra.mxu0 0
    %932 = vmatprep.subr.bf16.mxu0 0
    %933 = vmatpush1.bf16.msra.mxu0 0
    %934 = vmatprep.subr.bf16.mxu0 0
    %935 = vmatpush1.bf16.msra.mxu0 0
    %936 = vmatprep.subr.bf16.mxu0 0
    %937 = vmatpush1.bf16.msra.mxu0 0
    %938 = vmatprep.subr.bf16.mxu0 0
    %939 = vmatpush1.bf16.msra.mxu0 0
    %940 = vmatprep.subr.bf16.mxu0 0
    %941 = vmatpush1.bf16.msra.mxu0 0
    %942 = vmatprep.mubr.bf16.mxu0 0
    %943 = vmatmul.mubr.bf16.gmra.mrb[0].mxu0 %v749
    %v944 = vpop.f32.mrb[0].mxu0
    %v945 = vadd.f32 0.0, %v944
    %v946 = vpop.f32.mrb[0].mxu0
    %v947 = vadd.f32 0.0, %v946
    %v948 = vpop.f32.mrb[0].mxu0
    %v949 = vadd.f32 0.0, %v948
    %v950 = vpop.f32.mrb[0].mxu0
    %v951 = vadd.f32 0.0, %v950
    %952 = vdwg.mxu0
    %953 = vmatprep.subr.bf16.mxu0 %v849
    %954 = vmatpush1.bf16.msra.mxu0 %v848
    %955 = vmatprep.subr.bf16.mxu0 %v853
    %956 = vmatpush1.bf16.msra.mxu0 %v852
    %957 = vmatprep.subr.bf16.mxu0 %v857
    %958 = vmatpush1.bf16.msra.mxu0 %v856
    %959 = vmatprep.subr.bf16.mxu0 %v861
    %960 = vmatpush1.bf16.msra.mxu0 %v860
    %961 = vmatprep.subr.bf16.mxu0 %v865
    %962 = vmatpush1.bf16.msra.mxu0 %v864
    %963 = vmatprep.subr.bf16.mxu0 %v869
    %964 = vmatpush1.bf16.msra.mxu0 %v868
    %965 = vmatprep.subr.bf16.mxu0 %v873
    %966 = vmatpush1.bf16.msra.mxu0 %v872
    %967 = vmatprep.subr.bf16.mxu0 %v877
    %968 = vmatpush1.bf16.msra.mxu0 %v876
    %969 = vmatprep.subr.bf16.mxu0 0
    %970 = vmatpush1.bf16.msra.mxu0 0
    %971 = vmatprep.subr.bf16.mxu0 0
    %972 = vmatpush1.bf16.msra.mxu0 0
    %973 = vmatprep.subr.bf16.mxu0 0
    %974 = vmatpush1.bf16.msra.mxu0 0
    %975 = vmatprep.subr.bf16.mxu0 0
    %976 = vmatpush1.bf16.msra.mxu0 0
    %977 = vmatprep.subr.bf16.mxu0 0
    %978 = vmatpush1.bf16.msra.mxu0 0
    %979 = vmatprep.subr.bf16.mxu0 0
    %980 = vmatpush1.bf16.msra.mxu0 0
    %981 = vmatprep.subr.bf16.mxu0 0
    %982 = vmatpush1.bf16.msra.mxu0 0
    %983 = vmatprep.subr.bf16.mxu0 0
    %984 = vmatpush1.bf16.msra.mxu0 0
    %985 = vmatprep.mubr.bf16.mxu0 0
    %986 = vmatmul.mubr.bf16.gmra.mrb[0].mxu0 %v749
    %v987 = vpop.f32.mrb[0].mxu0
    %v988 = vadd.f32 0.0, %v987
    %v989 = vpop.f32.mrb[0].mxu0
    %v990 = vadd.f32 0.0, %v989
    %v991 = vpop.f32.mrb[0].mxu0
    %v992 = vadd.f32 0.0, %v991
    %v993 = vpop.f32.mrb[0].mxu0
    %v994 = vadd.f32 0.0, %v993
    %995 = vdwg.mxu0
    %v996 = vadd.f32 %v741, %v945
    %v997 = vadd.f32 %v742, %v947
    %v998 = vadd.f32 %v743, %v988
    %v999 = vadd.f32 %v744, %v990
    %v1000 = vadd.f32 %v745, %v949
    %v1001 = vadd.f32 %v746, %v951
    %v1002 = vadd.f32 %v747, %v992
    %v1003 = vadd.f32 %v748, %v994
    %v1004 = vxor.u32 %v996, 2147483648
    %v1005 = vxor.u32 %v1000, 2147483648
    %v1006 = vmul.f32 %v1004, 1.442695
    %v1007 = vpow.pop %v1006
    %v1008 = vmul.f32 %v1005, 1.442695
    %v1009 = vpow.pop %v1008
    %v1010 = vadd.f32 %v1007, 1.0
    %v1011 = vadd.f32 %v1009, 1.0
    %v1012 = vrcp.pop %v1010
    %v1013 = vmul.f32 1.0, %v1012
    %v1014 = vrcp.pop %v1011
    %v1015 = vmul.f32 1.0, %v1014
    %v1016 = vxor.u32 %v997, 2147483648
    %v1017 = vxor.u32 %v1001, 2147483648
    %v1018 = vmul.f32 %v1016, 1.442695
    %v1019 = vpow.pop %v1018
    %v1020 = vmul.f32 %v1017, 1.442695
    %v1021 = vpow.pop %v1020
    %v1022 = vadd.f32 %v1019, 1.0
    %v1023 = vadd.f32 %v1021, 1.0
    %v1024 = vrcp.pop %v1022
    %v1025 = vmul.f32 1.0, %v1024
    %v1026 = vrcp.pop %v1023
    %v1027 = vmul.f32 1.0, %v1026
    %v1028 = vtanh.pop %v998
    %v1029 = vtanh.pop %v1002
    %v1030 = vxor.u32 %v999, 2147483648
    %v1031 = vxor.u32 %v1003, 2147483648
    %v1032 = vmul.f32 %v1030, 1.442695
    %v1033 = vpow.pop %v1032
    %v1034 = vmul.f32 %v1031, 1.442695
    %v1035 = vpow.pop %v1034
    %v1036 = vadd.f32 %v1033, 1.0
    %v1037 = vadd.f32 %v1035, 1.0
    %v1038 = vrcp.pop %v1036
    %v1039 = vmul.f32 1.0, %v1038
    %v1040 = vrcp.pop %v1037
    %v1041 = vmul.f32 1.0, %v1040
    %v1042 = vmul.f32 %v1025, %v739
    %v1043 = vmul.f32 %v1027, %v740
    %v1044 = vmul.f32 %v1013, %v1028
    %v1045 = vmul.f32 %v1015, %v1029
    %v1046 = vadd.f32 %v1042, %v1044
    %v1047 = vadd.f32 %v1043, %v1045
    %v1048 = vtanh.pop %v1046
    %v1049 = vtanh.pop %v1047
    %v1050 = vmul.f32 %v1039, %v1048
    %v1051 = vmul.f32 %v1041, %v1049
    %v1052 = vpack.c.bf16 %v1051, %v1050
    %1053 = vst [vmem:[#allocation3] sm:$0xff] %v1052
    %s1054 = scalar_lea.vmem [#allocation2], 64
    %v1055 = vld [vmem:[%s1054] sm:$0xff]
    %v1056 = vld [vmem:[%s1054 + $0x8] sm:$0xff]
    %v1057 = vld [vmem:[%s1054 + $0x10] sm:$0xff]
    %v1058 = vld [vmem:[%s1054 + $0x18] sm:$0xff]
    %v1059 = vld [vmem:[%s1054 + $0x20] sm:$0xff]
    %v1060 = vld [vmem:[%s1054 + $0x28] sm:$0xff]
    %v1061 = vld [vmem:[%s1054 + $0x30] sm:$0xff]
    %v1062 = vld [vmem:[%s1054 + $0x38] sm:$0xff]
    %1063 = vmatprep.subr.bf16.mxu0 %v847
    %1064 = vmatpush1.bf16.msra.mxu0 %v846
    %1065 = vmatprep.subr.bf16.mxu0 %v851
    %1066 = vmatpush1.bf16.msra.mxu0 %v850
    %1067 = vmatprep.subr.bf16.mxu0 %v855
    %1068 = vmatpush1.bf16.msra.mxu0 %v854
    %1069 = vmatprep.subr.bf16.mxu0 %v859
    %1070 = vmatpush1.bf16.msra.mxu0 %v858
    %1071 = vmatprep.subr.bf16.mxu0 %v863
    %1072 = vmatpush1.bf16.msra.mxu0 %v862
    %1073 = vmatprep.subr.bf16.mxu0 %v867
    %1074 = vmatpush1.bf16.msra.mxu0 %v866
    %1075 = vmatprep.subr.bf16.mxu0 %v871
    %1076 = vmatpush1.bf16.msra.mxu0 %v870
    %1077 = vmatprep.subr.bf16.mxu0 %v875
    %1078 = vmatpush1.bf16.msra.mxu0 %v874
    %1079 = vmatprep.subr.bf16.mxu0 0
    %1080 = vmatpush1.bf16.msra.mxu0 0
    %1081 = vmatprep.subr.bf16.mxu0 0
    %1082 = vmatpush1.bf16.msra.mxu0 0
    %1083 = vmatprep.subr.bf16.mxu0 0
    %1084 = vmatpush1.bf16.msra.mxu0 0
    %1085 = vmatprep.subr.bf16.mxu0 0
    %1086 = vmatpush1.bf16.msra.mxu0 0
    %1087 = vmatprep.subr.bf16.mxu0 0
    %1088 = vmatpush1.bf16.msra.mxu0 0
    %1089 = vmatprep.subr.bf16.mxu0 0
    %1090 = vmatpush1.bf16.msra.mxu0 0
    %1091 = vmatprep.subr.bf16.mxu0 0
    %1092 = vmatpush1.bf16.msra.mxu0 0
    %1093 = vmatprep.subr.bf16.mxu0 0
    %1094 = vmatpush1.bf16.msra.mxu0 0
    %1095 = vmatprep.mubr.bf16.mxu0 0
    %1096 = vmatmul.mubr.bf16.gmra.mrb[0].mxu0 %v1052
    %v1097 = vpop.f32.mrb[0].mxu0
    %v1098 = vadd.f32 0.0, %v1097
    %v1099 = vpop.f32.mrb[0].mxu0
    %v1100 = vadd.f32 0.0, %v1099
    %v1101 = vpop.f32.mrb[0].mxu0
    %v1102 = vadd.f32 0.0, %v1101
    %v1103 = vpop.f32.mrb[0].mxu0
    %v1104 = vadd.f32 0.0, %v1103
    %1105 = vdwg.mxu0
    %1106 = vmatprep.subr.bf16.mxu0 %v849
    %1107 = vmatpush1.bf16.msra.mxu0 %v848
    %1108 = vmatprep.subr.bf16.mxu0 %v853
    %1109 = vmatpush1.bf16.msra.mxu0 %v852
    %1110 = vmatprep.subr.bf16.mxu0 %v857
    %1111 = vmatpush1.bf16.msra.mxu0 %v856
    %1112 = vmatprep.subr.bf16.mxu0 %v861
    %1113 = vmatpush1.bf16.msra.mxu0 %v860
    %1114 = vmatprep.subr.bf16.mxu0 %v865
    %1115 = vmatpush1.bf16.msra.mxu0 %v864
    %1116 = vmatprep.subr.bf16.mxu0 %v869
    %1117 = vmatpush1.bf16.msra.mxu0 %v868
    %1118 = vmatprep.subr.bf16.mxu0 %v873
    %1119 = vmatpush1.bf16.msra.mxu0 %v872
    %1120 = vmatprep.subr.bf16.mxu0 %v877
    %1121 = vmatpush1.bf16.msra.mxu0 %v876
    %1122 = vmatprep.subr.bf16.mxu0 0
    %1123 = vmatpush1.bf16.msra.mxu0 0
    %1124 = vmatprep.subr.bf16.mxu0 0
    %1125 = vmatpush1.bf16.msra.mxu0 0
    %1126 = vmatprep.subr.bf16.mxu0 0
    %1127 = vmatpush1.bf16.msra.mxu0 0
    %1128 = vmatprep.subr.bf16.mxu0 0
    %1129 = vmatpush1.bf16.msra.mxu0 0
    %1130 = vmatprep.subr.bf16.mxu0 0
    %1131 = vmatpush1.bf16.msra.mxu0 0
    %1132 = vmatprep.subr.bf16.mxu0 0
    %1133 = vmatpush1.bf16.msra.mxu0 0
    %1134 = vmatprep.subr.bf16.mxu0 0
    %1135 = vmatpush1.bf16.msra.mxu0 0
    %1136 = vmatprep.subr.bf16.mxu0 0
    %1137 = vmatpush1.bf16.msra.mxu0 0
    %1138 = vmatprep.mubr.bf16.mxu0 0
    %1139 = vmatmul.mubr.bf16.gmra.mrb[0].mxu0 %v1052
    %v1140 = vpop.f32.mrb[0].mxu0
    %v1141 = vadd.f32 0.0, %v1140
    %v1142 = vpop.f32.mrb[0].mxu0
    %v1143 = vadd.f32 0.0, %v1142
    %v1144 = vpop.f32.mrb[0].mxu0
    %v1145 = vadd.f32 0.0, %v1144
    %v1146 = vpop.f32.mrb[0].mxu0
    %v1147 = vadd.f32 0.0, %v1146
    %1148 = vdwg.mxu0
    %v1149 = vadd.f32 %v1055, %v1098
    %v1150 = vadd.f32 %v1056, %v1100
    %v1151 = vadd.f32 %v1057, %v1141
    %v1152 = vadd.f32 %v1058, %v1143
    %v1153 = vadd.f32 %v1059, %v1102
    %v1154 = vadd.f32 %v1060, %v1104
    %v1155 = vadd.f32 %v1061, %v1145
    %v1156 = vadd.f32 %v1062, %v1147
    %v1157 = vxor.u32 %v1149, 2147483648
    %v1158 = vxor.u32 %v1153, 2147483648
    %v1159 = vmul.f32 %v1157, 1.442695
    %v1160 = vpow.pop %v1159
    %v1161 = vmul.f32 %v1158, 1.442695
    %v1162 = vpow.pop %v1161
    %v1163 = vadd.f32 %v1160, 1.0
    %v1164 = vadd.f32 %v1162, 1.0
    %v1165 = vrcp.pop %v1163
    %v1166 = vmul.f32 1.0, %v1165
    %v1167 = vrcp.pop %v1164
    %v1168 = vmul.f32 1.0, %v1167
    %v1169 = vxor.u32 %v1150, 2147483648
    %v1170 = vxor.u32 %v1154, 2147483648
    %v1171 = vmul.f32 %v1169, 1.442695
    %v1172 = vpow.pop %v1171
    %v1173 = vmul.f32 %v1170, 1.442695
    %v1174 = vpow.pop %v1173
    %v1175 = vadd.f32 %v1172, 1.0
    %v1176 = vadd.f32 %v1174, 1.0
    %v1177 = vrcp.pop %v1175
    %v1178 = vmul.f32 1.0, %v1177
    %v1179 = vrcp.pop %v1176
    %v1180 = vmul.f32 1.0, %v1179
    %v1181 = vtanh.pop %v1151
    %v1182 = vtanh.pop %v1155
    %v1183 = vxor.u32 %v1152, 2147483648
    %v1184 = vxor.u32 %v1156, 2147483648
    %v1185 = vmul.f32 %v1183, 1.442695
    %v1186 = vpow.pop %v1185
    %v1187 = vmul.f32 %v1184, 1.442695
    %v1188 = vpow.pop %v1187
    %v1189 = vadd.f32 %v1186, 1.0
    %v1190 = vadd.f32 %v1188, 1.0
    %v1191 = vrcp.pop %v1189
    %v1192 = vmul.f32 1.0, %v1191
    %v1193 = vrcp.pop %v1190
    %v1194 = vmul.f32 1.0, %v1193
    %v1195 = vmul.f32 %v1178, %v1046
    %v1196 = vmul.f32 %v1180, %v1047
    %v1197 = vmul.f32 %v1166, %v1181
    %v1198 = vmul.f32 %v1168, %v1182
    %v1199 = vadd.f32 %v1195, %v1197
    %v1200 = vadd.f32 %v1196, %v1198
    %v1201 = vtanh.pop %v1199
    %v1202 = vtanh.pop %v1200
    %v1203 = vmul.f32 %v1192, %v1201
    %v1204 = vmul.f32 %v1194, %v1202
    %v1205 = vpack.c.bf16 %v1204, %v1203
    %s1206 = scalar_lea.vmem [#allocation3], 8
    %1207 = vst [vmem:[%s1206] sm:$0xff] %v1205
    %s1208 = scalar_lea.vmem [#allocation2], 128
    %v1209 = vld [vmem:[%s1208] sm:$0xff]
    %v1210 = vld [vmem:[%s1208 + $0x8] sm:$0xff]
    %v1211 = vld [vmem:[%s1208 + $0x10] sm:$0xff]
    %v1212 = vld [vmem:[%s1208 + $0x18] sm:$0xff]
    %v1213 = vld [vmem:[%s1208 + $0x20] sm:$0xff]
    %v1214 = vld [vmem:[%s1208 + $0x28] sm:$0xff]
    %v1215 = vld [vmem:[%s1208 + $0x30] sm:$0xff]
    %v1216 = vld [vmem:[%s1208 + $0x38] sm:$0xff]
    %1217 = vmatprep.subr.bf16.mxu0 %v847
    %1218 = vmatpush1.bf16.msra.mxu0 %v846
    %1219 = vmatprep.subr.bf16.mxu0 %v851
    %1220 = vmatpush1.bf16.msra.mxu0 %v850
    %1221 = vmatprep.subr.bf16.mxu0 %v855
    %1222 = vmatpush1.bf16.msra.mxu0 %v854
    %1223 = vmatprep.subr.bf16.mxu0 %v859
    %1224 = vmatpush1.bf16.msra.mxu0 %v858
    %1225 = vmatprep.subr.bf16.mxu0 %v863
    %1226 = vmatpush1.bf16.msra.mxu0 %v862
    %1227 = vmatprep.subr.bf16.mxu0 %v867
    %1228 = vmatpush1.bf16.msra.mxu0 %v866
    %1229 = vmatprep.subr.bf16.mxu0 %v871
    %1230 = vmatpush1.bf16.msra.mxu0 %v870
    %1231 = vmatprep.subr.bf16.mxu0 %v875
    %1232 = vmatpush1.bf16.msra.mxu0 %v874
    %1233 = vmatprep.subr.bf16.mxu0 0
    %1234 = vmatpush1.bf16.msra.mxu0 0
    %1235 = vmatprep.subr.bf16.mxu0 0
    %1236 = vmatpush1.bf16.msra.mxu0 0
    %1237 = vmatprep.subr.bf16.mxu0 0
    %1238 = vmatpush1.bf16.msra.mxu0 0
    %1239 = vmatprep.subr.bf16.mxu0 0
    %1240 = vmatpush1.bf16.msra.mxu0 0
    %1241 = vmatprep.subr.bf16.mxu0 0
    %1242 = vmatpush1.bf16.msra.mxu0 0
    %1243 = vmatprep.subr.bf16.mxu0 0
    %1244 = vmatpush1.bf16.msra.mxu0 0
    %1245 = vmatprep.subr.bf16.mxu0 0
    %1246 = vmatpush1.bf16.msra.mxu0 0
    %1247 = vmatprep.subr.bf16.mxu0 0
    %1248 = vmatpush1.bf16.msra.mxu0 0
    %1249 = vmatprep.mubr.bf16.mxu0 0
    %1250 = vmatmul.mubr.bf16.gmra.mrb[0].mxu0 %v1205
    %v1251 = vpop.f32.mrb[0].mxu0
    %v1252 = vadd.f32 0.0, %v1251
    %v1253 = vpop.f32.mrb[0].mxu0
    %v1254 = vadd.f32 0.0, %v1253
    %v1255 = vpop.f32.mrb[0].mxu0
    %v1256 = vadd.f32 0.0, %v1255
    %v1257 = vpop.f32.mrb[0].mxu0
    %v1258 = vadd.f32 0.0, %v1257
    %1259 = vdwg.mxu0
    %1260 = vmatprep.subr.bf16.mxu0 %v849
    %1261 = vmatpush1.bf16.msra.mxu0 %v848
    %1262 = vmatprep.subr.bf16.mxu0 %v853
    %1263 = vmatpush1.bf16.msra.mxu0 %v852
    %1264 = vmatprep.subr.bf16.mxu0 %v857
    %1265 = vmatpush1.bf16.msra.mxu0 %v856
    %1266 = vmatprep.subr.bf16.mxu0 %v861
    %1267 = vmatpush1.bf16.msra.mxu0 %v860
    %1268 = vmatprep.subr.bf16.mxu0 %v865
    %1269 = vmatpush1.bf16.msra.mxu0 %v864
    %1270 = vmatprep.subr.bf16.mxu0 %v869
    %1271 = vmatpush1.bf16.msra.mxu0 %v868
    %1272 = vmatprep.subr.bf16.mxu0 %v873
    %1273 = vmatpush1.bf16.msra.mxu0 %v872
    %1274 = vmatprep.subr.bf16.mxu0 %v877
    %1275 = vmatpush1.bf16.msra.mxu0 %v876
    %1276 = vmatprep.subr.bf16.mxu0 0
    %1277 = vmatpush1.bf16.msra.mxu0 0
    %1278 = vmatprep.subr.bf16.mxu0 0
    %1279 = vmatpush1.bf16.msra.mxu0 0
    %1280 = vmatprep.subr.bf16.mxu0 0
    %1281 = vmatpush1.bf16.msra.mxu0 0
    %1282 = vmatprep.subr.bf16.mxu0 0
    %1283 = vmatpush1.bf16.msra.mxu0 0
    %1284 = vmatprep.subr.bf16.mxu0 0
    %1285 = vmatpush1.bf16.msra.mxu0 0
    %1286 = vmatprep.subr.bf16.mxu0 0
    %1287 = vmatpush1.bf16.msra.mxu0 0
    %1288 = vmatprep.subr.bf16.mxu0 0
    %1289 = vmatpush1.bf16.msra.mxu0 0
    %1290 = vmatprep.subr.bf16.mxu0 0
    %1291 = vmatpush1.bf16.msra.mxu0 0
    %1292 = vmatprep.mubr.bf16.mxu0 0
    %1293 = vmatmul.mubr.bf16.gmra.mrb[0].mxu0 %v1205
    %v1294 = vpop.f32.mrb[0].mxu0
    %v1295 = vadd.f32 0.0, %v1294
    %v1296 = vpop.f32.mrb[0].mxu0
    %v1297 = vadd.f32 0.0, %v1296
    %v1298 = vpop.f32.mrb[0].mxu0
    %v1299 = vadd.f32 0.0, %v1298
    %v1300 = vpop.f32.mrb[0].mxu0
    %v1301 = vadd.f32 0.0, %v1300
    %1302 = vdwg.mxu0
    %v1303 = vadd.f32 %v1209, %v1252
    %v1304 = vadd.f32 %v1210, %v1254
    %v1305 = vadd.f32 %v1211, %v1295
    %v1306 = vadd.f32 %v1212, %v1297
    %v1307 = vadd.f32 %v1213, %v1256
    %v1308 = vadd.f32 %v1214, %v1258
    %v1309 = vadd.f32 %v1215, %v1299
    %v1310 = vadd.f32 %v1216, %v1301
    %v1311 = vxor.u32 %v1303, 2147483648
    %v1312 = vxor.u32 %v1307, 2147483648
    %v1313 = vmul.f32 %v1311, 1.442695
    %v1314 = vpow.pop %v1313
    %v1315 = vmul.f32 %v1312, 1.442695
    %v1316 = vpow.pop %v1315
    %v1317 = vadd.f32 %v1314, 1.0
    %v1318 = vadd.f32 %v1316, 1.0
    %v1319 = vrcp.pop %v1317
    %v1320 = vmul.f32 1.0, %v1319
    %v1321 = vrcp.pop %v1318
    %v1322 = vmul.f32 1.0, %v1321
    %v1323 = vxor.u32 %v1304, 2147483648
    %v1324 = vxor.u32 %v1308, 2147483648
    %v1325 = vmul.f32 %v1323, 1.442695
    %v1326 = vpow.pop %v1325
    %v1327 = vmul.f32 %v1324, 1.442695
    %v1328 = vpow.pop %v1327
    %v1329 = vadd.f32 %v1326, 1.0
    %v1330 = vadd.f32 %v1328, 1.0
    %v1331 = vrcp.pop %v1329
    %v1332 = vmul.f32 1.0, %v1331
    %v1333 = vrcp.pop %v1330
    %v1334 = vmul.f32 1.0, %v1333
    %v1335 = vtanh.pop %v1305
    %v1336 = vtanh.pop %v1309
    %v1337 = vxor.u32 %v1306, 2147483648
    %v1338 = vxor.u32 %v1310, 2147483648
    %v1339 = vmul.f32 %v1337, 1.442695
    %v1340 = vpow.pop %v1339
    %v1341 = vmul.f32 %v1338, 1.442695
    %v1342 = vpow.pop %v1341
    %v1343 = vadd.f32 %v1340, 1.0
    %v1344 = vadd.f32 %v1342, 1.0
    %v1345 = vrcp.pop %v1343
    %v1346 = vmul.f32 1.0, %v1345
    %v1347 = vrcp.pop %v1344
    %v1348 = vmul.f32 1.0, %v1347
    %v1349 = vmul.f32 %v1332, %v1199
    %v1350 = vmul.f32 %v1334, %v1200
    %v1351 = vmul.f32 %v1320, %v1335
    %v1352 = vmul.f32 %v1322, %v1336
    %v1353 = vadd.f32 %v1349, %v1351
    %v1354 = vadd.f32 %v1350, %v1352
    %v1355 = vtanh.pop %v1353
    %v1356 = vtanh.pop %v1354
    %v1357 = vmul.f32 %v1346, %v1355
    %v1358 = vmul.f32 %v1348, %v1356
    %v1359 = vpack.c.bf16 %v1358, %v1357
    %s1360 = scalar_lea.vmem [#allocation3], 16
    %1361 = vst [vmem:[%s1360] sm:$0xff] %v1359
    %s1362 = scalar_lea.vmem [#allocation2], 192
    %v1363 = vld [vmem:[%s1362] sm:$0xff]
    %v1364 = vld [vmem:[%s1362 + $0x8] sm:$0xff]
    %v1365 = vld [vmem:[%s1362 + $0x10] sm:$0xff]
    %v1366 = vld [vmem:[%s1362 + $0x18] sm:$0xff]
    %v1367 = vld [vmem:[%s1362 + $0x20] sm:$0xff]
    %v1368 = vld [vmem:[%s1362 + $0x28] sm:$0xff]
    %v1369 = vld [vmem:[%s1362 + $0x30] sm:$0xff]
    %v1370 = vld [vmem:[%s1362 + $0x38] sm:$0xff]
    %1371 = vmatprep.subr.bf16.mxu0 %v847
    %1372 = vmatpush1.bf16.msra.mxu0 %v846
    %1373 = vmatprep.subr.bf16.mxu0 %v851
    %1374 = vmatpush1.bf16.msra.mxu0 %v850
    %1375 = vmatprep.subr.bf16.mxu0 %v855
    %1376 = vmatpush1.bf16.msra.mxu0 %v854
    %1377 = vmatprep.subr.bf16.mxu0 %v859
    %1378 = vmatpush1.bf16.msra.mxu0 %v858
    %1379 = vmatprep.subr.bf16.mxu0 %v863
    %1380 = vmatpush1.bf16.msra.mxu0 %v862
    %1381 = vmatprep.subr.bf16.mxu0 %v867
    %1382 = vmatpush1.bf16.msra.mxu0 %v866
    %1383 = vmatprep.subr.bf16.mxu0 %v871
    %1384 = vmatpush1.bf16.msra.mxu0 %v870
    %1385 = vmatprep.subr.bf16.mxu0 %v875
    %1386 = vmatpush1.bf16.msra.mxu0 %v874
    %1387 = vmatprep.subr.bf16.mxu0 0
    %1388 = vmatpush1.bf16.msra.mxu0 0
    %1389 = vmatprep.subr.bf16.mxu0 0
    %1390 = vmatpush1.bf16.msra.mxu0 0
    %1391 = vmatprep.subr.bf16.mxu0 0
    %1392 = vmatpush1.bf16.msra.mxu0 0
    %1393 = vmatprep.subr.bf16.mxu0 0
    %1394 = vmatpush1.bf16.msra.mxu0 0
    %1395 = vmatprep.subr.bf16.mxu0 0
    %1396 = vmatpush1.bf16.msra.mxu0 0
    %1397 = vmatprep.subr.bf16.mxu0 0
    %1398 = vmatpush1.bf16.msra.mxu0 0
    %1399 = vmatprep.subr.bf16.mxu0 0
    %1400 = vmatpush1.bf16.msra.mxu0 0
    %1401 = vmatprep.subr.bf16.mxu0 0
    %1402 = vmatpush1.bf16.msra.mxu0 0
    %1403 = vmatprep.mubr.bf16.mxu0 0
    %1404 = vmatmul.mubr.bf16.gmra.mrb[0].mxu0 %v1359
    %v1405 = vpop.f32.mrb[0].mxu0
    %v1406 = vadd.f32 0.0, %v1405
    %v1407 = vpop.f32.mrb[0].mxu0
    %v1408 = vadd.f32 0.0, %v1407
    %v1409 = vpop.f32.mrb[0].mxu0
    %v1410 = vadd.f32 0.0, %v1409
    %v1411 = vpop.f32.mrb[0].mxu0
    %v1412 = vadd.f32 0.0, %v1411
    %1413 = vdwg.mxu0
    %1414 = vmatprep.subr.bf16.mxu0 %v849
    %1415 = vmatpush1.bf16.msra.mxu0 %v848
    %1416 = vmatprep.subr.bf16.mxu0 %v853
    %1417 = vmatpush1.bf16.msra.mxu0 %v852
    %1418 = vmatprep.subr.bf16.mxu0 %v857
    %1419 = vmatpush1.bf16.msra.mxu0 %v856
    %1420 = vmatprep.subr.bf16.mxu0 %v861
    %1421 = vmatpush1.bf16.msra.mxu0 %v860
    %1422 = vmatprep.subr.bf16.mxu0 %v865
    %1423 = vmatpush1.bf16.msra.mxu0 %v864
    %1424 = vmatprep.subr.bf16.mxu0 %v869
    %1425 = vmatpush1.bf16.msra.mxu0 %v868
    %1426 = vmatprep.subr.bf16.mxu0 %v873
    %1427 = vmatpush1.bf16.msra.mxu0 %v872
    %1428 = vmatprep.subr.bf16.mxu0 %v877
    %1429 = vmatpush1.bf16.msra.mxu0 %v876
    %1430 = vmatprep.subr.bf16.mxu0 0
    %1431 = vmatpush1.bf16.msra.mxu0 0
    %1432 = vmatprep.subr.bf16.mxu0 0
    %1433 = vmatpush1.bf16.msra.mxu0 0
    %1434 = vmatprep.subr.bf16.mxu0 0
    %1435 = vmatpush1.bf16.msra.mxu0 0
    %1436 = vmatprep.subr.bf16.mxu0 0
    %1437 = vmatpush1.bf16.msra.mxu0 0
    %1438 = vmatprep.subr.bf16.mxu0 0
    %1439 = vmatpush1.bf16.msra.mxu0 0
    %1440 = vmatprep.subr.bf16.mxu0 0
    %1441 = vmatpush1.bf16.msra.mxu0 0
    %1442 = vmatprep.subr.bf16.mxu0 0
    %1443 = vmatpush1.bf16.msra.mxu0 0
    %1444 = vmatprep.subr.bf16.mxu0 0
    %1445 = vmatpush1.bf16.msra.mxu0 0
    %1446 = vmatprep.mubr.bf16.mxu0 0
    %1447 = vmatmul.mubr.bf16.gmra.mrb[0].mxu0 %v1359
    %v1448 = vpop.f32.mrb[0].mxu0
    %v1449 = vadd.f32 0.0, %v1448
    %v1450 = vpop.f32.mrb[0].mxu0
    %v1451 = vadd.f32 0.0, %v1450
    %v1452 = vpop.f32.mrb[0].mxu0
    %v1453 = vadd.f32 0.0, %v1452
    %v1454 = vpop.f32.mrb[0].mxu0
    %v1455 = vadd.f32 0.0, %v1454
    %1456 = vdwg.mxu0
    %v1457 = vadd.f32 %v1363, %v1406
    %v1458 = vadd.f32 %v1364, %v1408
    %v1459 = vadd.f32 %v1365, %v1449
    %v1460 = vadd.f32 %v1366, %v1451
    %v1461 = vadd.f32 %v1367, %v1410
    %v1462 = vadd.f32 %v1368, %v1412
    %v1463 = vadd.f32 %v1369, %v1453
    %v1464 = vadd.f32 %v1370, %v1455
    %v1465 = vxor.u32 %v1457, 2147483648
    %v1466 = vxor.u32 %v1461, 2147483648
    %v1467 = vmul.f32 %v1465, 1.442695
    %v1468 = vpow.pop %v1467
    %v1469 = vmul.f32 %v1466, 1.442695
    %v1470 = vpow.pop %v1469
    %v1471 = vadd.f32 %v1468, 1.0
    %v1472 = vadd.f32 %v1470, 1.0
    %v1473 = vrcp.pop %v1471
    %v1474 = vmul.f32 1.0, %v1473
    %v1475 = vrcp.pop %v1472
    %v1476 = vmul.f32 1.0, %v1475
    %v1477 = vxor.u32 %v1458, 2147483648
    %v1478 = vxor.u32 %v1462, 2147483648
    %v1479 = vmul.f32 %v1477, 1.442695
    %v1480 = vpow.pop %v1479
    %v1481 = vmul.f32 %v1478, 1.442695
    %v1482 = vpow.pop %v1481
    %v1483 = vadd.f32 %v1480, 1.0
    %v1484 = vadd.f32 %v1482, 1.0
    %v1485 = vrcp.pop %v1483
    %v1486 = vmul.f32 1.0, %v1485
    %v1487 = vrcp.pop %v1484
    %v1488 = vmul.f32 1.0, %v1487
    %v1489 = vtanh.pop %v1459
    %v1490 = vtanh.pop %v1463
    %v1491 = vxor.u32 %v1460, 2147483648
    %v1492 = vxor.u32 %v1464, 2147483648
    %v1493 = vmul.f32 %v1491, 1.442695
    %v1494 = vpow.pop %v1493
    %v1495 = vmul.f32 %v1492, 1.442695
    %v1496 = vpow.pop %v1495
    %v1497 = vadd.f32 %v1494, 1.0
    %v1498 = vadd.f32 %v1496, 1.0
    %v1499 = vrcp.pop %v1497
    %v1500 = vmul.f32 1.0, %v1499
    %v1501 = vrcp.pop %v1498
    %v1502 = vmul.f32 1.0, %v1501
    %v1503 = vmul.f32 %v1486, %v1353
    %v1504 = vmul.f32 %v1488, %v1354
    %v1505 = vmul.f32 %v1474, %v1489
    %v1506 = vmul.f32 %v1476, %v1490
    %v1507 = vadd.f32 %v1503, %v1505
    %v1508 = vadd.f32 %v1504, %v1506
    %v1509 = vtanh.pop %v1507
    %v1510 = vtanh.pop %v1508
    %v1511 = vmul.f32 %v1500, %v1509
    %v1512 = vmul.f32 %v1502, %v1510
    %v1513 = vpack.c.bf16 %v1512, %v1511
    %s1514 = scalar_lea.vmem [#allocation3], 24
    %1515 = vst [vmem:[%s1514] sm:$0xff] %v1513
    %s1516 = scalar_lea.vmem [#allocation2], 256
    %v1517 = vld [vmem:[%s1516] sm:$0xff]
    %v1518 = vld [vmem:[%s1516 + $0x8] sm:$0xff]
    %v1519 = vld [vmem:[%s1516 + $0x10] sm:$0xff]
    %v1520 = vld [vmem:[%s1516 + $0x18] sm:$0xff]
    %v1521 = vld [vmem:[%s1516 + $0x20] sm:$0xff]
    %v1522 = vld [vmem:[%s1516 + $0x28] sm:$0xff]
    %v1523 = vld [vmem:[%s1516 + $0x30] sm:$0xff]
    %v1524 = vld [vmem:[%s1516 + $0x38] sm:$0xff]
    %1525 = vmatprep.subr.bf16.mxu0 %v847
    %1526 = vmatpush1.bf16.msra.mxu0 %v846
    %1527 = vmatprep.subr.bf16.mxu0 %v851
    %1528 = vmatpush1.bf16.msra.mxu0 %v850
    %1529 = vmatprep.subr.bf16.mxu0 %v855
    %1530 = vmatpush1.bf16.msra.mxu0 %v854
    %1531 = vmatprep.subr.bf16.mxu0 %v859
    %1532 = vmatpush1.bf16.msra.mxu0 %v858
    %1533 = vmatprep.subr.bf16.mxu0 %v863
    %1534 = vmatpush1.bf16.msra.mxu0 %v862
    %1535 = vmatprep.subr.bf16.mxu0 %v867
    %1536 = vmatpush1.bf16.msra.mxu0 %v866
    %1537 = vmatprep.subr.bf16.mxu0 %v871
    %1538 = vmatpush1.bf16.msra.mxu0 %v870
    %1539 = vmatprep.subr.bf16.mxu0 %v875
    %1540 = vmatpush1.bf16.msra.mxu0 %v874
    %1541 = vmatprep.subr.bf16.mxu0 0
    %1542 = vmatpush1.bf16.msra.mxu0 0
    %1543 = vmatprep.subr.bf16.mxu0 0
    %1544 = vmatpush1.bf16.msra.mxu0 0
    %1545 = vmatprep.subr.bf16.mxu0 0
    %1546 = vmatpush1.bf16.msra.mxu0 0
    %1547 = vmatprep.subr.bf16.mxu0 0
    %1548 = vmatpush1.bf16.msra.mxu0 0
    %1549 = vmatprep.subr.bf16.mxu0 0
    %1550 = vmatpush1.bf16.msra.mxu0 0
    %1551 = vmatprep.subr.bf16.mxu0 0
    %1552 = vmatpush1.bf16.msra.mxu0 0
    %1553 = vmatprep.subr.bf16.mxu0 0
    %1554 = vmatpush1.bf16.msra.mxu0 0
    %1555 = vmatprep.subr.bf16.mxu0 0
    %1556 = vmatpush1.bf16.msra.mxu0 0
    %1557 = vmatprep.mubr.bf16.mxu0 0
    %1558 = vmatmul.mubr.bf16.gmra.mrb[0].mxu0 %v1513
    %v1559 = vpop.f32.mrb[0].mxu0
    %v1560 = vadd.f32 0.0, %v1559
    %v1561 = vpop.f32.mrb[0].mxu0
    %v1562 = vadd.f32 0.0, %v1561
    %v1563 = vpop.f32.mrb[0].mxu0
    %v1564 = vadd.f32 0.0, %v1563
    %v1565 = vpop.f32.mrb[0].mxu0
    %v1566 = vadd.f32 0.0, %v1565
    %1567 = vdwg.mxu0
    %1568 = vmatprep.subr.bf16.mxu0 %v849
    %1569 = vmatpush1.bf16.msra.mxu0 %v848
    %1570 = vmatprep.subr.bf16.mxu0 %v853
    %1571 = vmatpush1.bf16.msra.mxu0 %v852
    %1572 = vmatprep.subr.bf16.mxu0 %v857
    %1573 = vmatpush1.bf16.msra.mxu0 %v856
    %1574 = vmatprep.subr.bf16.mxu0 %v861
    %1575 = vmatpush1.bf16.msra.mxu0 %v860
    %1576 = vmatprep.subr.bf16.mxu0 %v865
    %1577 = vmatpush1.bf16.msra.mxu0 %v864
    %1578 = vmatprep.subr.bf16.mxu0 %v869
    %1579 = vmatpush1.bf16.msra.mxu0 %v868
    %1580 = vmatprep.subr.bf16.mxu0 %v873
    %1581 = vmatpush1.bf16.msra.mxu0 %v872
    %1582 = vmatprep.subr.bf16.mxu0 %v877
    %1583 = vmatpush1.bf16.msra.mxu0 %v876
    %1584 = vmatprep.subr.bf16.mxu0 0
    %1585 = vmatpush1.bf16.msra.mxu0 0
    %1586 = vmatprep.subr.bf16.mxu0 0
    %1587 = vmatpush1.bf16.msra.mxu0 0
    %1588 = vmatprep.subr.bf16.mxu0 0
    %1589 = vmatpush1.bf16.msra.mxu0 0
    %1590 = vmatprep.subr.bf16.mxu0 0
    %1591 = vmatpush1.bf16.msra.mxu0 0
    %1592 = vmatprep.subr.bf16.mxu0 0
    %1593 = vmatpush1.bf16.msra.mxu0 0
    %1594 = vmatprep.subr.bf16.mxu0 0
    %1595 = vmatpush1.bf16.msra.mxu0 0
    %1596 = vmatprep.subr.bf16.mxu0 0
    %1597 = vmatpush1.bf16.msra.mxu0 0
    %1598 = vmatprep.subr.bf16.mxu0 0
    %1599 = vmatpush1.bf16.msra.mxu0 0
    %1600 = vmatprep.mubr.bf16.mxu0 0
    %1601 = vmatmul.mubr.bf16.gmra.mrb[0].mxu0 %v1513
    %v1602 = vpop.f32.mrb[0].mxu0
    %v1603 = vadd.f32 0.0, %v1602
    %v1604 = vpop.f32.mrb[0].mxu0
    %v1605 = vadd.f32 0.0, %v1604
    %v1606 = vpop.f32.mrb[0].mxu0
    %v1607 = vadd.f32 0.0, %v1606
    %v1608 = vpop.f32.mrb[0].mxu0
    %v1609 = vadd.f32 0.0, %v1608
    %1610 = vdwg.mxu0
    %v1611 = vadd.f32 %v1517, %v1560
    %v1612 = vadd.f32 %v1518, %v1562
    %v1613 = vadd.f32 %v1519, %v1603
    %v1614 = vadd.f32 %v1520, %v1605
    %v1615 = vadd.f32 %v1521, %v1564
    %v1616 = vadd.f32 %v1522, %v1566
    %v1617 = vadd.f32 %v1523, %v1607
    %v1618 = vadd.f32 %v1524, %v1609
    %v1619 = vxor.u32 %v1611, 2147483648
    %v1620 = vxor.u32 %v1615, 2147483648
    %v1621 = vmul.f32 %v1619, 1.442695
    %v1622 = vpow.pop %v1621
    %v1623 = vmul.f32 %v1620, 1.442695
    %v1624 = vpow.pop %v1623
    %v1625 = vadd.f32 %v1622, 1.0
    %v1626 = vadd.f32 %v1624, 1.0
    %v1627 = vrcp.pop %v1625
    %v1628 = vmul.f32 1.0, %v1627
    %v1629 = vrcp.pop %v1626
    %v1630 = vmul.f32 1.0, %v1629
    %v1631 = vxor.u32 %v1612, 2147483648
    %v1632 = vxor.u32 %v1616, 2147483648
    %v1633 = vmul.f32 %v1631, 1.442695
    %v1634 = vpow.pop %v1633
    %v1635 = vmul.f32 %v1632, 1.442695
    %v1636 = vpow.pop %v1635
    %v1637 = vadd.f32 %v1634, 1.0
    %v1638 = vadd.f32 %v1636, 1.0
    %v1639 = vrcp.pop %v1637
    %v1640 = vmul.f32 1.0, %v1639
    %v1641 = vrcp.pop %v1638
    %v1642 = vmul.f32 1.0, %v1641
    %v1643 = vtanh.pop %v1613
    %v1644 = vtanh.pop %v1617
    %v1645 = vxor.u32 %v1614, 2147483648
    %v1646 = vxor.u32 %v1618, 2147483648
    %v1647 = vmul.f32 %v1645, 1.442695
    %v1648 = vpow.pop %v1647
    %v1649 = vmul.f32 %v1646, 1.442695
    %v1650 = vpow.pop %v1649
    %v1651 = vadd.f32 %v1648, 1.0
    %v1652 = vadd.f32 %v1650, 1.0
    %v1653 = vrcp.pop %v1651
    %v1654 = vmul.f32 1.0, %v1653
    %v1655 = vrcp.pop %v1652
    %v1656 = vmul.f32 1.0, %v1655
    %v1657 = vmul.f32 %v1640, %v1507
    %v1658 = vmul.f32 %v1642, %v1508
    %v1659 = vmul.f32 %v1628, %v1643
    %v1660 = vmul.f32 %v1630, %v1644
    %v1661 = vadd.f32 %v1657, %v1659
    %v1662 = vadd.f32 %v1658, %v1660
    %v1663 = vtanh.pop %v1661
    %v1664 = vtanh.pop %v1662
    %v1665 = vmul.f32 %v1654, %v1663
    %v1666 = vmul.f32 %v1656, %v1664
    %v1667 = vpack.c.bf16 %v1666, %v1665
    %s1668 = scalar_lea.vmem [#allocation3], 32
    %1669 = vst [vmem:[%s1668] sm:$0xff] %v1667
    %s1670 = scalar_lea.vmem [#allocation2], 320
    %v1671 = vld [vmem:[%s1670] sm:$0xff]
    %v1672 = vld [vmem:[%s1670 + $0x8] sm:$0xff]
    %v1673 = vld [vmem:[%s1670 + $0x10] sm:$0xff]
    %v1674 = vld [vmem:[%s1670 + $0x18] sm:$0xff]
    %v1675 = vld [vmem:[%s1670 + $0x20] sm:$0xff]
    %v1676 = vld [vmem:[%s1670 + $0x28] sm:$0xff]
    %v1677 = vld [vmem:[%s1670 + $0x30] sm:$0xff]
    %v1678 = vld [vmem:[%s1670 + $0x38] sm:$0xff]
    %1679 = vmatprep.subr.bf16.mxu0 %v847
    %1680 = vmatpush1.bf16.msra.mxu0 %v846
    %1681 = vmatprep.subr.bf16.mxu0 %v851
    %1682 = vmatpush1.bf16.msra.mxu0 %v850
    %1683 = vmatprep.subr.bf16.mxu0 %v855
    %1684 = vmatpush1.bf16.msra.mxu0 %v854
    %1685 = vmatprep.subr.bf16.mxu0 %v859
    %1686 = vmatpush1.bf16.msra.mxu0 %v858
    %1687 = vmatprep.subr.bf16.mxu0 %v863
    %1688 = vmatpush1.bf16.msra.mxu0 %v862
    %1689 = vmatprep.subr.bf16.mxu0 %v867
    %1690 = vmatpush1.bf16.msra.mxu0 %v866
    %1691 = vmatprep.subr.bf16.mxu0 %v871
    %1692 = vmatpush1.bf16.msra.mxu0 %v870
    %1693 = vmatprep.subr.bf16.mxu0 %v875
    %1694 = vmatpush1.bf16.msra.mxu0 %v874
    %1695 = vmatprep.subr.bf16.mxu0 0
    %1696 = vmatpush1.bf16.msra.mxu0 0
    %1697 = vmatprep.subr.bf16.mxu0 0
    %1698 = vmatpush1.bf16.msra.mxu0 0
    %1699 = vmatprep.subr.bf16.mxu0 0
    %1700 = vmatpush1.bf16.msra.mxu0 0
    %1701 = vmatprep.subr.bf16.mxu0 0
    %1702 = vmatpush1.bf16.msra.mxu0 0
    %1703 = vmatprep.subr.bf16.mxu0 0
    %1704 = vmatpush1.bf16.msra.mxu0 0
    %1705 = vmatprep.subr.bf16.mxu0 0
    %1706 = vmatpush1.bf16.msra.mxu0 0
    %1707 = vmatprep.subr.bf16.mxu0 0
    %1708 = vmatpush1.bf16.msra.mxu0 0
    %1709 = vmatprep.subr.bf16.mxu0 0
    %1710 = vmatpush1.bf16.msra.mxu0 0
    %1711 = vmatprep.mubr.bf16.mxu0 0
    %1712 = vmatmul.mubr.bf16.gmra.mrb[0].mxu0 %v1667
    %v1713 = vpop.f32.mrb[0].mxu0
    %v1714 = vadd.f32 0.0, %v1713
    %v1715 = vpop.f32.mrb[0].mxu0
    %v1716 = vadd.f32 0.0, %v1715
    %v1717 = vpop.f32.mrb[0].mxu0
    %v1718 = vadd.f32 0.0, %v1717
    %v1719 = vpop.f32.mrb[0].mxu0
    %v1720 = vadd.f32 0.0, %v1719
    %1721 = vdwg.mxu0
    %1722 = vmatprep.subr.bf16.mxu0 %v849
    %1723 = vmatpush1.bf16.msra.mxu0 %v848
    %1724 = vmatprep.subr.bf16.mxu0 %v853
    %1725 = vmatpush1.bf16.msra.mxu0 %v852
    %1726 = vmatprep.subr.bf16.mxu0 %v857
    %1727 = vmatpush1.bf16.msra.mxu0 %v856
    %1728 = vmatprep.subr.bf16.mxu0 %v861
    %1729 = vmatpush1.bf16.msra.mxu0 %v860
    %1730 = vmatprep.subr.bf16.mxu0 %v865
    %1731 = vmatpush1.bf16.msra.mxu0 %v864
    %1732 = vmatprep.subr.bf16.mxu0 %v869
    %1733 = vmatpush1.bf16.msra.mxu0 %v868
    %1734 = vmatprep.subr.bf16.mxu0 %v873
    %1735 = vmatpush1.bf16.msra.mxu0 %v872
    %1736 = vmatprep.subr.bf16.mxu0 %v877
    %1737 = vmatpush1.bf16.msra.mxu0 %v876
    %1738 = vmatprep.subr.bf16.mxu0 0
    %1739 = vmatpush1.bf16.msra.mxu0 0
    %1740 = vmatprep.subr.bf16.mxu0 0
    %1741 = vmatpush1.bf16.msra.mxu0 0
    %1742 = vmatprep.subr.bf16.mxu0 0
    %1743 = vmatpush1.bf16.msra.mxu0 0
    %1744 = vmatprep.subr.bf16.mxu0 0
    %1745 = vmatpush1.bf16.msra.mxu0 0
    %1746 = vmatprep.subr.bf16.mxu0 0
    %1747 = vmatpush1.bf16.msra.mxu0 0
    %1748 = vmatprep.subr.bf16.mxu0 0
    %1749 = vmatpush1.bf16.msra.mxu0 0
    %1750 = vmatprep.subr.bf16.mxu0 0
    %1751 = vmatpush1.bf16.msra.mxu0 0
    %1752 = vmatprep.subr.bf16.mxu0 0
    %1753 = vmatpush1.bf16.msra.mxu0 0
    %1754 = vmatprep.mubr.bf16.mxu0 0
    %1755 = vmatmul.mubr.bf16.gmra.mrb[0].mxu0 %v1667
    %v1756 = vpop.f32.mrb[0].mxu0
    %v1757 = vadd.f32 0.0, %v1756
    %v1758 = vpop.f32.mrb[0].mxu0
    %v1759 = vadd.f32 0.0, %v1758
    %v1760 = vpop.f32.mrb[0].mxu0
    %v1761 = vadd.f32 0.0, %v1760
    %v1762 = vpop.f32.mrb[0].mxu0
    %v1763 = vadd.f32 0.0, %v1762
    %1764 = vdwg.mxu0
    %v1765 = vadd.f32 %v1671, %v1714
    %v1766 = vadd.f32 %v1672, %v1716
    %v1767 = vadd.f32 %v1673, %v1757
    %v1768 = vadd.f32 %v1674, %v1759
    %v1769 = vadd.f32 %v1675, %v1718
    %v1770 = vadd.f32 %v1676, %v1720
    %v1771 = vadd.f32 %v1677, %v1761
    %v1772 = vadd.f32 %v1678, %v1763
    %v1773 = vxor.u32 %v1765, 2147483648
    %v1774 = vxor.u32 %v1769, 2147483648
    %v1775 = vmul.f32 %v1773, 1.442695
    %v1776 = vpow.pop %v1775
    %v1777 = vmul.f32 %v1774, 1.442695
    %v1778 = vpow.pop %v1777
    %v1779 = vadd.f32 %v1776, 1.0
    %v1780 = vadd.f32 %v1778, 1.0
    %v1781 = vrcp.pop %v1779
    %v1782 = vmul.f32 1.0, %v1781
    %v1783 = vrcp.pop %v1780
    %v1784 = vmul.f32 1.0, %v1783
    %v1785 = vxor.u32 %v1766, 2147483648
    %v1786 = vxor.u32 %v1770, 2147483648
    %v1787 = vmul.f32 %v1785, 1.442695
    %v1788 = vpow.pop %v1787
    %v1789 = vmul.f32 %v1786, 1.442695
    %v1790 = vpow.pop %v1789
    %v1791 = vadd.f32 %v1788, 1.0
    %v1792 = vadd.f32 %v1790, 1.0
    %v1793 = vrcp.pop %v1791
    %v1794 = vmul.f32 1.0, %v1793
    %v1795 = vrcp.pop %v1792
    %v1796 = vmul.f32 1.0, %v1795
    %v1797 = vtanh.pop %v1767
    %v1798 = vtanh.pop %v1771
    %v1799 = vxor.u32 %v1768, 2147483648
    %v1800 = vxor.u32 %v1772, 2147483648
    %v1801 = vmul.f32 %v1799, 1.442695
    %v1802 = vpow.pop %v1801
    %v1803 = vmul.f32 %v1800, 1.442695
    %v1804 = vpow.pop %v1803
    %v1805 = vadd.f32 %v1802, 1.0
    %v1806 = vadd.f32 %v1804, 1.0
    %v1807 = vrcp.pop %v1805
    %v1808 = vmul.f32 1.0, %v1807
    %v1809 = vrcp.pop %v1806
    %v1810 = vmul.f32 1.0, %v1809
    %v1811 = vmul.f32 %v1794, %v1661
    %v1812 = vmul.f32 %v1796, %v1662
    %v1813 = vmul.f32 %v1782, %v1797
    %v1814 = vmul.f32 %v1784, %v1798
    %v1815 = vadd.f32 %v1811, %v1813
    %v1816 = vadd.f32 %v1812, %v1814
    %v1817 = vtanh.pop %v1815
    %v1818 = vtanh.pop %v1816
    %v1819 = vmul.f32 %v1808, %v1817
    %v1820 = vmul.f32 %v1810, %v1818
    %v1821 = vpack.c.bf16 %v1820, %v1819
    %s1822 = scalar_lea.vmem [#allocation3], 40
    %1823 = vst [vmem:[%s1822] sm:$0xff] %v1821
    %s1824 = scalar_lea.vmem [#allocation2], 384
    %v1825 = vld [vmem:[%s1824] sm:$0xff]
    %v1826 = vld [vmem:[%s1824 + $0x8] sm:$0xff]
    %v1827 = vld [vmem:[%s1824 + $0x10] sm:$0xff]
    %v1828 = vld [vmem:[%s1824 + $0x18] sm:$0xff]
    %v1829 = vld [vmem:[%s1824 + $0x20] sm:$0xff]
    %v1830 = vld [vmem:[%s1824 + $0x28] sm:$0xff]
    %v1831 = vld [vmem:[%s1824 + $0x30] sm:$0xff]
    %v1832 = vld [vmem:[%s1824 + $0x38] sm:$0xff]
    %1833 = vmatprep.subr.bf16.mxu0 %v847
    %1834 = vmatpush1.bf16.msra.mxu0 %v846
    %1835 = vmatprep.subr.bf16.mxu0 %v851
    %1836 = vmatpush1.bf16.msra.mxu0 %v850
    %1837 = vmatprep.subr.bf16.mxu0 %v855
    %1838 = vmatpush1.bf16.msra.mxu0 %v854
    %1839 = vmatprep.subr.bf16.mxu0 %v859
    %1840 = vmatpush1.bf16.msra.mxu0 %v858
    %1841 = vmatprep.subr.bf16.mxu0 %v863
    %1842 = vmatpush1.bf16.msra.mxu0 %v862
    %1843 = vmatprep.subr.bf16.mxu0 %v867
    %1844 = vmatpush1.bf16.msra.mxu0 %v866
    %1845 = vmatprep.subr.bf16.mxu0 %v871
    %1846 = vmatpush1.bf16.msra.mxu0 %v870
    %1847 = vmatprep.subr.bf16.mxu0 %v875
    %1848 = vmatpush1.bf16.msra.mxu0 %v874
    %1849 = vmatprep.subr.bf16.mxu0 0
    %1850 = vmatpush1.bf16.msra.mxu0 0
    %1851 = vmatprep.subr.bf16.mxu0 0
    %1852 = vmatpush1.bf16.msra.mxu0 0
    %1853 = vmatprep.subr.bf16.mxu0 0
    %1854 = vmatpush1.bf16.msra.mxu0 0
    %1855 = vmatprep.subr.bf16.mxu0 0
    %1856 = vmatpush1.bf16.msra.mxu0 0
    %1857 = vmatprep.subr.bf16.mxu0 0
    %1858 = vmatpush1.bf16.msra.mxu0 0
    %1859 = vmatprep.subr.bf16.mxu0 0
    %1860 = vmatpush1.bf16.msra.mxu0 0
    %1861 = vmatprep.subr.bf16.mxu0 0
    %1862 = vmatpush1.bf16.msra.mxu0 0
    %1863 = vmatprep.subr.bf16.mxu0 0
    %1864 = vmatpush1.bf16.msra.mxu0 0
    %1865 = vmatprep.mubr.bf16.mxu0 0
    %1866 = vmatmul.mubr.bf16.gmra.mrb[0].mxu0 %v1821
    %v1867 = vpop.f32.mrb[0].mxu0
    %v1868 = vadd.f32 0.0, %v1867
    %v1869 = vpop.f32.mrb[0].mxu0
    %v1870 = vadd.f32 0.0, %v1869
    %v1871 = vpop.f32.mrb[0].mxu0
    %v1872 = vadd.f32 0.0, %v1871
    %v1873 = vpop.f32.mrb[0].mxu0
    %v1874 = vadd.f32 0.0, %v1873
    %1875 = vdwg.mxu0
    %1876 = vmatprep.subr.bf16.mxu0 %v849
    %1877 = vmatpush1.bf16.msra.mxu0 %v848
    %1878 = vmatprep.subr.bf16.mxu0 %v853
    %1879 = vmatpush1.bf16.msra.mxu0 %v852
    %1880 = vmatprep.subr.bf16.mxu0 %v857
    %1881 = vmatpush1.bf16.msra.mxu0 %v856
    %1882 = vmatprep.subr.bf16.mxu0 %v861
    %1883 = vmatpush1.bf16.msra.mxu0 %v860
    %1884 = vmatprep.subr.bf16.mxu0 %v865
    %1885 = vmatpush1.bf16.msra.mxu0 %v864
    %1886 = vmatprep.subr.bf16.mxu0 %v869
    %1887 = vmatpush1.bf16.msra.mxu0 %v868
    %1888 = vmatprep.subr.bf16.mxu0 %v873
    %1889 = vmatpush1.bf16.msra.mxu0 %v872
    %1890 = vmatprep.subr.bf16.mxu0 %v877
    %1891 = vmatpush1.bf16.msra.mxu0 %v876
    %1892 = vmatprep.subr.bf16.mxu0 0
    %1893 = vmatpush1.bf16.msra.mxu0 0
    %1894 = vmatprep.subr.bf16.mxu0 0
    %1895 = vmatpush1.bf16.msra.mxu0 0
    %1896 = vmatprep.subr.bf16.mxu0 0
    %1897 = vmatpush1.bf16.msra.mxu0 0
    %1898 = vmatprep.subr.bf16.mxu0 0
    %1899 = vmatpush1.bf16.msra.mxu0 0
    %1900 = vmatprep.subr.bf16.mxu0 0
    %1901 = vmatpush1.bf16.msra.mxu0 0
    %1902 = vmatprep.subr.bf16.mxu0 0
    %1903 = vmatpush1.bf16.msra.mxu0 0
    %1904 = vmatprep.subr.bf16.mxu0 0
    %1905 = vmatpush1.bf16.msra.mxu0 0
    %1906 = vmatprep.subr.bf16.mxu0 0
    %1907 = vmatpush1.bf16.msra.mxu0 0
    %1908 = vmatprep.mubr.bf16.mxu0 0
    %1909 = vmatmul.mubr.bf16.gmra.mrb[0].mxu0 %v1821
    %v1910 = vpop.f32.mrb[0].mxu0
    %v1911 = vadd.f32 0.0, %v1910
    %v1912 = vpop.f32.mrb[0].mxu0
    %v1913 = vadd.f32 0.0, %v1912
    %v1914 = vpop.f32.mrb[0].mxu0
    %v1915 = vadd.f32 0.0, %v1914
    %v1916 = vpop.f32.mrb[0].mxu0
    %v1917 = vadd.f32 0.0, %v1916
    %1918 = vdwg.mxu0
    %v1919 = vadd.f32 %v1825, %v1868
    %v1920 = vadd.f32 %v1826, %v1870
    %v1921 = vadd.f32 %v1827, %v1911
    %v1922 = vadd.f32 %v1828, %v1913
    %v1923 = vadd.f32 %v1829, %v1872
    %v1924 = vadd.f32 %v1830, %v1874
    %v1925 = vadd.f32 %v1831, %v1915
    %v1926 = vadd.f32 %v1832, %v1917
    %v1927 = vxor.u32 %v1919, 2147483648
    %v1928 = vxor.u32 %v1923, 2147483648
    %v1929 = vmul.f32 %v1927, 1.442695
    %v1930 = vpow.pop %v1929
    %v1931 = vmul.f32 %v1928, 1.442695
    %v1932 = vpow.pop %v1931
    %v1933 = vadd.f32 %v1930, 1.0
    %v1934 = vadd.f32 %v1932, 1.0
    %v1935 = vrcp.pop %v1933
    %v1936 = vmul.f32 1.0, %v1935
    %v1937 = vrcp.pop %v1934
    %v1938 = vmul.f32 1.0, %v1937
    %v1939 = vxor.u32 %v1920, 2147483648
    %v1940 = vxor.u32 %v1924, 2147483648
    %v1941 = vmul.f32 %v1939, 1.442695
    %v1942 = vpow.pop %v1941
    %v1943 = vmul.f32 %v1940, 1.442695
    %v1944 = vpow.pop %v1943
    %v1945 = vadd.f32 %v1942, 1.0
    %v1946 = vadd.f32 %v1944, 1.0
    %v1947 = vrcp.pop %v1945
    %v1948 = vmul.f32 1.0, %v1947
    %v1949 = vrcp.pop %v1946
    %v1950 = vmul.f32 1.0, %v1949
    %v1951 = vtanh.pop %v1921
    %v1952 = vtanh.pop %v1925
    %v1953 = vxor.u32 %v1922, 2147483648
    %v1954 = vxor.u32 %v1926, 2147483648
    %v1955 = vmul.f32 %v1953, 1.442695
    %v1956 = vpow.pop %v1955
    %v1957 = vmul.f32 %v1954, 1.442695
    %v1958 = vpow.pop %v1957
    %v1959 = vadd.f32 %v1956, 1.0
    %v1960 = vadd.f32 %v1958, 1.0
    %v1961 = vrcp.pop %v1959
    %v1962 = vmul.f32 1.0, %v1961
    %v1963 = vrcp.pop %v1960
    %v1964 = vmul.f32 1.0, %v1963
    %v1965 = vmul.f32 %v1948, %v1815
    %v1966 = vmul.f32 %v1950, %v1816
    %v1967 = vmul.f32 %v1936, %v1951
    %v1968 = vmul.f32 %v1938, %v1952
    %v1969 = vadd.f32 %v1965, %v1967
    %v1970 = vadd.f32 %v1966, %v1968
    %v1971 = vtanh.pop %v1969
    %v1972 = vtanh.pop %v1970
    %v1973 = vmul.f32 %v1962, %v1971
    %v1974 = vmul.f32 %v1964, %v1972
    %v1975 = vpack.c.bf16 %v1974, %v1973
    %s1976 = scalar_lea.vmem [#allocation3], 48
    %1977 = vst [vmem:[%s1976] sm:$0xff] %v1975
    %s1978 = scalar_lea.vmem [#allocation2], 448
    %v1979 = vld [vmem:[%s1978] sm:$0xff]
    %v1980 = vld [vmem:[%s1978 + $0x8] sm:$0xff]
    %v1981 = vld [vmem:[%s1978 + $0x10] sm:$0xff]
    %v1982 = vld [vmem:[%s1978 + $0x18] sm:$0xff]
    %v1983 = vld [vmem:[%s1978 + $0x20] sm:$0xff]
    %v1984 = vld [vmem:[%s1978 + $0x28] sm:$0xff]
    %v1985 = vld [vmem:[%s1978 + $0x30] sm:$0xff]
    %v1986 = vld [vmem:[%s1978 + $0x38] sm:$0xff]
    %1987 = vmatprep.subr.bf16.mxu0 %v847
    %1988 = vmatpush1.bf16.msra.mxu0 %v846
    %1989 = vmatprep.subr.bf16.mxu0 %v851
    %1990 = vmatpush1.bf16.msra.mxu0 %v850
    %1991 = vmatprep.subr.bf16.mxu0 %v855
    %1992 = vmatpush1.bf16.msra.mxu0 %v854
    %1993 = vmatprep.subr.bf16.mxu0 %v859
    %1994 = vmatpush1.bf16.msra.mxu0 %v858
    %1995 = vmatprep.subr.bf16.mxu0 %v863
    %1996 = vmatpush1.bf16.msra.mxu0 %v862
    %1997 = vmatprep.subr.bf16.mxu0 %v867
    %1998 = vmatpush1.bf16.msra.mxu0 %v866
    %1999 = vmatprep.subr.bf16.mxu0 %v871
    %2000 = vmatpush1.bf16.msra.mxu0 %v870
    %2001 = vmatprep.subr.bf16.mxu0 %v875
    %2002 = vmatpush1.bf16.msra.mxu0 %v874
    %2003 = vmatprep.subr.bf16.mxu0 0
    %2004 = vmatpush1.bf16.msra.mxu0 0
    %2005 = vmatprep.subr.bf16.mxu0 0
    %2006 = vmatpush1.bf16.msra.mxu0 0
    %2007 = vmatprep.subr.bf16.mxu0 0
    %2008 = vmatpush1.bf16.msra.mxu0 0
    %2009 = vmatprep.subr.bf16.mxu0 0
    %2010 = vmatpush1.bf16.msra.mxu0 0
    %2011 = vmatprep.subr.bf16.mxu0 0
    %2012 = vmatpush1.bf16.msra.mxu0 0
    %2013 = vmatprep.subr.bf16.mxu0 0
    %2014 = vmatpush1.bf16.msra.mxu0 0
    %2015 = vmatprep.subr.bf16.mxu0 0
    %2016 = vmatpush1.bf16.msra.mxu0 0
    %2017 = vmatprep.subr.bf16.mxu0 0
    %2018 = vmatpush1.bf16.msra.mxu0 0
    %2019 = vmatprep.mubr.bf16.mxu0 0
    %2020 = vmatmul.mubr.bf16.gmra.mrb[0].mxu0 %v1975
    %v2021 = vpop.f32.mrb[0].mxu0
    %v2022 = vadd.f32 0.0, %v2021
    %v2023 = vpop.f32.mrb[0].mxu0
    %v2024 = vadd.f32 0.0, %v2023
    %v2025 = vpop.f32.mrb[0].mxu0
    %v2026 = vadd.f32 0.0, %v2025
    %v2027 = vpop.f32.mrb[0].mxu0
    %v2028 = vadd.f32 0.0, %v2027
    %2029 = vdwg.mxu0
    %2030 = vmatprep.subr.bf16.mxu0 %v849
    %2031 = vmatpush1.bf16.msra.mxu0 %v848
    %2032 = vmatprep.subr.bf16.mxu0 %v853
    %2033 = vmatpush1.bf16.msra.mxu0 %v852
    %2034 = vmatprep.subr.bf16.mxu0 %v857
    %2035 = vmatpush1.bf16.msra.mxu0 %v856
    %2036 = vmatprep.subr.bf16.mxu0 %v861
    %2037 = vmatpush1.bf16.msra.mxu0 %v860
    %2038 = vmatprep.subr.bf16.mxu0 %v865
    %2039 = vmatpush1.bf16.msra.mxu0 %v864
    %2040 = vmatprep.subr.bf16.mxu0 %v869
    %2041 = vmatpush1.bf16.msra.mxu0 %v868
    %2042 = vmatprep.subr.bf16.mxu0 %v873
    %2043 = vmatpush1.bf16.msra.mxu0 %v872
    %2044 = vmatprep.subr.bf16.mxu0 %v877
    %2045 = vmatpush1.bf16.msra.mxu0 %v876
    %2046 = vmatprep.subr.bf16.mxu0 0
    %2047 = vmatpush1.bf16.msra.mxu0 0
    %2048 = vmatprep.subr.bf16.mxu0 0
    %2049 = vmatpush1.bf16.msra.mxu0 0
    %2050 = vmatprep.subr.bf16.mxu0 0
    %2051 = vmatpush1.bf16.msra.mxu0 0
    %2052 = vmatprep.subr.bf16.mxu0 0
    %2053 = vmatpush1.bf16.msra.mxu0 0
    %2054 = vmatprep.subr.bf16.mxu0 0
    %2055 = vmatpush1.bf16.msra.mxu0 0
    %2056 = vmatprep.subr.bf16.mxu0 0
    %2057 = vmatpush1.bf16.msra.mxu0 0
    %2058 = vmatprep.subr.bf16.mxu0 0
    %2059 = vmatpush1.bf16.msra.mxu0 0
    %2060 = vmatprep.subr.bf16.mxu0 0
    %2061 = vmatpush1.bf16.msra.mxu0 0
    %2062 = vmatprep.mubr.bf16.mxu0 0
    %2063 = vmatmul.mubr.bf16.gmra.mrb[0].mxu0 %v1975
    %v2064 = vpop.f32.mrb[0].mxu0
    %v2065 = vadd.f32 0.0, %v2064
    %v2066 = vpop.f32.mrb[0].mxu0
    %v2067 = vadd.f32 0.0, %v2066
    %v2068 = vpop.f32.mrb[0].mxu0
    %v2069 = vadd.f32 0.0, %v2068
    %v2070 = vpop.f32.mrb[0].mxu0
    %v2071 = vadd.f32 0.0, %v2070
    %2072 = vdwg.mxu0
    %v2073 = vadd.f32 %v1979, %v2022
    %v2074 = vadd.f32 %v1980, %v2024
    %v2075 = vadd.f32 %v1981, %v2065
    %v2076 = vadd.f32 %v1982, %v2067
    %v2077 = vadd.f32 %v1983, %v2026
    %v2078 = vadd.f32 %v1984, %v2028
    %v2079 = vadd.f32 %v1985, %v2069
    %v2080 = vadd.f32 %v1986, %v2071
    %v2081 = vxor.u32 %v2073, 2147483648
    %v2082 = vxor.u32 %v2077, 2147483648
    %v2083 = vmul.f32 %v2081, 1.442695
    %v2084 = vpow.pop %v2083
    %v2085 = vmul.f32 %v2082, 1.442695
    %v2086 = vpow.pop %v2085
    %v2087 = vadd.f32 %v2084, 1.0
    %v2088 = vadd.f32 %v2086, 1.0
    %v2089 = vrcp.pop %v2087
    %v2090 = vmul.f32 1.0, %v2089
    %v2091 = vrcp.pop %v2088
    %v2092 = vmul.f32 1.0, %v2091
    %v2093 = vxor.u32 %v2074, 2147483648
    %v2094 = vxor.u32 %v2078, 2147483648
    %v2095 = vmul.f32 %v2093, 1.442695
    %v2096 = vpow.pop %v2095
    %v2097 = vmul.f32 %v2094, 1.442695
    %v2098 = vpow.pop %v2097
    %v2099 = vadd.f32 %v2096, 1.0
    %v2100 = vadd.f32 %v2098, 1.0
    %v2101 = vrcp.pop %v2099
    %v2102 = vmul.f32 1.0, %v2101
    %v2103 = vrcp.pop %v2100
    %v2104 = vmul.f32 1.0, %v2103
    %v2105 = vtanh.pop %v2075
    %v2106 = vtanh.pop %v2079
    %v2107 = vxor.u32 %v2076, 2147483648
    %v2108 = vxor.u32 %v2080, 2147483648
    %v2109 = vmul.f32 %v2107, 1.442695
    %v2110 = vpow.pop %v2109
    %v2111 = vmul.f32 %v2108, 1.442695
    %v2112 = vpow.pop %v2111
    %v2113 = vadd.f32 %v2110, 1.0
    %v2114 = vadd.f32 %v2112, 1.0
    %v2115 = vrcp.pop %v2113
    %v2116 = vmul.f32 1.0, %v2115
    %v2117 = vrcp.pop %v2114
    %v2118 = vmul.f32 1.0, %v2117
    %v2119 = vmul.f32 %v2102, %v1969
    %v2120 = vmul.f32 %v2104, %v1970
    %v2121 = vmul.f32 %v2090, %v2105
    %v2122 = vmul.f32 %v2092, %v2106
    %v2123 = vadd.f32 %v2119, %v2121
    %v2124 = vadd.f32 %v2120, %v2122
    %v2125 = vtanh.pop %v2123
    %v2126 = vtanh.pop %v2124
    %v2127 = vmul.f32 %v2116, %v2125
    %v2128 = vmul.f32 %v2118, %v2126
    %v2129 = vpack.c.bf16 %v2128, %v2127
    %s2130 = scalar_lea.vmem [#allocation3], 56
    %2131 = vst [vmem:[%s2130] sm:$0xff] %v2129
    %2132 = vst [vmem:[#allocation16] sm:$0xff] %v2127
    %2133 = vst [vmem:[#allocation16 + $0x8] sm:$0xff] %v2128
    %2134 = vst [vmem:[#allocation18] sm:$0xff] %v2123
    %2135 = vst [vmem:[#allocation18 + $0x8] sm:$0xff] %v2124
    %v2136 = vld [vmem:[#allocation3] sm:$0xff]
    %v2137 = vld [vmem:[#allocation3 + $0x8] sm:$0xff]
    %v2138 = vld [vmem:[#allocation3 + $0x10] sm:$0xff]
    %v2139 = vld [vmem:[#allocation3 + $0x18] sm:$0xff]
    %v2140 = vld [vmem:[#allocation3 + $0x20] sm:$0xff]
    %v2141 = vld [vmem:[#allocation3 + $0x28] sm:$0xff]
    %v2142 = vld [vmem:[#allocation3 + $0x30] sm:$0xff]
    %v2143 = vld [vmem:[#allocation3 + $0x38] sm:$0xff]
    %s2144 = scalar_lea.vmem [#allocation7], 256
    %v2145 = vld [vmem:[%s2144] sm:$0xff]
    %v2146 = vld [vmem:[%s2144 + $0x8] sm:$0xff]
    %v2147 = vld [vmem:[%s2144 + $0x10] sm:$0xff]
    %v2148 = vld [vmem:[%s2144 + $0x18] sm:$0xff]
    %v2149 = vld [vmem:[%s2144 + $0x20] sm:$0xff]
    %v2150 = vld [vmem:[%s2144 + $0x28] sm:$0xff]
    %v2151 = vld [vmem:[%s2144 + $0x30] sm:$0xff]
    %v2152 = vld [vmem:[%s2144 + $0x38] sm:$0xff]
    %v2153 = vld [vmem:[%s2144 + $0x40] sm:$0xff]
    %v2154 = vld [vmem:[%s2144 + $0x48] sm:$0xff]
    %v2155 = vld [vmem:[%s2144 + $0x50] sm:$0xff]
    %v2156 = vld [vmem:[%s2144 + $0x58] sm:$0xff]
    %v2157 = vld [vmem:[%s2144 + $0x60] sm:$0xff]
    %v2158 = vld [vmem:[%s2144 + $0x68] sm:$0xff]
    %v2159 = vld [vmem:[%s2144 + $0x70] sm:$0xff]
    %v2160 = vld [vmem:[%s2144 + $0x78] sm:$0xff]
    %v2161 = vld [vmem:[%s2144 + $0x80] sm:$0xff]
    %v2162 = vld [vmem:[%s2144 + $0x88] sm:$0xff]
    %v2163 = vld [vmem:[%s2144 + $0x90] sm:$0xff]
    %v2164 = vld [vmem:[%s2144 + $0x98] sm:$0xff]
    %v2165 = vld [vmem:[%s2144 + $0xa0] sm:$0xff]
    %v2166 = vld [vmem:[%s2144 + $0xa8] sm:$0xff]
    %v2167 = vld [vmem:[%s2144 + $0xb0] sm:$0xff]
    %v2168 = vld [vmem:[%s2144 + $0xb8] sm:$0xff]
    %v2169 = vld [vmem:[%s2144 + $0xc0] sm:$0xff]
    %v2170 = vld [vmem:[%s2144 + $0xc8] sm:$0xff]
    %v2171 = vld [vmem:[%s2144 + $0xd0] sm:$0xff]
    %v2172 = vld [vmem:[%s2144 + $0xd8] sm:$0xff]
    %v2173 = vld [vmem:[%s2144 + $0xe0] sm:$0xff]
    %v2174 = vld [vmem:[%s2144 + $0xe8] sm:$0xff]
    %v2175 = vld [vmem:[%s2144 + $0xf0] sm:$0xff]
    %v2176 = vld [vmem:[%s2144 + $0xf8] sm:$0xff]
    %s2177 = scalar_lea.vmem %s3, 4
    %v2178 = vld [vmem:[%s2177] sm:$0xf]
    %v2180 = vlaneseq
    %v2181 = vshrl.u32 %v2180, 7
    %v2182 = vsub.s32 0, %v2181
    %v2183 = vrot.slane %v2178, %v2182
    %v2184 = vlaneseq
    %v2185 = vshrl.u32 %v2184, 7
    %v2186 = vsub.s32 1, %v2185
    %v2187 = vrot.slane %v2178, %v2186
    %v2188 = vlaneseq
    %v2189 = vshrl.u32 %v2188, 7
    %v2190 = vsub.s32 2, %v2189
    %v2191 = vrot.slane %v2178, %v2190
    %v2192 = vlaneseq
    %v2193 = vshrl.u32 %v2192, 7
    %v2194 = vsub.s32 3, %v2193
    %v2195 = vrot.slane %v2178, %v2194
    %v2232 = vunpack.c.l.b16 %v2145
    %v2233 = vunpack.c.h.b16 %v2145
    %v2234 = vunpack.c.l.b16 %v2146
    %v2235 = vunpack.c.h.b16 %v2146
    %v2236 = vunpack.c.l.b16 %v2147
    %v2237 = vunpack.c.h.b16 %v2147
    %v2238 = vunpack.c.l.b16 %v2148
    %v2239 = vunpack.c.h.b16 %v2148
    %v2240 = vunpack.c.l.b16 %v2149
    %v2241 = vunpack.c.h.b16 %v2149
    %v2242 = vunpack.c.l.b16 %v2150
    %v2243 = vunpack.c.h.b16 %v2150
    %v2244 = vunpack.c.l.b16 %v2151
    %v2245 = vunpack.c.h.b16 %v2151
    %v2246 = vunpack.c.l.b16 %v2152
    %v2247 = vunpack.c.h.b16 %v2152
    %v2248 = vunpack.c.l.b16 %v2153
    %v2249 = vunpack.c.h.b16 %v2153
    %v2250 = vunpack.c.l.b16 %v2154
    %v2251 = vunpack.c.h.b16 %v2154
    %v2252 = vunpack.c.l.b16 %v2155
    %v2253 = vunpack.c.h.b16 %v2155
    %v2254 = vunpack.c.l.b16 %v2156
    %v2255 = vunpack.c.h.b16 %v2156
    %v2256 = vunpack.c.l.b16 %v2157
    %v2257 = vunpack.c.h.b16 %v2157
    %v2258 = vunpack.c.l.b16 %v2158
    %v2259 = vunpack.c.h.b16 %v2158
    %v2260 = vunpack.c.l.b16 %v2159
    %v2261 = vunpack.c.h.b16 %v2159
    %v2262 = vunpack.c.l.b16 %v2160
    %v2263 = vunpack.c.h.b16 %v2160
    %v2264 = vunpack.c.l.b16 %v2161
    %v2265 = vunpack.c.h.b16 %v2161
    %v2266 = vunpack.c.l.b16 %v2162
    %v2267 = vunpack.c.h.b16 %v2162
    %v2268 = vunpack.c.l.b16 %v2163
    %v2269 = vunpack.c.h.b16 %v2163
    %v2270 = vunpack.c.l.b16 %v2164
    %v2271 = vunpack.c.h.b16 %v2164
    %v2272 = vunpack.c.l.b16 %v2165
    %v2273 = vunpack.c.h.b16 %v2165
    %v2274 = vunpack.c.l.b16 %v2166
    %v2275 = vunpack.c.h.b16 %v2166
    %v2276 = vunpack.c.l.b16 %v2167
    %v2277 = vunpack.c.h.b16 %v2167
    %v2278 = vunpack.c.l.b16 %v2168
    %v2279 = vunpack.c.h.b16 %v2168
    %v2280 = vunpack.c.l.b16 %v2169
    %v2281 = vunpack.c.h.b16 %v2169
    %v2282 = vunpack.c.l.b16 %v2170
    %v2283 = vunpack.c.h.b16 %v2170
    %v2284 = vunpack.c.l.b16 %v2171
    %v2285 = vunpack.c.h.b16 %v2171
    %v2286 = vunpack.c.l.b16 %v2172
    %v2287 = vunpack.c.h.b16 %v2172
    %v2288 = vunpack.c.l.b16 %v2173
    %v2289 = vunpack.c.h.b16 %v2173
    %v2290 = vunpack.c.l.b16 %v2174
    %v2291 = vunpack.c.h.b16 %v2174
    %v2292 = vunpack.c.l.b16 %v2175
    %v2293 = vunpack.c.h.b16 %v2175
    %v2294 = vunpack.c.l.b16 %v2176
    %v2295 = vunpack.c.h.b16 %v2176
    %v2296 = vpack.c.b16 %v2236, %v2232
    %v2297 = vpack.c.b16 %v2237, %v2233
    %v2298 = vpack.c.b16 %v2238, %v2234
    %v2299 = vpack.c.b16 %v2239, %v2235
    %v2300 = vpack.c.b16 %v2244, %v2240
    %v2301 = vpack.c.b16 %v2245, %v2241
    %v2302 = vpack.c.b16 %v2246, %v2242
    %v2303 = vpack.c.b16 %v2247, %v2243
    %v2304 = vpack.c.b16 %v2252, %v2248
    %v2305 = vpack.c.b16 %v2253, %v2249
    %v2306 = vpack.c.b16 %v2254, %v2250
    %v2307 = vpack.c.b16 %v2255, %v2251
    %v2308 = vpack.c.b16 %v2260, %v2256
    %v2309 = vpack.c.b16 %v2261, %v2257
    %v2310 = vpack.c.b16 %v2262, %v2258
    %v2311 = vpack.c.b16 %v2263, %v2259
    %v2312 = vpack.c.b16 %v2268, %v2264
    %v2313 = vpack.c.b16 %v2269, %v2265
    %v2314 = vpack.c.b16 %v2270, %v2266
    %v2315 = vpack.c.b16 %v2271, %v2267
    %v2316 = vpack.c.b16 %v2276, %v2272
    %v2317 = vpack.c.b16 %v2277, %v2273
    %v2318 = vpack.c.b16 %v2278, %v2274
    %v2319 = vpack.c.b16 %v2279, %v2275
    %v2320 = vpack.c.b16 %v2284, %v2280
    %v2321 = vpack.c.b16 %v2285, %v2281
    %v2322 = vpack.c.b16 %v2286, %v2282
    %v2323 = vpack.c.b16 %v2287, %v2283
    %v2324 = vpack.c.b16 %v2292, %v2288
    %v2325 = vpack.c.b16 %v2293, %v2289
    %v2326 = vpack.c.b16 %v2294, %v2290
    %v2327 = vpack.c.b16 %v2295, %v2291
    %2360 = vmatprep.subr.bf16.mxu0 %v2297
    %2361 = vmatpush1.bf16.msra.mxu0 %v2296
    %2362 = vmatprep.subr.bf16.mxu0 %v2301
    %2363 = vmatpush1.bf16.msra.mxu0 %v2300
    %2364 = vmatprep.subr.bf16.mxu0 %v2305
    %2365 = vmatpush1.bf16.msra.mxu0 %v2304
    %2366 = vmatprep.subr.bf16.mxu0 %v2309
    %2367 = vmatpush1.bf16.msra.mxu0 %v2308
    %2368 = vmatprep.subr.bf16.mxu0 %v2313
    %2369 = vmatpush1.bf16.msra.mxu0 %v2312
    %2370 = vmatprep.subr.bf16.mxu0 %v2317
    %2371 = vmatpush1.bf16.msra.mxu0 %v2316
    %2372 = vmatprep.subr.bf16.mxu0 %v2321
    %2373 = vmatpush1.bf16.msra.mxu0 %v2320
    %2374 = vmatprep.subr.bf16.mxu0 %v2325
    %2375 = vmatpush1.bf16.msra.mxu0 %v2324
    %2376 = vmatprep.subr.bf16.mxu0 0
    %2377 = vmatpush1.bf16.msra.mxu0 0
    %2378 = vmatprep.subr.bf16.mxu0 0
    %2379 = vmatpush1.bf16.msra.mxu0 0
    %2380 = vmatprep.subr.bf16.mxu0 0
    %2381 = vmatpush1.bf16.msra.mxu0 0
    %2382 = vmatprep.subr.bf16.mxu0 0
    %2383 = vmatpush1.bf16.msra.mxu0 0
    %2384 = vmatprep.subr.bf16.mxu0 0
    %2385 = vmatpush1.bf16.msra.mxu0 0
    %2386 = vmatprep.subr.bf16.mxu0 0
    %2387 = vmatpush1.bf16.msra.mxu0 0
    %2388 = vmatprep.subr.bf16.mxu0 0
    %2389 = vmatpush1.bf16.msra.mxu0 0
    %2390 = vmatprep.subr.bf16.mxu0 0
    %2391 = vmatpush1.bf16.msra.mxu0 0
    %2392 = vmatprep.mubr.bf16.mxu0 0
    %2393 = vmatmul.mubr.bf16.gmra.mrb[0].mxu0 %v2136
    %v2394 = vpop.f32.mrb[0].mxu0
    %v2395 = vadd.f32 %v2183, %v2394
    %v2396 = vpop.f32.mrb[0].mxu0
    %v2397 = vadd.f32 %v2187, %v2396
    %v2398 = vpop.f32.mrb[0].mxu0
    %v2399 = vadd.f32 %v2183, %v2398
    %v2400 = vpop.f32.mrb[0].mxu0
    %v2401 = vadd.f32 %v2187, %v2400
    %2402 = vmatprep.mubr.bf16.mxu0 0
    %2403 = vmatmul.mubr.bf16.gmra.mrb[0].mxu0 %v2137
    %v2404 = vpop.f32.mrb[0].mxu0
    %v2405 = vadd.f32 %v2183, %v2404
    %v2406 = vpop.f32.mrb[0].mxu0
    %v2407 = vadd.f32 %v2187, %v2406
    %v2408 = vpop.f32.mrb[0].mxu0
    %v2409 = vadd.f32 %v2183, %v2408
    %v2410 = vpop.f32.mrb[0].mxu0
    %v2411 = vadd.f32 %v2187, %v2410
    %2412 = vmatprep.mubr.bf16.mxu0 0
    %2413 = vmatmul.mubr.bf16.gmra.mrb[0].mxu0 %v2138
    %v2414 = vpop.f32.mrb[0].mxu0
    %v2415 = vadd.f32 %v2183, %v2414
    %v2416 = vpop.f32.mrb[0].mxu0
    %v2417 = vadd.f32 %v2187, %v2416
    %v2418 = vpop.f32.mrb[0].mxu0
    %v2419 = vadd.f32 %v2183, %v2418
    %v2420 = vpop.f32.mrb[0].mxu0
    %v2421 = vadd.f32 %v2187, %v2420
    %2422 = vmatprep.mubr.bf16.mxu0 0
    %2423 = vmatmul.mubr.bf16.gmra.mrb[0].mxu0 %v2139
    %v2424 = vpop.f32.mrb[0].mxu0
    %v2425 = vadd.f32 %v2183, %v2424
    %v2426 = vpop.f32.mrb[0].mxu0
    %v2427 = vadd.f32 %v2187, %v2426
    %v2428 = vpop.f32.mrb[0].mxu0
    %v2429 = vadd.f32 %v2183, %v2428
    %v2430 = vpop.f32.mrb[0].mxu0
    %v2431 = vadd.f32 %v2187, %v2430
    %2432 = vmatprep.mubr.bf16.mxu0 0
    %2433 = vmatmul.mubr.bf16.gmra.mrb[0].mxu0 %v2140
    %v2434 = vpop.f32.mrb[0].mxu0
    %v2435 = vadd.f32 %v2183, %v2434
    %v2436 = vpop.f32.mrb[0].mxu0
    %v2437 = vadd.f32 %v2187, %v2436
    %v2438 = vpop.f32.mrb[0].mxu0
    %v2439 = vadd.f32 %v2183, %v2438
    %v2440 = vpop.f32.mrb[0].mxu0
    %v2441 = vadd.f32 %v2187, %v2440
    %2442 = vmatprep.mubr.bf16.mxu0 0
    %2443 = vmatmul.mubr.bf16.gmra.mrb[0].mxu0 %v2141
    %v2444 = vpop.f32.mrb[0].mxu0
    %v2445 = vadd.f32 %v2183, %v2444
    %v2446 = vpop.f32.mrb[0].mxu0
    %v2447 = vadd.f32 %v2187, %v2446
    %v2448 = vpop.f32.mrb[0].mxu0
    %v2449 = vadd.f32 %v2183, %v2448
    %v2450 = vpop.f32.mrb[0].mxu0
    %v2451 = vadd.f32 %v2187, %v2450
    %2452 = vmatprep.mubr.bf16.mxu0 0
    %2453 = vmatmul.mubr.bf16.gmra.mrb[0].mxu0 %v2142
    %v2454 = vpop.f32.mrb[0].mxu0
    %v2455 = vadd.f32 %v2183, %v2454
    %v2456 = vpop.f32.mrb[0].mxu0
    %v2457 = vadd.f32 %v2187, %v2456
    %v2458 = vpop.f32.mrb[0].mxu0
    %v2459 = vadd.f32 %v2183, %v2458
    %v2460 = vpop.f32.mrb[0].mxu0
    %v2461 = vadd.f32 %v2187, %v2460
    %2462 = vmatprep.mubr.bf16.mxu0 0
    %2463 = vmatmul.mubr.bf16.gmra.mrb[0].mxu0 %v2143
    %v2464 = vpop.f32.mrb[0].mxu0
    %v2465 = vadd.f32 %v2183, %v2464
    %v2466 = vpop.f32.mrb[0].mxu0
    %v2467 = vadd.f32 %v2187, %v2466
    %v2468 = vpop.f32.mrb[0].mxu0
    %v2469 = vadd.f32 %v2183, %v2468
    %v2470 = vpop.f32.mrb[0].mxu0
    %v2471 = vadd.f32 %v2187, %v2470
    %2472 = vdwg.mxu0
    %2473 = vmatprep.subr.bf16.mxu0 %v2299
    %2474 = vmatpush1.bf16.msra.mxu0 %v2298
    %2475 = vmatprep.subr.bf16.mxu0 %v2303
    %2476 = vmatpush1.bf16.msra.mxu0 %v2302
    %2477 = vmatprep.subr.bf16.mxu0 %v2307
    %2478 = vmatpush1.bf16.msra.mxu0 %v2306
    %2479 = vmatprep.subr.bf16.mxu0 %v2311
    %2480 = vmatpush1.bf16.msra.mxu0 %v2310
    %2481 = vmatprep.subr.bf16.mxu0 %v2315
    %2482 = vmatpush1.bf16.msra.mxu0 %v2314
    %2483 = vmatprep.subr.bf16.mxu0 %v2319
    %2484 = vmatpush1.bf16.msra.mxu0 %v2318
    %2485 = vmatprep.subr.bf16.mxu0 %v2323
    %2486 = vmatpush1.bf16.msra.mxu0 %v2322
    %2487 = vmatprep.subr.bf16.mxu0 %v2327
    %2488 = vmatpush1.bf16.msra.mxu0 %v2326
    %2489 = vmatprep.subr.bf16.mxu0 0
    %2490 = vmatpush1.bf16.msra.mxu0 0
    %2491 = vmatprep.subr.bf16.mxu0 0
    %2492 = vmatpush1.bf16.msra.mxu0 0
    %2493 = vmatprep.subr.bf16.mxu0 0
    %2494 = vmatpush1.bf16.msra.mxu0 0
    %2495 = vmatprep.subr.bf16.mxu0 0
    %2496 = vmatpush1.bf16.msra.mxu0 0
    %2497 = vmatprep.subr.bf16.mxu0 0
    %2498 = vmatpush1.bf16.msra.mxu0 0
    %2499 = vmatprep.subr.bf16.mxu0 0
    %2500 = vmatpush1.bf16.msra.mxu0 0
    %2501 = vmatprep.subr.bf16.mxu0 0
    %2502 = vmatpush1.bf16.msra.mxu0 0
    %2503 = vmatprep.subr.bf16.mxu0 0
    %2504 = vmatpush1.bf16.msra.mxu0 0
    %2505 = vmatprep.mubr.bf16.mxu0 0
    %2506 = vmatmul.mubr.bf16.gmra.mrb[0].mxu0 %v2136
    %v2507 = vpop.f32.mrb[0].mxu0
    %v2508 = vadd.f32 %v2191, %v2507
    %v2509 = vpop.f32.mrb[0].mxu0
    %v2510 = vadd.f32 %v2195, %v2509
    %v2511 = vpop.f32.mrb[0].mxu0
    %v2512 = vadd.f32 %v2191, %v2511
    %v2513 = vpop.f32.mrb[0].mxu0
    %v2514 = vadd.f32 %v2195, %v2513
    %2515 = vmatprep.mubr.bf16.mxu0 0
    %2516 = vmatmul.mubr.bf16.gmra.mrb[0].mxu0 %v2137
    %v2517 = vpop.f32.mrb[0].mxu0
    %v2518 = vadd.f32 %v2191, %v2517
    %v2519 = vpop.f32.mrb[0].mxu0
    %v2520 = vadd.f32 %v2195, %v2519
    %v2521 = vpop.f32.mrb[0].mxu0
    %v2522 = vadd.f32 %v2191, %v2521
    %v2523 = vpop.f32.mrb[0].mxu0
    %v2524 = vadd.f32 %v2195, %v2523
    %2525 = vmatprep.mubr.bf16.mxu0 0
    %2526 = vmatmul.mubr.bf16.gmra.mrb[0].mxu0 %v2138
    %v2527 = vpop.f32.mrb[0].mxu0
    %v2528 = vadd.f32 %v2191, %v2527
    %v2529 = vpop.f32.mrb[0].mxu0
    %v2530 = vadd.f32 %v2195, %v2529
    %v2531 = vpop.f32.mrb[0].mxu0
    %v2532 = vadd.f32 %v2191, %v2531
    %v2533 = vpop.f32.mrb[0].mxu0
    %v2534 = vadd.f32 %v2195, %v2533
    %2535 = vmatprep.mubr.bf16.mxu0 0
    %2536 = vmatmul.mubr.bf16.gmra.mrb[0].mxu0 %v2139
    %v2537 = vpop.f32.mrb[0].mxu0
    %v2538 = vadd.f32 %v2191, %v2537
    %v2539 = vpop.f32.mrb[0].mxu0
    %v2540 = vadd.f32 %v2195, %v2539
    %v2541 = vpop.f32.mrb[0].mxu0
    %v2542 = vadd.f32 %v2191, %v2541
    %v2543 = vpop.f32.mrb[0].mxu0
    %v2544 = vadd.f32 %v2195, %v2543
    %2545 = vmatprep.mubr.bf16.mxu0 0
    %2546 = vmatmul.mubr.bf16.gmra.mrb[0].mxu0 %v2140
    %v2547 = vpop.f32.mrb[0].mxu0
    %v2548 = vadd.f32 %v2191, %v2547
    %v2549 = vpop.f32.mrb[0].mxu0
    %v2550 = vadd.f32 %v2195, %v2549
    %v2551 = vpop.f32.mrb[0].mxu0
    %v2552 = vadd.f32 %v2191, %v2551
    %v2553 = vpop.f32.mrb[0].mxu0
    %v2554 = vadd.f32 %v2195, %v2553
    %2555 = vmatprep.mubr.bf16.mxu0 0
    %2556 = vmatmul.mubr.bf16.gmra.mrb[0].mxu0 %v2141
    %v2557 = vpop.f32.mrb[0].mxu0
    %v2558 = vadd.f32 %v2191, %v2557
    %v2559 = vpop.f32.mrb[0].mxu0
    %v2560 = vadd.f32 %v2195, %v2559
    %v2561 = vpop.f32.mrb[0].mxu0
    %v2562 = vadd.f32 %v2191, %v2561
    %v2563 = vpop.f32.mrb[0].mxu0
    %v2564 = vadd.f32 %v2195, %v2563
    %2565 = vmatprep.mubr.bf16.mxu0 0
    %2566 = vmatmul.mubr.bf16.gmra.mrb[0].mxu0 %v2142
    %v2567 = vpop.f32.mrb[0].mxu0
    %v2568 = vadd.f32 %v2191, %v2567
    %v2569 = vpop.f32.mrb[0].mxu0
    %v2570 = vadd.f32 %v2195, %v2569
    %v2571 = vpop.f32.mrb[0].mxu0
    %v2572 = vadd.f32 %v2191, %v2571
    %v2573 = vpop.f32.mrb[0].mxu0
    %v2574 = vadd.f32 %v2195, %v2573
    %2575 = vmatprep.mubr.bf16.mxu0 0
    %2576 = vmatmul.mubr.bf16.gmra.mrb[0].mxu0 %v2143
    %v2577 = vpop.f32.mrb[0].mxu0
    %v2578 = vadd.f32 %v2191, %v2577
    %v2579 = vpop.f32.mrb[0].mxu0
    %v2580 = vadd.f32 %v2195, %v2579
    %v2581 = vpop.f32.mrb[0].mxu0
    %v2582 = vadd.f32 %v2191, %v2581
    %v2583 = vpop.f32.mrb[0].mxu0
    %v2584 = vadd.f32 %v2195, %v2583
    %2585 = vdwg.mxu0
    %2586 = vst [vmem:[#allocation2] sm:$0xff] %v2395
    %2587 = vst [vmem:[#allocation2 + $0x8] sm:$0xff] %v2397
    %2588 = vst [vmem:[#allocation2 + $0x10] sm:$0xff] %v2508
    %2589 = vst [vmem:[#allocation2 + $0x18] sm:$0xff] %v2510
    %2590 = vst [vmem:[#allocation2 + $0x20] sm:$0xff] %v2399
    %2591 = vst [vmem:[#allocation2 + $0x28] sm:$0xff] %v2401
    %2592 = vst [vmem:[#allocation2 + $0x30] sm:$0xff] %v2512
    %2593 = vst [vmem:[#allocation2 + $0x38] sm:$0xff] %v2514
    %2594 = vst [vmem:[#allocation2 + $0x40] sm:$0xff] %v2405
    %2595 = vst [vmem:[#allocation2 + $0x48] sm:$0xff] %v2407
    %2596 = vst [vmem:[#allocation2 + $0x50] sm:$0xff] %v2518
    %2597 = vst [vmem:[#allocation2 + $0x58] sm:$0xff] %v2520
    %2598 = vst [vmem:[#allocation2 + $0x60] sm:$0xff] %v2409
    %2599 = vst [vmem:[#allocation2 + $0x68] sm:$0xff] %v2411
    %2600 = vst [vmem:[#allocation2 + $0x70] sm:$0xff] %v2522
    %2601 = vst [vmem:[#allocation2 + $0x78] sm:$0xff] %v2524
    %2602 = vst [vmem:[#allocation2 + $0x80] sm:$0xff] %v2415
    %2603 = vst [vmem:[#allocation2 + $0x88] sm:$0xff] %v2417
    %2604 = vst [vmem:[#allocation2 + $0x90] sm:$0xff] %v2528
    %2605 = vst [vmem:[#allocation2 + $0x98] sm:$0xff] %v2530
    %2606 = vst [vmem:[#allocation2 + $0xa0] sm:$0xff] %v2419
    %2607 = vst [vmem:[#allocation2 + $0xa8] sm:$0xff] %v2421
    %2608 = vst [vmem:[#allocation2 + $0xb0] sm:$0xff] %v2532
    %2609 = vst [vmem:[#allocation2 + $0xb8] sm:$0xff] %v2534
    %2610 = vst [vmem:[#allocation2 + $0xc0] sm:$0xff] %v2425
    %2611 = vst [vmem:[#allocation2 + $0xc8] sm:$0xff] %v2427
    %2612 = vst [vmem:[#allocation2 + $0xd0] sm:$0xff] %v2538
    %2613 = vst [vmem:[#allocation2 + $0xd8] sm:$0xff] %v2540
    %2614 = vst [vmem:[#allocation2 + $0xe0] sm:$0xff] %v2429
    %2615 = vst [vmem:[#allocation2 + $0xe8] sm:$0xff] %v2431
    %2616 = vst [vmem:[#allocation2 + $0xf0] sm:$0xff] %v2542
    %2617 = vst [vmem:[#allocation2 + $0xf8] sm:$0xff] %v2544
    %2618 = vst [vmem:[#allocation2 + $0x100] sm:$0xff] %v2435
    %2619 = vst [vmem:[#allocation2 + $0x108] sm:$0xff] %v2437
    %2620 = vst [vmem:[#allocation2 + $0x110] sm:$0xff] %v2548
    %2621 = vst [vmem:[#allocation2 + $0x118] sm:$0xff] %v2550
    %2622 = vst [vmem:[#allocation2 + $0x120] sm:$0xff] %v2439
    %2623 = vst [vmem:[#allocation2 + $0x128] sm:$0xff] %v2441
    %2624 = vst [vmem:[#allocation2 + $0x130] sm:$0xff] %v2552
    %2625 = vst [vmem:[#allocation2 + $0x138] sm:$0xff] %v2554
    %2626 = vst [vmem:[#allocation2 + $0x140] sm:$0xff] %v2445
    %2627 = vst [vmem:[#allocation2 + $0x148] sm:$0xff] %v2447
    %2628 = vst [vmem:[#allocation2 + $0x150] sm:$0xff] %v2558
    %2629 = vst [vmem:[#allocation2 + $0x158] sm:$0xff] %v2560
    %2630 = vst [vmem:[#allocation2 + $0x160] sm:$0xff] %v2449
    %2631 = vst [vmem:[#allocation2 + $0x168] sm:$0xff] %v2451
    %2632 = vst [vmem:[#allocation2 + $0x170] sm:$0xff] %v2562
    %2633 = vst [vmem:[#allocation2 + $0x178] sm:$0xff] %v2564
    %2634 = vst [vmem:[#allocation2 + $0x180] sm:$0xff] %v2455
    %2635 = vst [vmem:[#allocation2 + $0x188] sm:$0xff] %v2457
    %2636 = vst [vmem:[#allocation2 + $0x190] sm:$0xff] %v2568
    %2637 = vst [vmem:[#allocation2 + $0x198] sm:$0xff] %v2570
    %2638 = vst [vmem:[#allocation2 + $0x1a0] sm:$0xff] %v2459
    %2639 = vst [vmem:[#allocation2 + $0x1a8] sm:$0xff] %v2461
    %2640 = vst [vmem:[#allocation2 + $0x1b0] sm:$0xff] %v2572
    %2641 = vst [vmem:[#allocation2 + $0x1b8] sm:$0xff] %v2574
    %2642 = vst [vmem:[#allocation2 + $0x1c0] sm:$0xff] %v2465
    %2643 = vst [vmem:[#allocation2 + $0x1c8] sm:$0xff] %v2467
    %2644 = vst [vmem:[#allocation2 + $0x1d0] sm:$0xff] %v2578
    %2645 = vst [vmem:[#allocation2 + $0x1d8] sm:$0xff] %v2580
    %2646 = vst [vmem:[#allocation2 + $0x1e0] sm:$0xff] %v2469
    %2647 = vst [vmem:[#allocation2 + $0x1e8] sm:$0xff] %v2471
    %2648 = vst [vmem:[#allocation2 + $0x1f0] sm:$0xff] %v2582
    %2649 = vst [vmem:[#allocation2 + $0x1f8] sm:$0xff] %v2584
    %s2650 = scalar_lea.vmem [#allocation9], 256
    %v2651 = vld [vmem:[%s2650] sm:$0xff]
    %v2652 = vld [vmem:[%s2650 + $0x8] sm:$0xff]
    %v2653 = vld [vmem:[%s2650 + $0x10] sm:$0xff]
    %v2654 = vld [vmem:[%s2650 + $0x18] sm:$0xff]
    %v2655 = vld [vmem:[%s2650 + $0x20] sm:$0xff]
    %v2656 = vld [vmem:[%s2650 + $0x28] sm:$0xff]
    %v2657 = vld [vmem:[%s2650 + $0x30] sm:$0xff]
    %v2658 = vld [vmem:[%s2650 + $0x38] sm:$0xff]
    %v2659 = vld [vmem:[%s2650 + $0x40] sm:$0xff]
    %v2660 = vld [vmem:[%s2650 + $0x48] sm:$0xff]
    %v2661 = vld [vmem:[%s2650 + $0x50] sm:$0xff]
    %v2662 = vld [vmem:[%s2650 + $0x58] sm:$0xff]
    %v2663 = vld [vmem:[%s2650 + $0x60] sm:$0xff]
    %v2664 = vld [vmem:[%s2650 + $0x68] sm:$0xff]
    %v2665 = vld [vmem:[%s2650 + $0x70] sm:$0xff]
    %v2666 = vld [vmem:[%s2650 + $0x78] sm:$0xff]
    %v2667 = vld [vmem:[%s2650 + $0x80] sm:$0xff]
    %v2668 = vld [vmem:[%s2650 + $0x88] sm:$0xff]
    %v2669 = vld [vmem:[%s2650 + $0x90] sm:$0xff]
    %v2670 = vld [vmem:[%s2650 + $0x98] sm:$0xff]
    %v2671 = vld [vmem:[%s2650 + $0xa0] sm:$0xff]
    %v2672 = vld [vmem:[%s2650 + $0xa8] sm:$0xff]
    %v2673 = vld [vmem:[%s2650 + $0xb0] sm:$0xff]
    %v2674 = vld [vmem:[%s2650 + $0xb8] sm:$0xff]
    %v2675 = vld [vmem:[%s2650 + $0xc0] sm:$0xff]
    %v2676 = vld [vmem:[%s2650 + $0xc8] sm:$0xff]
    %v2677 = vld [vmem:[%s2650 + $0xd0] sm:$0xff]
    %v2678 = vld [vmem:[%s2650 + $0xd8] sm:$0xff]
    %v2679 = vld [vmem:[%s2650 + $0xe0] sm:$0xff]
    %v2680 = vld [vmem:[%s2650 + $0xe8] sm:$0xff]
    %v2681 = vld [vmem:[%s2650 + $0xf0] sm:$0xff]
    %v2682 = vld [vmem:[%s2650 + $0xf8] sm:$0xff]
    %s2683 = scalar_lea.vmem [#allocation16], 16
    %v2684 = vld [vmem:[%s2683] sm:$0xff]
    %v2685 = vld [vmem:[%s2683 + $0x8] sm:$0xff]
    %s2686 = scalar_lea.vmem [#allocation18], 16
    %v2687 = vld [vmem:[%s2686] sm:$0xff]
    %v2688 = vld [vmem:[%s2686 + $0x8] sm:$0xff]
    %v2689 = vld [vmem:[#allocation2] sm:$0xff]
    %v2690 = vld [vmem:[#allocation2 + $0x8] sm:$0xff]
    %v2691 = vld [vmem:[#allocation2 + $0x10] sm:$0xff]
    %v2692 = vld [vmem:[#allocation2 + $0x18] sm:$0xff]
    %v2693 = vld [vmem:[#allocation2 + $0x20] sm:$0xff]
    %v2694 = vld [vmem:[#allocation2 + $0x28] sm:$0xff]
    %v2695 = vld [vmem:[#allocation2 + $0x30] sm:$0xff]
    %v2696 = vld [vmem:[#allocation2 + $0x38] sm:$0xff]
    %v2697 = vpack.c.bf16 %v2685, %v2684
    %v2730 = vunpack.c.l.b16 %v2651
    %v2731 = vunpack.c.h.b16 %v2651
    %v2732 = vunpack.c.l.b16 %v2652
    %v2733 = vunpack.c.h.b16 %v2652
    %v2734 = vunpack.c.l.b16 %v2653
    %v2735 = vunpack.c.h.b16 %v2653
    %v2736 = vunpack.c.l.b16 %v2654
    %v2737 = vunpack.c.h.b16 %v2654
    %v2738 = vunpack.c.l.b16 %v2655
    %v2739 = vunpack.c.h.b16 %v2655
    %v2740 = vunpack.c.l.b16 %v2656
    %v2741 = vunpack.c.h.b16 %v2656
    %v2742 = vunpack.c.l.b16 %v2657
    %v2743 = vunpack.c.h.b16 %v2657
    %v2744 = vunpack.c.l.b16 %v2658
    %v2745 = vunpack.c.h.b16 %v2658
    %v2746 = vunpack.c.l.b16 %v2659
    %v2747 = vunpack.c.h.b16 %v2659
    %v2748 = vunpack.c.l.b16 %v2660
    %v2749 = vunpack.c.h.b16 %v2660
    %v2750 = vunpack.c.l.b16 %v2661
    %v2751 = vunpack.c.h.b16 %v2661
    %v2752 = vunpack.c.l.b16 %v2662
    %v2753 = vunpack.c.h.b16 %v2662
    %v2754 = vunpack.c.l.b16 %v2663
    %v2755 = vunpack.c.h.b16 %v2663
    %v2756 = vunpack.c.l.b16 %v2664
    %v2757 = vunpack.c.h.b16 %v2664
    %v2758 = vunpack.c.l.b16 %v2665
    %v2759 = vunpack.c.h.b16 %v2665
    %v2760 = vunpack.c.l.b16 %v2666
    %v2761 = vunpack.c.h.b16 %v2666
    %v2762 = vunpack.c.l.b16 %v2667
    %v2763 = vunpack.c.h.b16 %v2667
    %v2764 = vunpack.c.l.b16 %v2668
    %v2765 = vunpack.c.h.b16 %v2668
    %v2766 = vunpack.c.l.b16 %v2669
    %v2767 = vunpack.c.h.b16 %v2669
    %v2768 = vunpack.c.l.b16 %v2670
    %v2769 = vunpack.c.h.b16 %v2670
    %v2770 = vunpack.c.l.b16 %v2671
    %v2771 = vunpack.c.h.b16 %v2671
    %v2772 = vunpack.c.l.b16 %v2672
    %v2773 = vunpack.c.h.b16 %v2672
    %v2774 = vunpack.c.l.b16 %v2673
    %v2775 = vunpack.c.h.b16 %v2673
    %v2776 = vunpack.c.l.b16 %v2674
    %v2777 = vunpack.c.h.b16 %v2674
    %v2778 = vunpack.c.l.b16 %v2675
    %v2779 = vunpack.c.h.b16 %v2675
    %v2780 = vunpack.c.l.b16 %v2676
    %v2781 = vunpack.c.h.b16 %v2676
    %v2782 = vunpack.c.l.b16 %v2677
    %v2783 = vunpack.c.h.b16 %v2677
    %v2784 = vunpack.c.l.b16 %v2678
    %v2785 = vunpack.c.h.b16 %v2678
    %v2786 = vunpack.c.l.b16 %v2679
    %v2787 = vunpack.c.h.b16 %v2679
    %v2788 = vunpack.c.l.b16 %v2680
    %v2789 = vunpack.c.h.b16 %v2680
    %v2790 = vunpack.c.l.b16 %v2681
    %v2791 = vunpack.c.h.b16 %v2681
    %v2792 = vunpack.c.l.b16 %v2682
    %v2793 = vunpack.c.h.b16 %v2682
    %v2794 = vpack.c.b16 %v2734, %v2730
    %v2795 = vpack.c.b16 %v2735, %v2731
    %v2796 = vpack.c.b16 %v2736, %v2732
    %v2797 = vpack.c.b16 %v2737, %v2733
    %v2798 = vpack.c.b16 %v2742, %v2738
    %v2799 = vpack.c.b16 %v2743, %v2739
    %v2800 = vpack.c.b16 %v2744, %v2740
    %v2801 = vpack.c.b16 %v2745, %v2741
    %v2802 = vpack.c.b16 %v2750, %v2746
    %v2803 = vpack.c.b16 %v2751, %v2747
    %v2804 = vpack.c.b16 %v2752, %v2748
    %v2805 = vpack.c.b16 %v2753, %v2749
    %v2806 = vpack.c.b16 %v2758, %v2754
    %v2807 = vpack.c.b16 %v2759, %v2755
    %v2808 = vpack.c.b16 %v2760, %v2756
    %v2809 = vpack.c.b16 %v2761, %v2757
    %v2810 = vpack.c.b16 %v2766, %v2762
    %v2811 = vpack.c.b16 %v2767, %v2763
    %v2812 = vpack.c.b16 %v2768, %v2764
    %v2813 = vpack.c.b16 %v2769, %v2765
    %v2814 = vpack.c.b16 %v2774, %v2770
    %v2815 = vpack.c.b16 %v2775, %v2771
    %v2816 = vpack.c.b16 %v2776, %v2772
    %v2817 = vpack.c.b16 %v2777, %v2773
    %v2818 = vpack.c.b16 %v2782, %v2778
    %v2819 = vpack.c.b16 %v2783, %v2779
    %v2820 = vpack.c.b16 %v2784, %v2780
    %v2821 = vpack.c.b16 %v2785, %v2781
    %v2822 = vpack.c.b16 %v2790, %v2786
    %v2823 = vpack.c.b16 %v2791, %v2787
    %v2824 = vpack.c.b16 %v2792, %v2788
    %v2825 = vpack.c.b16 %v2793, %v2789
    %2858 = vmatprep.subr.bf16.mxu0 %v2795
    %2859 = vmatpush1.bf16.msra.mxu0 %v2794
    %2860 = vmatprep.subr.bf16.mxu0 %v2799
    %2861 = vmatpush1.bf16.msra.mxu0 %v2798
    %2862 = vmatprep.subr.bf16.mxu0 %v2803
    %2863 = vmatpush1.bf16.msra.mxu0 %v2802
    %2864 = vmatprep.subr.bf16.mxu0 %v2807
    %2865 = vmatpush1.bf16.msra.mxu0 %v2806
    %2866 = vmatprep.subr.bf16.mxu0 %v2811
    %2867 = vmatpush1.bf16.msra.mxu0 %v2810
    %2868 = vmatprep.subr.bf16.mxu0 %v2815
    %2869 = vmatpush1.bf16.msra.mxu0 %v2814
    %2870 = vmatprep.subr.bf16.mxu0 %v2819
    %2871 = vmatpush1.bf16.msra.mxu0 %v2818
    %2872 = vmatprep.subr.bf16.mxu0 %v2823
    %2873 = vmatpush1.bf16.msra.mxu0 %v2822
    %2874 = vmatprep.subr.bf16.mxu0 0
    %2875 = vmatpush1.bf16.msra.mxu0 0
    %2876 = vmatprep.subr.bf16.mxu0 0
    %2877 = vmatpush1.bf16.msra.mxu0 0
    %2878 = vmatprep.subr.bf16.mxu0 0
    %2879 = vmatpush1.bf16.msra.mxu0 0
    %2880 = vmatprep.subr.bf16.mxu0 0
    %2881 = vmatpush1.bf16.msra.mxu0 0
    %2882 = vmatprep.subr.bf16.mxu0 0
    %2883 = vmatpush1.bf16.msra.mxu0 0
    %2884 = vmatprep.subr.bf16.mxu0 0
    %2885 = vmatpush1.bf16.msra.mxu0 0
    %2886 = vmatprep.subr.bf16.mxu0 0
    %2887 = vmatpush1.bf16.msra.mxu0 0
    %2888 = vmatprep.subr.bf16.mxu0 0
    %2889 = vmatpush1.bf16.msra.mxu0 0
    %2890 = vmatprep.mubr.bf16.mxu0 0
    %2891 = vmatmul.mubr.bf16.gmra.mrb[0].mxu0 %v2697
    %v2892 = vpop.f32.mrb[0].mxu0
    %v2893 = vadd.f32 0.0, %v2892
    %v2894 = vpop.f32.mrb[0].mxu0
    %v2895 = vadd.f32 0.0, %v2894
    %v2896 = vpop.f32.mrb[0].mxu0
    %v2897 = vadd.f32 0.0, %v2896
    %v2898 = vpop.f32.mrb[0].mxu0
    %v2899 = vadd.f32 0.0, %v2898
    %2900 = vdwg.mxu0
    %2901 = vmatprep.subr.bf16.mxu0 %v2797
    %2902 = vmatpush1.bf16.msra.mxu0 %v2796
    %2903 = vmatprep.subr.bf16.mxu0 %v2801
    %2904 = vmatpush1.bf16.msra.mxu0 %v2800
    %2905 = vmatprep.subr.bf16.mxu0 %v2805
    %2906 = vmatpush1.bf16.msra.mxu0 %v2804
    %2907 = vmatprep.subr.bf16.mxu0 %v2809
    %2908 = vmatpush1.bf16.msra.mxu0 %v2808
    %2909 = vmatprep.subr.bf16.mxu0 %v2813
    %2910 = vmatpush1.bf16.msra.mxu0 %v2812
    %2911 = vmatprep.subr.bf16.mxu0 %v2817
    %2912 = vmatpush1.bf16.msra.mxu0 %v2816
    %2913 = vmatprep.subr.bf16.mxu0 %v2821
    %2914 = vmatpush1.bf16.msra.mxu0 %v2820
    %2915 = vmatprep.subr.bf16.mxu0 %v2825
    %2916 = vmatpush1.bf16.msra.mxu0 %v2824
    %2917 = vmatprep.subr.bf16.mxu0 0
    %2918 = vmatpush1.bf16.msra.mxu0 0
    %2919 = vmatprep.subr.bf16.mxu0 0
    %2920 = vmatpush1.bf16.msra.mxu0 0
    %2921 = vmatprep.subr.bf16.mxu0 0
    %2922 = vmatpush1.bf16.msra.mxu0 0
    %2923 = vmatprep.subr.bf16.mxu0 0
    %2924 = vmatpush1.bf16.msra.mxu0 0
    %2925 = vmatprep.subr.bf16.mxu0 0
    %2926 = vmatpush1.bf16.msra.mxu0 0
    %2927 = vmatprep.subr.bf16.mxu0 0
    %2928 = vmatpush1.bf16.msra.mxu0 0
    %2929 = vmatprep.subr.bf16.mxu0 0
    %2930 = vmatpush1.bf16.msra.mxu0 0
    %2931 = vmatprep.subr.bf16.mxu0 0
    %2932 = vmatpush1.bf16.msra.mxu0 0
    %2933 = vmatprep.mubr.bf16.mxu0 0
    %2934 = vmatmul.mubr.bf16.gmra.mrb[0].mxu0 %v2697
    %v2935 = vpop.f32.mrb[0].mxu0
    %v2936 = vadd.f32 0.0, %v2935
    %v2937 = vpop.f32.mrb[0].mxu0
    %v2938 = vadd.f32 0.0, %v2937
    %v2939 = vpop.f32.mrb[0].mxu0
    %v2940 = vadd.f32 0.0, %v2939
    %v2941 = vpop.f32.mrb[0].mxu0
    %v2942 = vadd.f32 0.0, %v2941
    %2943 = vdwg.mxu0
    %v2944 = vadd.f32 %v2689, %v2893
    %v2945 = vadd.f32 %v2690, %v2895
    %v2946 = vadd.f32 %v2691, %v2936
    %v2947 = vadd.f32 %v2692, %v2938
    %v2948 = vadd.f32 %v2693, %v2897
    %v2949 = vadd.f32 %v2694, %v2899
    %v2950 = vadd.f32 %v2695, %v2940
    %v2951 = vadd.f32 %v2696, %v2942
    %v2952 = vxor.u32 %v2944, 2147483648
    %v2953 = vxor.u32 %v2948, 2147483648
    %v2954 = vmul.f32 %v2952, 1.442695
    %v2955 = vpow.pop %v2954
    %v2956 = vmul.f32 %v2953, 1.442695
    %v2957 = vpow.pop %v2956
    %v2958 = vadd.f32 %v2955, 1.0
    %v2959 = vadd.f32 %v2957, 1.0
    %v2960 = vrcp.pop %v2958
    %v2961 = vmul.f32 1.0, %v2960
    %v2962 = vrcp.pop %v2959
    %v2963 = vmul.f32 1.0, %v2962
    %v2964 = vxor.u32 %v2945, 2147483648
    %v2965 = vxor.u32 %v2949, 2147483648
    %v2966 = vmul.f32 %v2964, 1.442695
    %v2967 = vpow.pop %v2966
    %v2968 = vmul.f32 %v2965, 1.442695
    %v2969 = vpow.pop %v2968
    %v2970 = vadd.f32 %v2967, 1.0
    %v2971 = vadd.f32 %v2969, 1.0
    %v2972 = vrcp.pop %v2970
    %v2973 = vmul.f32 1.0, %v2972
    %v2974 = vrcp.pop %v2971
    %v2975 = vmul.f32 1.0, %v2974
    %v2976 = vtanh.pop %v2946
    %v2977 = vtanh.pop %v2950
    %v2978 = vxor.u32 %v2947, 2147483648
    %v2979 = vxor.u32 %v2951, 2147483648
    %v2980 = vmul.f32 %v2978, 1.442695
    %v2981 = vpow.pop %v2980
    %v2982 = vmul.f32 %v2979, 1.442695
    %v2983 = vpow.pop %v2982
    %v2984 = vadd.f32 %v2981, 1.0
    %v2985 = vadd.f32 %v2983, 1.0
    %v2986 = vrcp.pop %v2984
    %v2987 = vmul.f32 1.0, %v2986
    %v2988 = vrcp.pop %v2985
    %v2989 = vmul.f32 1.0, %v2988
    %v2990 = vmul.f32 %v2973, %v2687
    %v2991 = vmul.f32 %v2975, %v2688
    %v2992 = vmul.f32 %v2961, %v2976
    %v2993 = vmul.f32 %v2963, %v2977
    %v2994 = vadd.f32 %v2990, %v2992
    %v2995 = vadd.f32 %v2991, %v2993
    %v2996 = vtanh.pop %v2994
    %v2997 = vtanh.pop %v2995
    %v2998 = vmul.f32 %v2987, %v2996
    %v2999 = vmul.f32 %v2989, %v2997
    %v3000 = vpack.c.bf16 %v2999, %v2998
    %3001 = vst [vmem:[#allocation3] sm:$0xff] %v3000
    %v3002 = vld [vmem:[%s1054] sm:$0xff]
    %v3003 = vld [vmem:[%s1054 + $0x8] sm:$0xff]
    %v3004 = vld [vmem:[%s1054 + $0x10] sm:$0xff]
    %v3005 = vld [vmem:[%s1054 + $0x18] sm:$0xff]
    %v3006 = vld [vmem:[%s1054 + $0x20] sm:$0xff]
    %v3007 = vld [vmem:[%s1054 + $0x28] sm:$0xff]
    %v3008 = vld [vmem:[%s1054 + $0x30] sm:$0xff]
    %v3009 = vld [vmem:[%s1054 + $0x38] sm:$0xff]
    %3010 = vmatprep.subr.bf16.mxu0 %v2795
    %3011 = vmatpush1.bf16.msra.mxu0 %v2794
    %3012 = vmatprep.subr.bf16.mxu0 %v2799
    %3013 = vmatpush1.bf16.msra.mxu0 %v2798
    %3014 = vmatprep.subr.bf16.mxu0 %v2803
    %3015 = vmatpush1.bf16.msra.mxu0 %v2802
    %3016 = vmatprep.subr.bf16.mxu0 %v2807
    %3017 = vmatpush1.bf16.msra.mxu0 %v2806
    %3018 = vmatprep.subr.bf16.mxu0 %v2811
    %3019 = vmatpush1.bf16.msra.mxu0 %v2810
    %3020 = vmatprep.subr.bf16.mxu0 %v2815
    %3021 = vmatpush1.bf16.msra.mxu0 %v2814
    %3022 = vmatprep.subr.bf16.mxu0 %v2819
    %3023 = vmatpush1.bf16.msra.mxu0 %v2818
    %3024 = vmatprep.subr.bf16.mxu0 %v2823
    %3025 = vmatpush1.bf16.msra.mxu0 %v2822
    %3026 = vmatprep.subr.bf16.mxu0 0
    %3027 = vmatpush1.bf16.msra.mxu0 0
    %3028 = vmatprep.subr.bf16.mxu0 0
    %3029 = vmatpush1.bf16.msra.mxu0 0
    %3030 = vmatprep.subr.bf16.mxu0 0
    %3031 = vmatpush1.bf16.msra.mxu0 0
    %3032 = vmatprep.subr.bf16.mxu0 0
    %3033 = vmatpush1.bf16.msra.mxu0 0
    %3034 = vmatprep.subr.bf16.mxu0 0
    %3035 = vmatpush1.bf16.msra.mxu0 0
    %3036 = vmatprep.subr.bf16.mxu0 0
    %3037 = vmatpush1.bf16.msra.mxu0 0
    %3038 = vmatprep.subr.bf16.mxu0 0
    %3039 = vmatpush1.bf16.msra.mxu0 0
    %3040 = vmatprep.subr.bf16.mxu0 0
    %3041 = vmatpush1.bf16.msra.mxu0 0
    %3042 = vmatprep.mubr.bf16.mxu0 0
    %3043 = vmatmul.mubr.bf16.gmra.mrb[0].mxu0 %v3000
    %v3044 = vpop.f32.mrb[0].mxu0
    %v3045 = vadd.f32 0.0, %v3044
    %v3046 = vpop.f32.mrb[0].mxu0
    %v3047 = vadd.f32 0.0, %v3046
    %v3048 = vpop.f32.mrb[0].mxu0
    %v3049 = vadd.f32 0.0, %v3048
    %v3050 = vpop.f32.mrb[0].mxu0
    %v3051 = vadd.f32 0.0, %v3050
    %3052 = vdwg.mxu0
    %3053 = vmatprep.subr.bf16.mxu0 %v2797
    %3054 = vmatpush1.bf16.msra.mxu0 %v2796
    %3055 = vmatprep.subr.bf16.mxu0 %v2801
    %3056 = vmatpush1.bf16.msra.mxu0 %v2800
    %3057 = vmatprep.subr.bf16.mxu0 %v2805
    %3058 = vmatpush1.bf16.msra.mxu0 %v2804
    %3059 = vmatprep.subr.bf16.mxu0 %v2809
    %3060 = vmatpush1.bf16.msra.mxu0 %v2808
    %3061 = vmatprep.subr.bf16.mxu0 %v2813
    %3062 = vmatpush1.bf16.msra.mxu0 %v2812
    %3063 = vmatprep.subr.bf16.mxu0 %v2817
    %3064 = vmatpush1.bf16.msra.mxu0 %v2816
    %3065 = vmatprep.subr.bf16.mxu0 %v2821
    %3066 = vmatpush1.bf16.msra.mxu0 %v2820
    %3067 = vmatprep.subr.bf16.mxu0 %v2825
    %3068 = vmatpush1.bf16.msra.mxu0 %v2824
    %3069 = vmatprep.subr.bf16.mxu0 0
    %3070 = vmatpush1.bf16.msra.mxu0 0
    %3071 = vmatprep.subr.bf16.mxu0 0
    %3072 = vmatpush1.bf16.msra.mxu0 0
    %3073 = vmatprep.subr.bf16.mxu0 0
    %3074 = vmatpush1.bf16.msra.mxu0 0
    %3075 = vmatprep.subr.bf16.mxu0 0
    %3076 = vmatpush1.bf16.msra.mxu0 0
    %3077 = vmatprep.subr.bf16.mxu0 0
    %3078 = vmatpush1.bf16.msra.mxu0 0
    %3079 = vmatprep.subr.bf16.mxu0 0
    %3080 = vmatpush1.bf16.msra.mxu0 0
    %3081 = vmatprep.subr.bf16.mxu0 0
    %3082 = vmatpush1.bf16.msra.mxu0 0
    %3083 = vmatprep.subr.bf16.mxu0 0
    %3084 = vmatpush1.bf16.msra.mxu0 0
    %3085 = vmatprep.mubr.bf16.mxu0 0
    %3086 = vmatmul.mubr.bf16.gmra.mrb[0].mxu0 %v3000
    %v3087 = vpop.f32.mrb[0].mxu0
    %v3088 = vadd.f32 0.0, %v3087
    %v3089 = vpop.f32.mrb[0].mxu0
    %v3090 = vadd.f32 0.0, %v3089
    %v3091 = vpop.f32.mrb[0].mxu0
    %v3092 = vadd.f32 0.0, %v3091
    %v3093 = vpop.f32.mrb[0].mxu0
    %v3094 = vadd.f32 0.0, %v3093
    %3095 = vdwg.mxu0
    %v3096 = vadd.f32 %v3002, %v3045
    %v3097 = vadd.f32 %v3003, %v3047
    %v3098 = vadd.f32 %v3004, %v3088
    %v3099 = vadd.f32 %v3005, %v3090
    %v3100 = vadd.f32 %v3006, %v3049
    %v3101 = vadd.f32 %v3007, %v3051
    %v3102 = vadd.f32 %v3008, %v3092
    %v3103 = vadd.f32 %v3009, %v3094
    %v3104 = vxor.u32 %v3096, 2147483648
    %v3105 = vxor.u32 %v3100, 2147483648
    %v3106 = vmul.f32 %v3104, 1.442695
    %v3107 = vpow.pop %v3106
    %v3108 = vmul.f32 %v3105, 1.442695
    %v3109 = vpow.pop %v3108
    %v3110 = vadd.f32 %v3107, 1.0
    %v3111 = vadd.f32 %v3109, 1.0
    %v3112 = vrcp.pop %v3110
    %v3113 = vmul.f32 1.0, %v3112
    %v3114 = vrcp.pop %v3111
    %v3115 = vmul.f32 1.0, %v3114
    %v3116 = vxor.u32 %v3097, 2147483648
    %v3117 = vxor.u32 %v3101, 2147483648
    %v3118 = vmul.f32 %v3116, 1.442695
    %v3119 = vpow.pop %v3118
    %v3120 = vmul.f32 %v3117, 1.442695
    %v3121 = vpow.pop %v3120
    %v3122 = vadd.f32 %v3119, 1.0
    %v3123 = vadd.f32 %v3121, 1.0
    %v3124 = vrcp.pop %v3122
    %v3125 = vmul.f32 1.0, %v3124
    %v3126 = vrcp.pop %v3123
    %v3127 = vmul.f32 1.0, %v3126
    %v3128 = vtanh.pop %v3098
    %v3129 = vtanh.pop %v3102
    %v3130 = vxor.u32 %v3099, 2147483648
    %v3131 = vxor.u32 %v3103, 2147483648
    %v3132 = vmul.f32 %v3130, 1.442695
    %v3133 = vpow.pop %v3132
    %v3134 = vmul.f32 %v3131, 1.442695
    %v3135 = vpow.pop %v3134
    %v3136 = vadd.f32 %v3133, 1.0
    %v3137 = vadd.f32 %v3135, 1.0
    %v3138 = vrcp.pop %v3136
    %v3139 = vmul.f32 1.0, %v3138
    %v3140 = vrcp.pop %v3137
    %v3141 = vmul.f32 1.0, %v3140
    %v3142 = vmul.f32 %v3125, %v2994
    %v3143 = vmul.f32 %v3127, %v2995
    %v3144 = vmul.f32 %v3113, %v3128
    %v3145 = vmul.f32 %v3115, %v3129
    %v3146 = vadd.f32 %v3142, %v3144
    %v3147 = vadd.f32 %v3143, %v3145
    %v3148 = vtanh.pop %v3146
    %v3149 = vtanh.pop %v3147
    %v3150 = vmul.f32 %v3139, %v3148
    %v3151 = vmul.f32 %v3141, %v3149
    %v3152 = vpack.c.bf16 %v3151, %v3150
    %3153 = vst [vmem:[%s1206] sm:$0xff] %v3152
    %v3154 = vld [vmem:[%s1208] sm:$0xff]
    %v3155 = vld [vmem:[%s1208 + $0x8] sm:$0xff]
    %v3156 = vld [vmem:[%s1208 + $0x10] sm:$0xff]
    %v3157 = vld [vmem:[%s1208 + $0x18] sm:$0xff]
    %v3158 = vld [vmem:[%s1208 + $0x20] sm:$0xff]
    %v3159 = vld [vmem:[%s1208 + $0x28] sm:$0xff]
    %v3160 = vld [vmem:[%s1208 + $0x30] sm:$0xff]
    %v3161 = vld [vmem:[%s1208 + $0x38] sm:$0xff]
    %3162 = vmatprep.subr.bf16.mxu0 %v2795
    %3163 = vmatpush1.bf16.msra.mxu0 %v2794
    %3164 = vmatprep.subr.bf16.mxu0 %v2799
    %3165 = vmatpush1.bf16.msra.mxu0 %v2798
    %3166 = vmatprep.subr.bf16.mxu0 %v2803
    %3167 = vmatpush1.bf16.msra.mxu0 %v2802
    %3168 = vmatprep.subr.bf16.mxu0 %v2807
    %3169 = vmatpush1.bf16.msra.mxu0 %v2806
    %3170 = vmatprep.subr.bf16.mxu0 %v2811
    %3171 = vmatpush1.bf16.msra.mxu0 %v2810
    %3172 = vmatprep.subr.bf16.mxu0 %v2815
    %3173 = vmatpush1.bf16.msra.mxu0 %v2814
    %3174 = vmatprep.subr.bf16.mxu0 %v2819
    %3175 = vmatpush1.bf16.msra.mxu0 %v2818
    %3176 = vmatprep.subr.bf16.mxu0 %v2823
    %3177 = vmatpush1.bf16.msra.mxu0 %v2822
    %3178 = vmatprep.subr.bf16.mxu0 0
    %3179 = vmatpush1.bf16.msra.mxu0 0
    %3180 = vmatprep.subr.bf16.mxu0 0
    %3181 = vmatpush1.bf16.msra.mxu0 0
    %3182 = vmatprep.subr.bf16.mxu0 0
    %3183 = vmatpush1.bf16.msra.mxu0 0
    %3184 = vmatprep.subr.bf16.mxu0 0
    %3185 = vmatpush1.bf16.msra.mxu0 0
    %3186 = vmatprep.subr.bf16.mxu0 0
    %3187 = vmatpush1.bf16.msra.mxu0 0
    %3188 = vmatprep.subr.bf16.mxu0 0
    %3189 = vmatpush1.bf16.msra.mxu0 0
    %3190 = vmatprep.subr.bf16.mxu0 0
    %3191 = vmatpush1.bf16.msra.mxu0 0
    %3192 = vmatprep.subr.bf16.mxu0 0
    %3193 = vmatpush1.bf16.msra.mxu0 0
    %3194 = vmatprep.mubr.bf16.mxu0 0
    %3195 = vmatmul.mubr.bf16.gmra.mrb[0].mxu0 %v3152
    %v3196 = vpop.f32.mrb[0].mxu0
    %v3197 = vadd.f32 0.0, %v3196
    %v3198 = vpop.f32.mrb[0].mxu0
    %v3199 = vadd.f32 0.0, %v3198
    %v3200 = vpop.f32.mrb[0].mxu0
    %v3201 = vadd.f32 0.0, %v3200
    %v3202 = vpop.f32.mrb[0].mxu0
    %v3203 = vadd.f32 0.0, %v3202
    %3204 = vdwg.mxu0
    %3205 = vmatprep.subr.bf16.mxu0 %v2797
    %3206 = vmatpush1.bf16.msra.mxu0 %v2796
    %3207 = vmatprep.subr.bf16.mxu0 %v2801
    %3208 = vmatpush1.bf16.msra.mxu0 %v2800
    %3209 = vmatprep.subr.bf16.mxu0 %v2805
    %3210 = vmatpush1.bf16.msra.mxu0 %v2804
    %3211 = vmatprep.subr.bf16.mxu0 %v2809
    %3212 = vmatpush1.bf16.msra.mxu0 %v2808
    %3213 = vmatprep.subr.bf16.mxu0 %v2813
    %3214 = vmatpush1.bf16.msra.mxu0 %v2812
    %3215 = vmatprep.subr.bf16.mxu0 %v2817
    %3216 = vmatpush1.bf16.msra.mxu0 %v2816
    %3217 = vmatprep.subr.bf16.mxu0 %v2821
    %3218 = vmatpush1.bf16.msra.mxu0 %v2820
    %3219 = vmatprep.subr.bf16.mxu0 %v2825
    %3220 = vmatpush1.bf16.msra.mxu0 %v2824
    %3221 = vmatprep.subr.bf16.mxu0 0
    %3222 = vmatpush1.bf16.msra.mxu0 0
    %3223 = vmatprep.subr.bf16.mxu0 0
    %3224 = vmatpush1.bf16.msra.mxu0 0
    %3225 = vmatprep.subr.bf16.mxu0 0
    %3226 = vmatpush1.bf16.msra.mxu0 0
    %3227 = vmatprep.subr.bf16.mxu0 0
    %3228 = vmatpush1.bf16.msra.mxu0 0
    %3229 = vmatprep.subr.bf16.mxu0 0
    %3230 = vmatpush1.bf16.msra.mxu0 0
    %3231 = vmatprep.subr.bf16.mxu0 0
    %3232 = vmatpush1.bf16.msra.mxu0 0
    %3233 = vmatprep.subr.bf16.mxu0 0
    %3234 = vmatpush1.bf16.msra.mxu0 0
    %3235 = vmatprep.subr.bf16.mxu0 0
    %3236 = vmatpush1.bf16.msra.mxu0 0
    %3237 = vmatprep.mubr.bf16.mxu0 0
    %3238 = vmatmul.mubr.bf16.gmra.mrb[0].mxu0 %v3152
    %v3239 = vpop.f32.mrb[0].mxu0
    %v3240 = vadd.f32 0.0, %v3239
    %v3241 = vpop.f32.mrb[0].mxu0
    %v3242 = vadd.f32 0.0, %v3241
    %v3243 = vpop.f32.mrb[0].mxu0
    %v3244 = vadd.f32 0.0, %v3243
    %v3245 = vpop.f32.mrb[0].mxu0
    %v3246 = vadd.f32 0.0, %v3245
    %3247 = vdwg.mxu0
    %v3248 = vadd.f32 %v3154, %v3197
    %v3249 = vadd.f32 %v3155, %v3199
    %v3250 = vadd.f32 %v3156, %v3240
    %v3251 = vadd.f32 %v3157, %v3242
    %v3252 = vadd.f32 %v3158, %v3201
    %v3253 = vadd.f32 %v3159, %v3203
    %v3254 = vadd.f32 %v3160, %v3244
    %v3255 = vadd.f32 %v3161, %v3246
    %v3256 = vxor.u32 %v3248, 2147483648
    %v3257 = vxor.u32 %v3252, 2147483648
    %v3258 = vmul.f32 %v3256, 1.442695
    %v3259 = vpow.pop %v3258
    %v3260 = vmul.f32 %v3257, 1.442695
    %v3261 = vpow.pop %v3260
    %v3262 = vadd.f32 %v3259, 1.0
    %v3263 = vadd.f32 %v3261, 1.0
    %v3264 = vrcp.pop %v3262
    %v3265 = vmul.f32 1.0, %v3264
    %v3266 = vrcp.pop %v3263
    %v3267 = vmul.f32 1.0, %v3266
    %v3268 = vxor.u32 %v3249, 2147483648
    %v3269 = vxor.u32 %v3253, 2147483648
    %v3270 = vmul.f32 %v3268, 1.442695
    %v3271 = vpow.pop %v3270
    %v3272 = vmul.f32 %v3269, 1.442695
    %v3273 = vpow.pop %v3272
    %v3274 = vadd.f32 %v3271, 1.0
    %v3275 = vadd.f32 %v3273, 1.0
    %v3276 = vrcp.pop %v3274
    %v3277 = vmul.f32 1.0, %v3276
    %v3278 = vrcp.pop %v3275
    %v3279 = vmul.f32 1.0, %v3278
    %v3280 = vtanh.pop %v3250
    %v3281 = vtanh.pop %v3254
    %v3282 = vxor.u32 %v3251, 2147483648
    %v3283 = vxor.u32 %v3255, 2147483648
    %v3284 = vmul.f32 %v3282, 1.442695
    %v3285 = vpow.pop %v3284
    %v3286 = vmul.f32 %v3283, 1.442695
    %v3287 = vpow.pop %v3286
    %v3288 = vadd.f32 %v3285, 1.0
    %v3289 = vadd.f32 %v3287, 1.0
    %v3290 = vrcp.pop %v3288
    %v3291 = vmul.f32 1.0, %v3290
    %v3292 = vrcp.pop %v3289
    %v3293 = vmul.f32 1.0, %v3292
    %v3294 = vmul.f32 %v3277, %v3146
    %v3295 = vmul.f32 %v3279, %v3147
    %v3296 = vmul.f32 %v3265, %v3280
    %v3297 = vmul.f32 %v3267, %v3281
    %v3298 = vadd.f32 %v3294, %v3296
    %v3299 = vadd.f32 %v3295, %v3297
    %v3300 = vtanh.pop %v3298
    %v3301 = vtanh.pop %v3299
    %v3302 = vmul.f32 %v3291, %v3300
    %v3303 = vmul.f32 %v3293, %v3301
    %v3304 = vpack.c.bf16 %v3303, %v3302
    %3305 = vst [vmem:[%s1360] sm:$0xff] %v3304
    %v3306 = vld [vmem:[%s1362] sm:$0xff]
    %v3307 = vld [vmem:[%s1362 + $0x8] sm:$0xff]
    %v3308 = vld [vmem:[%s1362 + $0x10] sm:$0xff]
    %v3309 = vld [vmem:[%s1362 + $0x18] sm:$0xff]
    %v3310 = vld [vmem:[%s1362 + $0x20] sm:$0xff]
    %v3311 = vld [vmem:[%s1362 + $0x28] sm:$0xff]
    %v3312 = vld [vmem:[%s1362 + $0x30] sm:$0xff]
    %v3313 = vld [vmem:[%s1362 + $0x38] sm:$0xff]
    %3314 = vmatprep.subr.bf16.mxu0 %v2795
    %3315 = vmatpush1.bf16.msra.mxu0 %v2794
    %3316 = vmatprep.subr.bf16.mxu0 %v2799
    %3317 = vmatpush1.bf16.msra.mxu0 %v2798
    %3318 = vmatprep.subr.bf16.mxu0 %v2803
    %3319 = vmatpush1.bf16.msra.mxu0 %v2802
    %3320 = vmatprep.subr.bf16.mxu0 %v2807
    %3321 = vmatpush1.bf16.msra.mxu0 %v2806
    %3322 = vmatprep.subr.bf16.mxu0 %v2811
    %3323 = vmatpush1.bf16.msra.mxu0 %v2810
    %3324 = vmatprep.subr.bf16.mxu0 %v2815
    %3325 = vmatpush1.bf16.msra.mxu0 %v2814
    %3326 = vmatprep.subr.bf16.mxu0 %v2819
    %3327 = vmatpush1.bf16.msra.mxu0 %v2818
    %3328 = vmatprep.subr.bf16.mxu0 %v2823
    %3329 = vmatpush1.bf16.msra.mxu0 %v2822
    %3330 = vmatprep.subr.bf16.mxu0 0
    %3331 = vmatpush1.bf16.msra.mxu0 0
    %3332 = vmatprep.subr.bf16.mxu0 0
    %3333 = vmatpush1.bf16.msra.mxu0 0
    %3334 = vmatprep.subr.bf16.mxu0 0
    %3335 = vmatpush1.bf16.msra.mxu0 0
    %3336 = vmatprep.subr.bf16.mxu0 0
    %3337 = vmatpush1.bf16.msra.mxu0 0
    %3338 = vmatprep.subr.bf16.mxu0 0
    %3339 = vmatpush1.bf16.msra.mxu0 0
    %3340 = vmatprep.subr.bf16.mxu0 0
    %3341 = vmatpush1.bf16.msra.mxu0 0
    %3342 = vmatprep.subr.bf16.mxu0 0
    %3343 = vmatpush1.bf16.msra.mxu0 0
    %3344 = vmatprep.subr.bf16.mxu0 0
    %3345 = vmatpush1.bf16.msra.mxu0 0
    %3346 = vmatprep.mubr.bf16.mxu0 0
    %3347 = vmatmul.mubr.bf16.gmra.mrb[0].mxu0 %v3304
    %v3348 = vpop.f32.mrb[0].mxu0
    %v3349 = vadd.f32 0.0, %v3348
    %v3350 = vpop.f32.mrb[0].mxu0
    %v3351 = vadd.f32 0.0, %v3350
    %v3352 = vpop.f32.mrb[0].mxu0
    %v3353 = vadd.f32 0.0, %v3352
    %v3354 = vpop.f32.mrb[0].mxu0
    %v3355 = vadd.f32 0.0, %v3354
    %3356 = vdwg.mxu0
    %3357 = vmatprep.subr.bf16.mxu0 %v2797
    %3358 = vmatpush1.bf16.msra.mxu0 %v2796
    %3359 = vmatprep.subr.bf16.mxu0 %v2801
    %3360 = vmatpush1.bf16.msra.mxu0 %v2800
    %3361 = vmatprep.subr.bf16.mxu0 %v2805
    %3362 = vmatpush1.bf16.msra.mxu0 %v2804
    %3363 = vmatprep.subr.bf16.mxu0 %v2809
    %3364 = vmatpush1.bf16.msra.mxu0 %v2808
    %3365 = vmatprep.subr.bf16.mxu0 %v2813
    %3366 = vmatpush1.bf16.msra.mxu0 %v2812
    %3367 = vmatprep.subr.bf16.mxu0 %v2817
    %3368 = vmatpush1.bf16.msra.mxu0 %v2816
    %3369 = vmatprep.subr.bf16.mxu0 %v2821
    %3370 = vmatpush1.bf16.msra.mxu0 %v2820
    %3371 = vmatprep.subr.bf16.mxu0 %v2825
    %3372 = vmatpush1.bf16.msra.mxu0 %v2824
    %3373 = vmatprep.subr.bf16.mxu0 0
    %3374 = vmatpush1.bf16.msra.mxu0 0
    %3375 = vmatprep.subr.bf16.mxu0 0
    %3376 = vmatpush1.bf16.msra.mxu0 0
    %3377 = vmatprep.subr.bf16.mxu0 0
    %3378 = vmatpush1.bf16.msra.mxu0 0
    %3379 = vmatprep.subr.bf16.mxu0 0
    %3380 = vmatpush1.bf16.msra.mxu0 0
    %3381 = vmatprep.subr.bf16.mxu0 0
    %3382 = vmatpush1.bf16.msra.mxu0 0
    %3383 = vmatprep.subr.bf16.mxu0 0
    %3384 = vmatpush1.bf16.msra.mxu0 0
    %3385 = vmatprep.subr.bf16.mxu0 0
    %3386 = vmatpush1.bf16.msra.mxu0 0
    %3387 = vmatprep.subr.bf16.mxu0 0
    %3388 = vmatpush1.bf16.msra.mxu0 0
    %3389 = vmatprep.mubr.bf16.mxu0 0
    %3390 = vmatmul.mubr.bf16.gmra.mrb[0].mxu0 %v3304
    %v3391 = vpop.f32.mrb[0].mxu0
    %v3392 = vadd.f32 0.0, %v3391
    %v3393 = vpop.f32.mrb[0].mxu0
    %v3394 = vadd.f32 0.0, %v3393
    %v3395 = vpop.f32.mrb[0].mxu0
    %v3396 = vadd.f32 0.0, %v3395
    %v3397 = vpop.f32.mrb[0].mxu0
    %v3398 = vadd.f32 0.0, %v3397
    %3399 = vdwg.mxu0
    %v3400 = vadd.f32 %v3306, %v3349
    %v3401 = vadd.f32 %v3307, %v3351
    %v3402 = vadd.f32 %v3308, %v3392
    %v3403 = vadd.f32 %v3309, %v3394
    %v3404 = vadd.f32 %v3310, %v3353
    %v3405 = vadd.f32 %v3311, %v3355
    %v3406 = vadd.f32 %v3312, %v3396
    %v3407 = vadd.f32 %v3313, %v3398
    %v3408 = vxor.u32 %v3400, 2147483648
    %v3409 = vxor.u32 %v3404, 2147483648
    %v3410 = vmul.f32 %v3408, 1.442695
    %v3411 = vpow.pop %v3410
    %v3412 = vmul.f32 %v3409, 1.442695
    %v3413 = vpow.pop %v3412
    %v3414 = vadd.f32 %v3411, 1.0
    %v3415 = vadd.f32 %v3413, 1.0
    %v3416 = vrcp.pop %v3414
    %v3417 = vmul.f32 1.0, %v3416
    %v3418 = vrcp.pop %v3415
    %v3419 = vmul.f32 1.0, %v3418
    %v3420 = vxor.u32 %v3401, 2147483648
    %v3421 = vxor.u32 %v3405, 2147483648
    %v3422 = vmul.f32 %v3420, 1.442695
    %v3423 = vpow.pop %v3422
    %v3424 = vmul.f32 %v3421, 1.442695
    %v3425 = vpow.pop %v3424
    %v3426 = vadd.f32 %v3423, 1.0
    %v3427 = vadd.f32 %v3425, 1.0
    %v3428 = vrcp.pop %v3426
    %v3429 = vmul.f32 1.0, %v3428
    %v3430 = vrcp.pop %v3427
    %v3431 = vmul.f32 1.0, %v3430
    %v3432 = vtanh.pop %v3402
    %v3433 = vtanh.pop %v3406
    %v3434 = vxor.u32 %v3403, 2147483648
    %v3435 = vxor.u32 %v3407, 2147483648
    %v3436 = vmul.f32 %v3434, 1.442695
    %v3437 = vpow.pop %v3436
    %v3438 = vmul.f32 %v3435, 1.442695
    %v3439 = vpow.pop %v3438
    %v3440 = vadd.f32 %v3437, 1.0
    %v3441 = vadd.f32 %v3439, 1.0
    %v3442 = vrcp.pop %v3440
    %v3443 = vmul.f32 1.0, %v3442
    %v3444 = vrcp.pop %v3441
    %v3445 = vmul.f32 1.0, %v3444
    %v3446 = vmul.f32 %v3429, %v3298
    %v3447 = vmul.f32 %v3431, %v3299
    %v3448 = vmul.f32 %v3417, %v3432
    %v3449 = vmul.f32 %v3419, %v3433
    %v3450 = vadd.f32 %v3446, %v3448
    %v3451 = vadd.f32 %v3447, %v3449
    %v3452 = vtanh.pop %v3450
    %v3453 = vtanh.pop %v3451
    %v3454 = vmul.f32 %v3443, %v3452
    %v3455 = vmul.f32 %v3445, %v3453
    %v3456 = vpack.c.bf16 %v3455, %v3454
    %3457 = vst [vmem:[%s1514] sm:$0xff] %v3456
    %v3458 = vld [vmem:[%s1516] sm:$0xff]
    %v3459 = vld [vmem:[%s1516 + $0x8] sm:$0xff]
    %v3460 = vld [vmem:[%s1516 + $0x10] sm:$0xff]
    %v3461 = vld [vmem:[%s1516 + $0x18] sm:$0xff]
    %v3462 = vld [vmem:[%s1516 + $0x20] sm:$0xff]
    %v3463 = vld [vmem:[%s1516 + $0x28] sm:$0xff]
    %v3464 = vld [vmem:[%s1516 + $0x30] sm:$0xff]
    %v3465 = vld [vmem:[%s1516 + $0x38] sm:$0xff]
    %3466 = vmatprep.subr.bf16.mxu0 %v2795
    %3467 = vmatpush1.bf16.msra.mxu0 %v2794
    %3468 = vmatprep.subr.bf16.mxu0 %v2799
    %3469 = vmatpush1.bf16.msra.mxu0 %v2798
    %3470 = vmatprep.subr.bf16.mxu0 %v2803
    %3471 = vmatpush1.bf16.msra.mxu0 %v2802
    %3472 = vmatprep.subr.bf16.mxu0 %v2807
    %3473 = vmatpush1.bf16.msra.mxu0 %v2806
    %3474 = vmatprep.subr.bf16.mxu0 %v2811
    %3475 = vmatpush1.bf16.msra.mxu0 %v2810
    %3476 = vmatprep.subr.bf16.mxu0 %v2815
    %3477 = vmatpush1.bf16.msra.mxu0 %v2814
    %3478 = vmatprep.subr.bf16.mxu0 %v2819
    %3479 = vmatpush1.bf16.msra.mxu0 %v2818
    %3480 = vmatprep.subr.bf16.mxu0 %v2823
    %3481 = vmatpush1.bf16.msra.mxu0 %v2822
    %3482 = vmatprep.subr.bf16.mxu0 0
    %3483 = vmatpush1.bf16.msra.mxu0 0
    %3484 = vmatprep.subr.bf16.mxu0 0
    %3485 = vmatpush1.bf16.msra.mxu0 0
    %3486 = vmatprep.subr.bf16.mxu0 0
    %3487 = vmatpush1.bf16.msra.mxu0 0
    %3488 = vmatprep.subr.bf16.mxu0 0
    %3489 = vmatpush1.bf16.msra.mxu0 0
    %3490 = vmatprep.subr.bf16.mxu0 0
    %3491 = vmatpush1.bf16.msra.mxu0 0
    %3492 = vmatprep.subr.bf16.mxu0 0
    %3493 = vmatpush1.bf16.msra.mxu0 0
    %3494 = vmatprep.subr.bf16.mxu0 0
    %3495 = vmatpush1.bf16.msra.mxu0 0
    %3496 = vmatprep.subr.bf16.mxu0 0
    %3497 = vmatpush1.bf16.msra.mxu0 0
    %3498 = vmatprep.mubr.bf16.mxu0 0
    %3499 = vmatmul.mubr.bf16.gmra.mrb[0].mxu0 %v3456
    %v3500 = vpop.f32.mrb[0].mxu0
    %v3501 = vadd.f32 0.0, %v3500
    %v3502 = vpop.f32.mrb[0].mxu0
    %v3503 = vadd.f32 0.0, %v3502
    %v3504 = vpop.f32.mrb[0].mxu0
    %v3505 = vadd.f32 0.0, %v3504
    %v3506 = vpop.f32.mrb[0].mxu0
    %v3507 = vadd.f32 0.0, %v3506
    %3508 = vdwg.mxu0
    %3509 = vmatprep.subr.bf16.mxu0 %v2797
    %3510 = vmatpush1.bf16.msra.mxu0 %v2796
    %3511 = vmatprep.subr.bf16.mxu0 %v2801
    %3512 = vmatpush1.bf16.msra.mxu0 %v2800
    %3513 = vmatprep.subr.bf16.mxu0 %v2805
    %3514 = vmatpush1.bf16.msra.mxu0 %v2804
    %3515 = vmatprep.subr.bf16.mxu0 %v2809
    %3516 = vmatpush1.bf16.msra.mxu0 %v2808
    %3517 = vmatprep.subr.bf16.mxu0 %v2813
    %3518 = vmatpush1.bf16.msra.mxu0 %v2812
    %3519 = vmatprep.subr.bf16.mxu0 %v2817
    %3520 = vmatpush1.bf16.msra.mxu0 %v2816
    %3521 = vmatprep.subr.bf16.mxu0 %v2821
    %3522 = vmatpush1.bf16.msra.mxu0 %v2820
    %3523 = vmatprep.subr.bf16.mxu0 %v2825
    %3524 = vmatpush1.bf16.msra.mxu0 %v2824
    %3525 = vmatprep.subr.bf16.mxu0 0
    %3526 = vmatpush1.bf16.msra.mxu0 0
    %3527 = vmatprep.subr.bf16.mxu0 0
    %3528 = vmatpush1.bf16.msra.mxu0 0
    %3529 = vmatprep.subr.bf16.mxu0 0
    %3530 = vmatpush1.bf16.msra.mxu0 0
    %3531 = vmatprep.subr.bf16.mxu0 0
    %3532 = vmatpush1.bf16.msra.mxu0 0
    %3533 = vmatprep.subr.bf16.mxu0 0
    %3534 = vmatpush1.bf16.msra.mxu0 0
    %3535 = vmatprep.subr.bf16.mxu0 0
    %3536 = vmatpush1.bf16.msra.mxu0 0
    %3537 = vmatprep.subr.bf16.mxu0 0
    %3538 = vmatpush1.bf16.msra.mxu0 0
    %3539 = vmatprep.subr.bf16.mxu0 0
    %3540 = vmatpush1.bf16.msra.mxu0 0
    %3541 = vmatprep.mubr.bf16.mxu0 0
    %3542 = vmatmul.mubr.bf16.gmra.mrb[0].mxu0 %v3456
    %v3543 = vpop.f32.mrb[0].mxu0
    %v3544 = vadd.f32 0.0, %v3543
    %v3545 = vpop.f32.mrb[0].mxu0
    %v3546 = vadd.f32 0.0, %v3545
    %v3547 = vpop.f32.mrb[0].mxu0
    %v3548 = vadd.f32 0.0, %v3547
    %v3549 = vpop.f32.mrb[0].mxu0
    %v3550 = vadd.f32 0.0, %v3549
    %3551 = vdwg.mxu0
    %v3552 = vadd.f32 %v3458, %v3501
    %v3553 = vadd.f32 %v3459, %v3503
    %v3554 = vadd.f32 %v3460, %v3544
    %v3555 = vadd.f32 %v3461, %v3546
    %v3556 = vadd.f32 %v3462, %v3505
    %v3557 = vadd.f32 %v3463, %v3507
    %v3558 = vadd.f32 %v3464, %v3548
    %v3559 = vadd.f32 %v3465, %v3550
    %v3560 = vxor.u32 %v3552, 2147483648
    %v3561 = vxor.u32 %v3556, 2147483648
    %v3562 = vmul.f32 %v3560, 1.442695
    %v3563 = vpow.pop %v3562
    %v3564 = vmul.f32 %v3561, 1.442695
    %v3565 = vpow.pop %v3564
    %v3566 = vadd.f32 %v3563, 1.0
    %v3567 = vadd.f32 %v3565, 1.0
    %v3568 = vrcp.pop %v3566
    %v3569 = vmul.f32 1.0, %v3568
    %v3570 = vrcp.pop %v3567
    %v3571 = vmul.f32 1.0, %v3570
    %v3572 = vxor.u32 %v3553, 2147483648
    %v3573 = vxor.u32 %v3557, 2147483648
    %v3574 = vmul.f32 %v3572, 1.442695
    %v3575 = vpow.pop %v3574
    %v3576 = vmul.f32 %v3573, 1.442695
    %v3577 = vpow.pop %v3576
    %v3578 = vadd.f32 %v3575, 1.0
    %v3579 = vadd.f32 %v3577, 1.0
    %v3580 = vrcp.pop %v3578
    %v3581 = vmul.f32 1.0, %v3580
    %v3582 = vrcp.pop %v3579
    %v3583 = vmul.f32 1.0, %v3582
    %v3584 = vtanh.pop %v3554
    %v3585 = vtanh.pop %v3558
    %v3586 = vxor.u32 %v3555, 2147483648
    %v3587 = vxor.u32 %v3559, 2147483648
    %v3588 = vmul.f32 %v3586, 1.442695
    %v3589 = vpow.pop %v3588
    %v3590 = vmul.f32 %v3587, 1.442695
    %v3591 = vpow.pop %v3590
    %v3592 = vadd.f32 %v3589, 1.0
    %v3593 = vadd.f32 %v3591, 1.0
    %v3594 = vrcp.pop %v3592
    %v3595 = vmul.f32 1.0, %v3594
    %v3596 = vrcp.pop %v3593
    %v3597 = vmul.f32 1.0, %v3596
    %v3598 = vmul.f32 %v3581, %v3450
    %v3599 = vmul.f32 %v3583, %v3451
    %v3600 = vmul.f32 %v3569, %v3584
    %v3601 = vmul.f32 %v3571, %v3585
    %v3602 = vadd.f32 %v3598, %v3600
    %v3603 = vadd.f32 %v3599, %v3601
    %v3604 = vtanh.pop %v3602
    %v3605 = vtanh.pop %v3603
    %v3606 = vmul.f32 %v3595, %v3604
    %v3607 = vmul.f32 %v3597, %v3605
    %v3608 = vpack.c.bf16 %v3607, %v3606
    %3609 = vst [vmem:[%s1668] sm:$0xff] %v3608
    %v3610 = vld [vmem:[%s1670] sm:$0xff]
    %v3611 = vld [vmem:[%s1670 + $0x8] sm:$0xff]
    %v3612 = vld [vmem:[%s1670 + $0x10] sm:$0xff]
    %v3613 = vld [vmem:[%s1670 + $0x18] sm:$0xff]
    %v3614 = vld [vmem:[%s1670 + $0x20] sm:$0xff]
    %v3615 = vld [vmem:[%s1670 + $0x28] sm:$0xff]
    %v3616 = vld [vmem:[%s1670 + $0x30] sm:$0xff]
    %v3617 = vld [vmem:[%s1670 + $0x38] sm:$0xff]
    %3618 = vmatprep.subr.bf16.mxu0 %v2795
    %3619 = vmatpush1.bf16.msra.mxu0 %v2794
    %3620 = vmatprep.subr.bf16.mxu0 %v2799
    %3621 = vmatpush1.bf16.msra.mxu0 %v2798
    %3622 = vmatprep.subr.bf16.mxu0 %v2803
    %3623 = vmatpush1.bf16.msra.mxu0 %v2802
    %3624 = vmatprep.subr.bf16.mxu0 %v2807
    %3625 = vmatpush1.bf16.msra.mxu0 %v2806
    %3626 = vmatprep.subr.bf16.mxu0 %v2811
    %3627 = vmatpush1.bf16.msra.mxu0 %v2810
    %3628 = vmatprep.subr.bf16.mxu0 %v2815
    %3629 = vmatpush1.bf16.msra.mxu0 %v2814
    %3630 = vmatprep.subr.bf16.mxu0 %v2819
    %3631 = vmatpush1.bf16.msra.mxu0 %v2818
    %3632 = vmatprep.subr.bf16.mxu0 %v2823
    %3633 = vmatpush1.bf16.msra.mxu0 %v2822
    %3634 = vmatprep.subr.bf16.mxu0 0
    %3635 = vmatpush1.bf16.msra.mxu0 0
    %3636 = vmatprep.subr.bf16.mxu0 0
    %3637 = vmatpush1.bf16.msra.mxu0 0
    %3638 = vmatprep.subr.bf16.mxu0 0
    %3639 = vmatpush1.bf16.msra.mxu0 0
    %3640 = vmatprep.subr.bf16.mxu0 0
    %3641 = vmatpush1.bf16.msra.mxu0 0
    %3642 = vmatprep.subr.bf16.mxu0 0
    %3643 = vmatpush1.bf16.msra.mxu0 0
    %3644 = vmatprep.subr.bf16.mxu0 0
    %3645 = vmatpush1.bf16.msra.mxu0 0
    %3646 = vmatprep.subr.bf16.mxu0 0
    %3647 = vmatpush1.bf16.msra.mxu0 0
    %3648 = vmatprep.subr.bf16.mxu0 0
    %3649 = vmatpush1.bf16.msra.mxu0 0
    %3650 = vmatprep.mubr.bf16.mxu0 0
    %3651 = vmatmul.mubr.bf16.gmra.mrb[0].mxu0 %v3608
    %v3652 = vpop.f32.mrb[0].mxu0
    %v3653 = vadd.f32 0.0, %v3652
    %v3654 = vpop.f32.mrb[0].mxu0
    %v3655 = vadd.f32 0.0, %v3654
    %v3656 = vpop.f32.mrb[0].mxu0
    %v3657 = vadd.f32 0.0, %v3656
    %v3658 = vpop.f32.mrb[0].mxu0
    %v3659 = vadd.f32 0.0, %v3658
    %3660 = vdwg.mxu0
    %3661 = vmatprep.subr.bf16.mxu0 %v2797
    %3662 = vmatpush1.bf16.msra.mxu0 %v2796
    %3663 = vmatprep.subr.bf16.mxu0 %v2801
    %3664 = vmatpush1.bf16.msra.mxu0 %v2800
    %3665 = vmatprep.subr.bf16.mxu0 %v2805
    %3666 = vmatpush1.bf16.msra.mxu0 %v2804
    %3667 = vmatprep.subr.bf16.mxu0 %v2809
    %3668 = vmatpush1.bf16.msra.mxu0 %v2808
    %3669 = vmatprep.subr.bf16.mxu0 %v2813
    %3670 = vmatpush1.bf16.msra.mxu0 %v2812
    %3671 = vmatprep.subr.bf16.mxu0 %v2817
    %3672 = vmatpush1.bf16.msra.mxu0 %v2816
    %3673 = vmatprep.subr.bf16.mxu0 %v2821
    %3674 = vmatpush1.bf16.msra.mxu0 %v2820
    %3675 = vmatprep.subr.bf16.mxu0 %v2825
    %3676 = vmatpush1.bf16.msra.mxu0 %v2824
    %3677 = vmatprep.subr.bf16.mxu0 0
    %3678 = vmatpush1.bf16.msra.mxu0 0
    %3679 = vmatprep.subr.bf16.mxu0 0
    %3680 = vmatpush1.bf16.msra.mxu0 0
    %3681 = vmatprep.subr.bf16.mxu0 0
    %3682 = vmatpush1.bf16.msra.mxu0 0
    %3683 = vmatprep.subr.bf16.mxu0 0
    %3684 = vmatpush1.bf16.msra.mxu0 0
    %3685 = vmatprep.subr.bf16.mxu0 0
    %3686 = vmatpush1.bf16.msra.mxu0 0
    %3687 = vmatprep.subr.bf16.mxu0 0
    %3688 = vmatpush1.bf16.msra.mxu0 0
    %3689 = vmatprep.subr.bf16.mxu0 0
    %3690 = vmatpush1.bf16.msra.mxu0 0
    %3691 = vmatprep.subr.bf16.mxu0 0
    %3692 = vmatpush1.bf16.msra.mxu0 0
    %3693 = vmatprep.mubr.bf16.mxu0 0
    %3694 = vmatmul.mubr.bf16.gmra.mrb[0].mxu0 %v3608
    %v3695 = vpop.f32.mrb[0].mxu0
    %v3696 = vadd.f32 0.0, %v3695
    %v3697 = vpop.f32.mrb[0].mxu0
    %v3698 = vadd.f32 0.0, %v3697
    %v3699 = vpop.f32.mrb[0].mxu0
    %v3700 = vadd.f32 0.0, %v3699
    %v3701 = vpop.f32.mrb[0].mxu0
    %v3702 = vadd.f32 0.0, %v3701
    %3703 = vdwg.mxu0
    %v3704 = vadd.f32 %v3610, %v3653
    %v3705 = vadd.f32 %v3611, %v3655
    %v3706 = vadd.f32 %v3612, %v3696
    %v3707 = vadd.f32 %v3613, %v3698
    %v3708 = vadd.f32 %v3614, %v3657
    %v3709 = vadd.f32 %v3615, %v3659
    %v3710 = vadd.f32 %v3616, %v3700
    %v3711 = vadd.f32 %v3617, %v3702
    %v3712 = vxor.u32 %v3704, 2147483648
    %v3713 = vxor.u32 %v3708, 2147483648
    %v3714 = vmul.f32 %v3712, 1.442695
    %v3715 = vpow.pop %v3714
    %v3716 = vmul.f32 %v3713, 1.442695
    %v3717 = vpow.pop %v3716
    %v3718 = vadd.f32 %v3715, 1.0
    %v3719 = vadd.f32 %v3717, 1.0
    %v3720 = vrcp.pop %v3718
    %v3721 = vmul.f32 1.0, %v3720
    %v3722 = vrcp.pop %v3719
    %v3723 = vmul.f32 1.0, %v3722
    %v3724 = vxor.u32 %v3705, 2147483648
    %v3725 = vxor.u32 %v3709, 2147483648
    %v3726 = vmul.f32 %v3724, 1.442695
    %v3727 = vpow.pop %v3726
    %v3728 = vmul.f32 %v3725, 1.442695
    %v3729 = vpow.pop %v3728
    %v3730 = vadd.f32 %v3727, 1.0
    %v3731 = vadd.f32 %v3729, 1.0
    %v3732 = vrcp.pop %v3730
    %v3733 = vmul.f32 1.0, %v3732
    %v3734 = vrcp.pop %v3731
    %v3735 = vmul.f32 1.0, %v3734
    %v3736 = vtanh.pop %v3706
    %v3737 = vtanh.pop %v3710
    %v3738 = vxor.u32 %v3707, 2147483648
    %v3739 = vxor.u32 %v3711, 2147483648
    %v3740 = vmul.f32 %v3738, 1.442695
    %v3741 = vpow.pop %v3740
    %v3742 = vmul.f32 %v3739, 1.442695
    %v3743 = vpow.pop %v3742
    %v3744 = vadd.f32 %v3741, 1.0
    %v3745 = vadd.f32 %v3743, 1.0
    %v3746 = vrcp.pop %v3744
    %v3747 = vmul.f32 1.0, %v3746
    %v3748 = vrcp.pop %v3745
    %v3749 = vmul.f32 1.0, %v3748
    %v3750 = vmul.f32 %v3733, %v3602
    %v3751 = vmul.f32 %v3735, %v3603
    %v3752 = vmul.f32 %v3721, %v3736
    %v3753 = vmul.f32 %v3723, %v3737
    %v3754 = vadd.f32 %v3750, %v3752
    %v3755 = vadd.f32 %v3751, %v3753
    %v3756 = vtanh.pop %v3754
    %v3757 = vtanh.pop %v3755
    %v3758 = vmul.f32 %v3747, %v3756
    %v3759 = vmul.f32 %v3749, %v3757
    %v3760 = vpack.c.bf16 %v3759, %v3758
    %3761 = vst [vmem:[%s1822] sm:$0xff] %v3760
    %v3762 = vld [vmem:[%s1824] sm:$0xff]
    %v3763 = vld [vmem:[%s1824 + $0x8] sm:$0xff]
    %v3764 = vld [vmem:[%s1824 + $0x10] sm:$0xff]
    %v3765 = vld [vmem:[%s1824 + $0x18] sm:$0xff]
    %v3766 = vld [vmem:[%s1824 + $0x20] sm:$0xff]
    %v3767 = vld [vmem:[%s1824 + $0x28] sm:$0xff]
    %v3768 = vld [vmem:[%s1824 + $0x30] sm:$0xff]
    %v3769 = vld [vmem:[%s1824 + $0x38] sm:$0xff]
    %3770 = vmatprep.subr.bf16.mxu0 %v2795
    %3771 = vmatpush1.bf16.msra.mxu0 %v2794
    %3772 = vmatprep.subr.bf16.mxu0 %v2799
    %3773 = vmatpush1.bf16.msra.mxu0 %v2798
    %3774 = vmatprep.subr.bf16.mxu0 %v2803
    %3775 = vmatpush1.bf16.msra.mxu0 %v2802
    %3776 = vmatprep.subr.bf16.mxu0 %v2807
    %3777 = vmatpush1.bf16.msra.mxu0 %v2806
    %3778 = vmatprep.subr.bf16.mxu0 %v2811
    %3779 = vmatpush1.bf16.msra.mxu0 %v2810
    %3780 = vmatprep.subr.bf16.mxu0 %v2815
    %3781 = vmatpush1.bf16.msra.mxu0 %v2814
    %3782 = vmatprep.subr.bf16.mxu0 %v2819
    %3783 = vmatpush1.bf16.msra.mxu0 %v2818
    %3784 = vmatprep.subr.bf16.mxu0 %v2823
    %3785 = vmatpush1.bf16.msra.mxu0 %v2822
    %3786 = vmatprep.subr.bf16.mxu0 0
    %3787 = vmatpush1.bf16.msra.mxu0 0
    %3788 = vmatprep.subr.bf16.mxu0 0
    %3789 = vmatpush1.bf16.msra.mxu0 0
    %3790 = vmatprep.subr.bf16.mxu0 0
    %3791 = vmatpush1.bf16.msra.mxu0 0
    %3792 = vmatprep.subr.bf16.mxu0 0
    %3793 = vmatpush1.bf16.msra.mxu0 0
    %3794 = vmatprep.subr.bf16.mxu0 0
    %3795 = vmatpush1.bf16.msra.mxu0 0
    %3796 = vmatprep.subr.bf16.mxu0 0
    %3797 = vmatpush1.bf16.msra.mxu0 0
    %3798 = vmatprep.subr.bf16.mxu0 0
    %3799 = vmatpush1.bf16.msra.mxu0 0
    %3800 = vmatprep.subr.bf16.mxu0 0
    %3801 = vmatpush1.bf16.msra.mxu0 0
    %3802 = vmatprep.mubr.bf16.mxu0 0
    %3803 = vmatmul.mubr.bf16.gmra.mrb[0].mxu0 %v3760
    %v3804 = vpop.f32.mrb[0].mxu0
    %v3805 = vadd.f32 0.0, %v3804
    %v3806 = vpop.f32.mrb[0].mxu0
    %v3807 = vadd.f32 0.0, %v3806
    %v3808 = vpop.f32.mrb[0].mxu0
    %v3809 = vadd.f32 0.0, %v3808
    %v3810 = vpop.f32.mrb[0].mxu0
    %v3811 = vadd.f32 0.0, %v3810
    %3812 = vdwg.mxu0
    %3813 = vmatprep.subr.bf16.mxu0 %v2797
    %3814 = vmatpush1.bf16.msra.mxu0 %v2796
    %3815 = vmatprep.subr.bf16.mxu0 %v2801
    %3816 = vmatpush1.bf16.msra.mxu0 %v2800
    %3817 = vmatprep.subr.bf16.mxu0 %v2805
    %3818 = vmatpush1.bf16.msra.mxu0 %v2804
    %3819 = vmatprep.subr.bf16.mxu0 %v2809
    %3820 = vmatpush1.bf16.msra.mxu0 %v2808
    %3821 = vmatprep.subr.bf16.mxu0 %v2813
    %3822 = vmatpush1.bf16.msra.mxu0 %v2812
    %3823 = vmatprep.subr.bf16.mxu0 %v2817
    %3824 = vmatpush1.bf16.msra.mxu0 %v2816
    %3825 = vmatprep.subr.bf16.mxu0 %v2821
    %3826 = vmatpush1.bf16.msra.mxu0 %v2820
    %3827 = vmatprep.subr.bf16.mxu0 %v2825
    %3828 = vmatpush1.bf16.msra.mxu0 %v2824
    %3829 = vmatprep.subr.bf16.mxu0 0
    %3830 = vmatpush1.bf16.msra.mxu0 0
    %3831 = vmatprep.subr.bf16.mxu0 0
    %3832 = vmatpush1.bf16.msra.mxu0 0
    %3833 = vmatprep.subr.bf16.mxu0 0
    %3834 = vmatpush1.bf16.msra.mxu0 0
    %3835 = vmatprep.subr.bf16.mxu0 0
    %3836 = vmatpush1.bf16.msra.mxu0 0
    %3837 = vmatprep.subr.bf16.mxu0 0
    %3838 = vmatpush1.bf16.msra.mxu0 0
    %3839 = vmatprep.subr.bf16.mxu0 0
    %3840 = vmatpush1.bf16.msra.mxu0 0
    %3841 = vmatprep.subr.bf16.mxu0 0
    %3842 = vmatpush1.bf16.msra.mxu0 0
    %3843 = vmatprep.subr.bf16.mxu0 0
    %3844 = vmatpush1.bf16.msra.mxu0 0
    %3845 = vmatprep.mubr.bf16.mxu0 0
    %3846 = vmatmul.mubr.bf16.gmra.mrb[0].mxu0 %v3760
    %v3847 = vpop.f32.mrb[0].mxu0
    %v3848 = vadd.f32 0.0, %v3847
    %v3849 = vpop.f32.mrb[0].mxu0
    %v3850 = vadd.f32 0.0, %v3849
    %v3851 = vpop.f32.mrb[0].mxu0
    %v3852 = vadd.f32 0.0, %v3851
    %v3853 = vpop.f32.mrb[0].mxu0
    %v3854 = vadd.f32 0.0, %v3853
    %3855 = vdwg.mxu0
    %v3856 = vadd.f32 %v3762, %v3805
    %v3857 = vadd.f32 %v3763, %v3807
    %v3858 = vadd.f32 %v3764, %v3848
    %v3859 = vadd.f32 %v3765, %v3850
    %v3860 = vadd.f32 %v3766, %v3809
    %v3861 = vadd.f32 %v3767, %v3811
    %v3862 = vadd.f32 %v3768, %v3852
    %v3863 = vadd.f32 %v3769, %v3854
    %v3864 = vxor.u32 %v3856, 2147483648
    %v3865 = vxor.u32 %v3860, 2147483648
    %v3866 = vmul.f32 %v3864, 1.442695
    %v3867 = vpow.pop %v3866
    %v3868 = vmul.f32 %v3865, 1.442695
    %v3869 = vpow.pop %v3868
    %v3870 = vadd.f32 %v3867, 1.0
    %v3871 = vadd.f32 %v3869, 1.0
    %v3872 = vrcp.pop %v3870
    %v3873 = vmul.f32 1.0, %v3872
    %v3874 = vrcp.pop %v3871
    %v3875 = vmul.f32 1.0, %v3874
    %v3876 = vxor.u32 %v3857, 2147483648
    %v3877 = vxor.u32 %v3861, 2147483648
    %v3878 = vmul.f32 %v3876, 1.442695
    %v3879 = vpow.pop %v3878
    %v3880 = vmul.f32 %v3877, 1.442695
    %v3881 = vpow.pop %v3880
    %v3882 = vadd.f32 %v3879, 1.0
    %v3883 = vadd.f32 %v3881, 1.0
    %v3884 = vrcp.pop %v3882
    %v3885 = vmul.f32 1.0, %v3884
    %v3886 = vrcp.pop %v3883
    %v3887 = vmul.f32 1.0, %v3886
    %v3888 = vtanh.pop %v3858
    %v3889 = vtanh.pop %v3862
    %v3890 = vxor.u32 %v3859, 2147483648
    %v3891 = vxor.u32 %v3863, 2147483648
    %v3892 = vmul.f32 %v3890, 1.442695
    %v3893 = vpow.pop %v3892
    %v3894 = vmul.f32 %v3891, 1.442695
    %v3895 = vpow.pop %v3894
    %v3896 = vadd.f32 %v3893, 1.0
    %v3897 = vadd.f32 %v3895, 1.0
    %v3898 = vrcp.pop %v3896
    %v3899 = vmul.f32 1.0, %v3898
    %v3900 = vrcp.pop %v3897
    %v3901 = vmul.f32 1.0, %v3900
    %v3902 = vmul.f32 %v3885, %v3754
    %v3903 = vmul.f32 %v3887, %v3755
    %v3904 = vmul.f32 %v3873, %v3888
    %v3905 = vmul.f32 %v3875, %v3889
    %v3906 = vadd.f32 %v3902, %v3904
    %v3907 = vadd.f32 %v3903, %v3905
    %v3908 = vtanh.pop %v3906
    %v3909 = vtanh.pop %v3907
    %v3910 = vmul.f32 %v3899, %v3908
    %v3911 = vmul.f32 %v3901, %v3909
    %v3912 = vpack.c.bf16 %v3911, %v3910
    %3913 = vst [vmem:[%s1976] sm:$0xff] %v3912
    %v3914 = vld [vmem:[%s1978] sm:$0xff]
    %v3915 = vld [vmem:[%s1978 + $0x8] sm:$0xff]
    %v3916 = vld [vmem:[%s1978 + $0x10] sm:$0xff]
    %v3917 = vld [vmem:[%s1978 + $0x18] sm:$0xff]
    %v3918 = vld [vmem:[%s1978 + $0x20] sm:$0xff]
    %v3919 = vld [vmem:[%s1978 + $0x28] sm:$0xff]
    %v3920 = vld [vmem:[%s1978 + $0x30] sm:$0xff]
    %v3921 = vld [vmem:[%s1978 + $0x38] sm:$0xff]
    %3922 = vmatprep.subr.bf16.mxu0 %v2795
    %3923 = vmatpush1.bf16.msra.mxu0 %v2794
    %3924 = vmatprep.subr.bf16.mxu0 %v2799
    %3925 = vmatpush1.bf16.msra.mxu0 %v2798
    %3926 = vmatprep.subr.bf16.mxu0 %v2803
    %3927 = vmatpush1.bf16.msra.mxu0 %v2802
    %3928 = vmatprep.subr.bf16.mxu0 %v2807
    %3929 = vmatpush1.bf16.msra.mxu0 %v2806
    %3930 = vmatprep.subr.bf16.mxu0 %v2811
    %3931 = vmatpush1.bf16.msra.mxu0 %v2810
    %3932 = vmatprep.subr.bf16.mxu0 %v2815
    %3933 = vmatpush1.bf16.msra.mxu0 %v2814
    %3934 = vmatprep.subr.bf16.mxu0 %v2819
    %3935 = vmatpush1.bf16.msra.mxu0 %v2818
    %3936 = vmatprep.subr.bf16.mxu0 %v2823
    %3937 = vmatpush1.bf16.msra.mxu0 %v2822
    %3938 = vmatprep.subr.bf16.mxu0 0
    %3939 = vmatpush1.bf16.msra.mxu0 0
    %3940 = vmatprep.subr.bf16.mxu0 0
    %3941 = vmatpush1.bf16.msra.mxu0 0
    %3942 = vmatprep.subr.bf16.mxu0 0
    %3943 = vmatpush1.bf16.msra.mxu0 0
    %3944 = vmatprep.subr.bf16.mxu0 0
    %3945 = vmatpush1.bf16.msra.mxu0 0
    %3946 = vmatprep.subr.bf16.mxu0 0
    %3947 = vmatpush1.bf16.msra.mxu0 0
    %3948 = vmatprep.subr.bf16.mxu0 0
    %3949 = vmatpush1.bf16.msra.mxu0 0
    %3950 = vmatprep.subr.bf16.mxu0 0
    %3951 = vmatpush1.bf16.msra.mxu0 0
    %3952 = vmatprep.subr.bf16.mxu0 0
    %3953 = vmatpush1.bf16.msra.mxu0 0
    %3954 = vmatprep.mubr.bf16.mxu0 0
    %3955 = vmatmul.mubr.bf16.gmra.mrb[0].mxu0 %v3912
    %v3956 = vpop.f32.mrb[0].mxu0
    %v3957 = vadd.f32 0.0, %v3956
    %v3958 = vpop.f32.mrb[0].mxu0
    %v3959 = vadd.f32 0.0, %v3958
    %v3960 = vpop.f32.mrb[0].mxu0
    %v3961 = vadd.f32 0.0, %v3960
    %v3962 = vpop.f32.mrb[0].mxu0
    %v3963 = vadd.f32 0.0, %v3962
    %3964 = vdwg.mxu0
    %3965 = vmatprep.subr.bf16.mxu0 %v2797
    %3966 = vmatpush1.bf16.msra.mxu0 %v2796
    %3967 = vmatprep.subr.bf16.mxu0 %v2801
    %3968 = vmatpush1.bf16.msra.mxu0 %v2800
    %3969 = vmatprep.subr.bf16.mxu0 %v2805
    %3970 = vmatpush1.bf16.msra.mxu0 %v2804
    %3971 = vmatprep.subr.bf16.mxu0 %v2809
    %3972 = vmatpush1.bf16.msra.mxu0 %v2808
    %3973 = vmatprep.subr.bf16.mxu0 %v2813
    %3974 = vmatpush1.bf16.msra.mxu0 %v2812
    %3975 = vmatprep.subr.bf16.mxu0 %v2817
    %3976 = vmatpush1.bf16.msra.mxu0 %v2816
    %3977 = vmatprep.subr.bf16.mxu0 %v2821
    %3978 = vmatpush1.bf16.msra.mxu0 %v2820
    %3979 = vmatprep.subr.bf16.mxu0 %v2825
    %3980 = vmatpush1.bf16.msra.mxu0 %v2824
    %3981 = vmatprep.subr.bf16.mxu0 0
    %3982 = vmatpush1.bf16.msra.mxu0 0
    %3983 = vmatprep.subr.bf16.mxu0 0
    %3984 = vmatpush1.bf16.msra.mxu0 0
    %3985 = vmatprep.subr.bf16.mxu0 0
    %3986 = vmatpush1.bf16.msra.mxu0 0
    %3987 = vmatprep.subr.bf16.mxu0 0
    %3988 = vmatpush1.bf16.msra.mxu0 0
    %3989 = vmatprep.subr.bf16.mxu0 0
    %3990 = vmatpush1.bf16.msra.mxu0 0
    %3991 = vmatprep.subr.bf16.mxu0 0
    %3992 = vmatpush1.bf16.msra.mxu0 0
    %3993 = vmatprep.subr.bf16.mxu0 0
    %3994 = vmatpush1.bf16.msra.mxu0 0
    %3995 = vmatprep.subr.bf16.mxu0 0
    %3996 = vmatpush1.bf16.msra.mxu0 0
    %3997 = vmatprep.mubr.bf16.mxu0 0
    %3998 = vmatmul.mubr.bf16.gmra.mrb[0].mxu0 %v3912
    %v3999 = vpop.f32.mrb[0].mxu0
    %v4000 = vadd.f32 0.0, %v3999
    %v4001 = vpop.f32.mrb[0].mxu0
    %v4002 = vadd.f32 0.0, %v4001
    %v4003 = vpop.f32.mrb[0].mxu0
    %v4004 = vadd.f32 0.0, %v4003
    %v4005 = vpop.f32.mrb[0].mxu0
    %v4006 = vadd.f32 0.0, %v4005
    %4007 = vdwg.mxu0
    %v4008 = vadd.f32 %v3914, %v3957
    %v4009 = vadd.f32 %v3915, %v3959
    %v4010 = vadd.f32 %v3916, %v4000
    %v4011 = vadd.f32 %v3917, %v4002
    %v4012 = vadd.f32 %v3918, %v3961
    %v4013 = vadd.f32 %v3919, %v3963
    %v4014 = vadd.f32 %v3920, %v4004
    %v4015 = vadd.f32 %v3921, %v4006
    %v4016 = vxor.u32 %v4008, 2147483648
    %v4017 = vxor.u32 %v4012, 2147483648
    %v4018 = vmul.f32 %v4016, 1.442695
    %v4019 = vpow.pop %v4018
    %v4020 = vmul.f32 %v4017, 1.442695
    %v4021 = vpow.pop %v4020
    %v4022 = vadd.f32 %v4019, 1.0
    %v4023 = vadd.f32 %v4021, 1.0
    %v4024 = vrcp.pop %v4022
    %v4025 = vmul.f32 1.0, %v4024
    %v4026 = vrcp.pop %v4023
    %v4027 = vmul.f32 1.0, %v4026
    %v4028 = vxor.u32 %v4009, 2147483648
    %v4029 = vxor.u32 %v4013, 2147483648
    %v4030 = vmul.f32 %v4028, 1.442695
    %v4031 = vpow.pop %v4030
    %v4032 = vmul.f32 %v4029, 1.442695
    %v4033 = vpow.pop %v4032
    %v4034 = vadd.f32 %v4031, 1.0
    %v4035 = vadd.f32 %v4033, 1.0
    %v4036 = vrcp.pop %v4034
    %v4037 = vmul.f32 1.0, %v4036
    %v4038 = vrcp.pop %v4035
    %v4039 = vmul.f32 1.0, %v4038
    %v4040 = vtanh.pop %v4010
    %v4041 = vtanh.pop %v4014
    %v4042 = vxor.u32 %v4011, 2147483648
    %v4043 = vxor.u32 %v4015, 2147483648
    %v4044 = vmul.f32 %v4042, 1.442695
    %v4045 = vpow.pop %v4044
    %v4046 = vmul.f32 %v4043, 1.442695
    %v4047 = vpow.pop %v4046
    %v4048 = vadd.f32 %v4045, 1.0
    %v4049 = vadd.f32 %v4047, 1.0
    %v4050 = vrcp.pop %v4048
    %v4051 = vmul.f32 1.0, %v4050
    %v4052 = vrcp.pop %v4049
    %v4053 = vmul.f32 1.0, %v4052
    %v4054 = vmul.f32 %v4037, %v3906
    %v4055 = vmul.f32 %v4039, %v3907
    %v4056 = vmul.f32 %v4025, %v4040
    %v4057 = vmul.f32 %v4027, %v4041
    %v4058 = vadd.f32 %v4054, %v4056
    %v4059 = vadd.f32 %v4055, %v4057
    %v4060 = vtanh.pop %v4058
    %v4061 = vtanh.pop %v4059
    %v4062 = vmul.f32 %v4051, %v4060
    %v4063 = vmul.f32 %v4053, %v4061
    %v4064 = vpack.c.bf16 %v4063, %v4062
    %4065 = vst [vmem:[%s2130] sm:$0xff] %v4064
    %4066 = vst [vmem:[%s2683] sm:$0xff] %v4062
    %4067 = vst [vmem:[%s2683 + $0x8] sm:$0xff] %v4063
    %4068 = vst [vmem:[%s2686] sm:$0xff] %v4058
    %4069 = vst [vmem:[%s2686 + $0x8] sm:$0xff] %v4059
    %v4070 = vld [vmem:[#allocation3] sm:$0xff]
    %v4071 = vld [vmem:[#allocation3 + $0x8] sm:$0xff]
    %v4072 = vld [vmem:[#allocation3 + $0x10] sm:$0xff]
    %v4073 = vld [vmem:[#allocation3 + $0x18] sm:$0xff]
    %v4074 = vld [vmem:[#allocation3 + $0x20] sm:$0xff]
    %v4075 = vld [vmem:[#allocation3 + $0x28] sm:$0xff]
    %v4076 = vld [vmem:[#allocation3 + $0x30] sm:$0xff]
    %v4077 = vld [vmem:[#allocation3 + $0x38] sm:$0xff]
    %v4078 = vld [vmem:[#allocation13] sm:$0xf]
    %v4079 = vld [vmem:[#allocation13 + $0x4] sm:$0xf]
    %v4080 = vld [vmem:[#allocation13 + $0x8] sm:$0xf]
    %v4081 = vld [vmem:[#allocation13 + $0xc] sm:$0xf]
    %v4082 = vld [vmem:[#allocation13 + $0x10] sm:$0xf]
    %v4083 = vld [vmem:[#allocation13 + $0x14] sm:$0xf]
    %v4084 = vld [vmem:[#allocation13 + $0x18] sm:$0xf]
    %v4085 = vld [vmem:[#allocation13 + $0x1c] sm:$0xf]
    %v4086 = vld [vmem:[#allocation13 + $0x20] sm:$0xf]
    %v4087 = vld [vmem:[#allocation13 + $0x24] sm:$0xf]
    %v4088 = vld [vmem:[#allocation13 + $0x28] sm:$0xf]
    %v4089 = vld [vmem:[#allocation13 + $0x2c] sm:$0xf]
    %v4090 = vld [vmem:[#allocation13 + $0x30] sm:$0xf]
    %v4091 = vld [vmem:[#allocation13 + $0x34] sm:$0xf]
    %v4092 = vld [vmem:[#allocation13 + $0x38] sm:$0xf]
    %v4093 = vld [vmem:[#allocation13 + $0x3c] sm:$0xf]
    %v4094 = vld [vmem:[%s7] sm:$0x1]
    %v4096 = vlaneseq
    %v4097 = vshrl.u32 %v4096, 7
    %v4098 = vsub.s32 0, %v4097
    %v4099 = vrot.slane %v4094, %v4098
    %v4117 = vunpack.c.l.b16 %v4078
    %v4118 = vunpack.c.l.b16 %v4079
    %v4119 = vunpack.c.l.b16 %v4080
    %v4120 = vunpack.c.l.b16 %v4081
    %v4121 = vunpack.c.l.b16 %v4082
    %v4122 = vunpack.c.l.b16 %v4083
    %v4123 = vunpack.c.l.b16 %v4084
    %v4124 = vunpack.c.l.b16 %v4085
    %v4125 = vunpack.c.l.b16 %v4086
    %v4126 = vunpack.c.l.b16 %v4087
    %v4127 = vunpack.c.l.b16 %v4088
    %v4128 = vunpack.c.l.b16 %v4089
    %v4129 = vunpack.c.l.b16 %v4090
    %v4130 = vunpack.c.l.b16 %v4091
    %v4131 = vunpack.c.l.b16 %v4092
    %v4132 = vunpack.c.l.b16 %v4093
    %v4133 = vpack.c.b16 %v4118, %v4117
    %v4134 = vpack.c.b16 %v4120, %v4119
    %v4135 = vpack.c.b16 %v4122, %v4121
    %v4136 = vpack.c.b16 %v4124, %v4123
    %v4137 = vpack.c.b16 %v4126, %v4125
    %v4138 = vpack.c.b16 %v4128, %v4127
    %v4139 = vpack.c.b16 %v4130, %v4129
    %v4140 = vpack.c.b16 %v4132, %v4131
    %4149 = vmatprep.subr.bf16.mxu0 0
    %4150 = vmatpush1.bf16.msra.mxu0 %v4133
    %4151 = vmatprep.subr.bf16.mxu0 0
    %4152 = vmatpush1.bf16.msra.mxu0 %v4134
    %4153 = vmatprep.subr.bf16.mxu0 0
    %4154 = vmatpush1.bf16.msra.mxu0 %v4135
    %4155 = vmatprep.subr.bf16.mxu0 0
    %4156 = vmatpush1.bf16.msra.mxu0 %v4136
    %4157 = vmatprep.subr.bf16.mxu0 0
    %4158 = vmatpush1.bf16.msra.mxu0 %v4137
    %4159 = vmatprep.subr.bf16.mxu0 0
    %4160 = vmatpush1.bf16.msra.mxu0 %v4138
    %4161 = vmatprep.subr.bf16.mxu0 0
    %4162 = vmatpush1.bf16.msra.mxu0 %v4139
    %4163 = vmatprep.subr.bf16.mxu0 0
    %4164 = vmatpush1.bf16.msra.mxu0 %v4140
    %4165 = vmatprep.subr.bf16.mxu0 0
    %4166 = vmatpush1.bf16.msra.mxu0 0
    %4167 = vmatprep.subr.bf16.mxu0 0
    %4168 = vmatpush1.bf16.msra.mxu0 0
    %4169 = vmatprep.subr.bf16.mxu0 0
    %4170 = vmatpush1.bf16.msra.mxu0 0
    %4171 = vmatprep.subr.bf16.mxu0 0
    %4172 = vmatpush1.bf16.msra.mxu0 0
    %4173 = vmatprep.subr.bf16.mxu0 0
    %4174 = vmatpush1.bf16.msra.mxu0 0
    %4175 = vmatprep.subr.bf16.mxu0 0
    %4176 = vmatpush1.bf16.msra.mxu0 0
    %4177 = vmatprep.subr.bf16.mxu0 0
    %4178 = vmatpush1.bf16.msra.mxu0 0
    %4179 = vmatprep.subr.bf16.mxu0 0
    %4180 = vmatpush1.bf16.msra.mxu0 0
    %4181 = vmatprep.mubr.bf16.mxu0 0
    %4182 = vmatmul.mubr.bf16.gmra.mrb[0].mxu0 %v4070
    %v4183 = vpop.f32.mrb[0].mxu0
    %v4184 = vadd.f32 %v4099, %v4183
    %v4185 = vpop.f32.mrb[0].mxu0
    %v4186 = vpop.f32.mrb[0].mxu0
    %v4187 = vadd.f32 %v4099, %v4186
    %v4188 = vpop.f32.mrb[0].mxu0
    %4189 = vmatprep.mubr.bf16.mxu0 0
    %4190 = vmatmul.mubr.bf16.gmra.mrb[0].mxu0 %v4071
    %v4191 = vpop.f32.mrb[0].mxu0
    %v4192 = vadd.f32 %v4099, %v4191
    %v4193 = vpop.f32.mrb[0].mxu0
    %v4194 = vpop.f32.mrb[0].mxu0
    %v4195 = vadd.f32 %v4099, %v4194
    %v4196 = vpop.f32.mrb[0].mxu0
    %4197 = vmatprep.mubr.bf16.mxu0 0
    %4198 = vmatmul.mubr.bf16.gmra.mrb[0].mxu0 %v4072
    %v4199 = vpop.f32.mrb[0].mxu0
    %v4200 = vadd.f32 %v4099, %v4199
    %v4201 = vpop.f32.mrb[0].mxu0
    %v4202 = vpop.f32.mrb[0].mxu0
    %v4203 = vadd.f32 %v4099, %v4202
    %v4204 = vpop.f32.mrb[0].mxu0
    %4205 = vmatprep.mubr.bf16.mxu0 0
    %4206 = vmatmul.mubr.bf16.gmra.mrb[0].mxu0 %v4073
    %v4207 = vpop.f32.mrb[0].mxu0
    %v4208 = vadd.f32 %v4099, %v4207
    %v4209 = vpop.f32.mrb[0].mxu0
    %v4210 = vpop.f32.mrb[0].mxu0
    %v4211 = vadd.f32 %v4099, %v4210
    %v4212 = vpop.f32.mrb[0].mxu0
    %4213 = vmatprep.mubr.bf16.mxu0 0
    %4214 = vmatmul.mubr.bf16.gmra.mrb[0].mxu0 %v4074
    %v4215 = vpop.f32.mrb[0].mxu0
    %v4216 = vadd.f32 %v4099, %v4215
    %v4217 = vpop.f32.mrb[0].mxu0
    %v4218 = vpop.f32.mrb[0].mxu0
    %v4219 = vadd.f32 %v4099, %v4218
    %v4220 = vpop.f32.mrb[0].mxu0
    %4221 = vmatprep.mubr.bf16.mxu0 0
    %4222 = vmatmul.mubr.bf16.gmra.mrb[0].mxu0 %v4075
    %v4223 = vpop.f32.mrb[0].mxu0
    %v4224 = vadd.f32 %v4099, %v4223
    %v4225 = vpop.f32.mrb[0].mxu0
    %v4226 = vpop.f32.mrb[0].mxu0
    %v4227 = vadd.f32 %v4099, %v4226
    %v4228 = vpop.f32.mrb[0].mxu0
    %4229 = vmatprep.mubr.bf16.mxu0 0
    %4230 = vmatmul.mubr.bf16.gmra.mrb[0].mxu0 %v4076
    %v4231 = vpop.f32.mrb[0].mxu0
    %v4232 = vadd.f32 %v4099, %v4231
    %v4233 = vpop.f32.mrb[0].mxu0
    %v4234 = vpop.f32.mrb[0].mxu0
    %v4235 = vadd.f32 %v4099, %v4234
    %v4236 = vpop.f32.mrb[0].mxu0
    %4237 = vmatprep.mubr.bf16.mxu0 0
    %4238 = vmatmul.mubr.bf16.gmra.mrb[0].mxu0 %v4077
    %v4239 = vpop.f32.mrb[0].mxu0
    %v4240 = vadd.f32 %v4099, %v4239
    %v4241 = vpop.f32.mrb[0].mxu0
    %v4242 = vpop.f32.mrb[0].mxu0
    %v4243 = vadd.f32 %v4099, %v4242
    %v4244 = vpop.f32.mrb[0].mxu0
    %4245 = vdwg.mxu0
    %4246 = vst [vmem:[#allocation15] sm:$0xff] %v4184
    %4247 = vst [vmem:[#allocation15 + $0x8] sm:$0xff] %v4187
    %4248 = vst [vmem:[#allocation15 + $0x10] sm:$0xff] %v4192
    %4249 = vst [vmem:[#allocation15 + $0x18] sm:$0xff] %v4195
    %4250 = vst [vmem:[#allocation15 + $0x20] sm:$0xff] %v4200
    %4251 = vst [vmem:[#allocation15 + $0x28] sm:$0xff] %v4203
    %4252 = vst [vmem:[#allocation15 + $0x30] sm:$0xff] %v4208
    %4253 = vst [vmem:[#allocation15 + $0x38] sm:$0xff] %v4211
    %4254 = vst [vmem:[#allocation15 + $0x40] sm:$0xff] %v4216
    %4255 = vst [vmem:[#allocation15 + $0x48] sm:$0xff] %v4219
    %4256 = vst [vmem:[#allocation15 + $0x50] sm:$0xff] %v4224
    %4257 = vst [vmem:[#allocation15 + $0x58] sm:$0xff] %v4227
    %4258 = vst [vmem:[#allocation15 + $0x60] sm:$0xff] %v4232
    %4259 = vst [vmem:[#allocation15 + $0x68] sm:$0xff] %v4235
    %4260 = vst [vmem:[#allocation15 + $0x70] sm:$0xff] %v4240
    %4261 = vst [vmem:[#allocation15 + $0x78] sm:$0xff] %v4243
    // Predicated region
    $region62: #{tpu_custom_call.1} parent=1 // pred_check
      _
    $region63: #{tpu_custom_call.1} parent=1 // pred_check_branch
      %4263 = sbr.rel (0) target = $region65
    $region64: #{tpu_custom_call.1} parent=1 // pred_region
      %s4265 = ssub.s32 2048, 2048
      %4266 = vsyncadd [#allocation6], %s4265
      %s4267 = sshll.u32 [#allocation15], 4
      %s4268 = int_to_ptr.vmem [resolvable:$true] %s4267
      %4273 = dma.vmem_to_hbm [thread:$0]  %s4268, 2048, %s8, [#allocation6], 128, 128, 8
    $region65: #{tpu_custom_call.1} parent=1 // pred_fallthru
      _
    // Predicated region
    $region66: #{tpu_custom_call.1} parent=1 // pred_check
      _
    $region67: #{tpu_custom_call.1} parent=1 // pred_check_branch
      %4275 = sbr.rel (0) target = $region69
    $region68: #{tpu_custom_call.1} parent=1 // pred_region
      %s4277 = ssub.s32 512, 512
      %4278 = vsyncadd [#allocation17], %s4277
      %s4279 = sshll.u32 [#allocation16], 4
      %s4280 = int_to_ptr.vmem [resolvable:$true] %s4279
      %4285 = dma.vmem_to_hbm [thread:$0]  %s4280, 512, %s9, [#allocation17], 128, 128, 8
    $region69: #{tpu_custom_call.1} parent=1 // pred_fallthru
      _
    // Predicated region
    $region70: #{tpu_custom_call.1} parent=1 // pred_check
      _
    $region71: #{tpu_custom_call.1} parent=1 // pred_check_branch
      %4287 = sbr.rel (0) target = $region73
    $region72: #{tpu_custom_call.1} parent=1 // pred_region
      %s4289 = ssub.s32 512, 512
      %4290 = vsyncadd [#allocation17], %s4289
      %s4291 = sshll.u32 [#allocation18], 4
      %s4292 = int_to_ptr.vmem [resolvable:$true] %s4291
      %4297 = dma.vmem_to_hbm [thread:$0]  %s4292, 512, %s10, [#allocation17], 128, 128, 8
    $region73: #{tpu_custom_call.1} parent=1 // pred_fallthru
      _
    // Predicated region
    $region74: #{tpu_custom_call.1} parent=1 // pred_check
      _
    $region75: #{tpu_custom_call.1} parent=1 // pred_check_branch
      %4299 = sbr.rel (0) target = $region77
    $region76: #{tpu_custom_call.1} parent=1 // pred_region
      %4300 = dma.done [#allocation6], 2048
    $region77: #{tpu_custom_call.1} parent=1 // pred_fallthru
      _
    // Predicated region
    $region78: #{tpu_custom_call.1} parent=1 // pred_check
      _
    $region79: #{tpu_custom_call.1} parent=1 // pred_check_branch
      %4302 = sbr.rel (0) target = $region81
    $region80: #{tpu_custom_call.1} parent=1 // pred_region
      %4303 = dma.done [#allocation17], 512
    $region81: #{tpu_custom_call.1} parent=1 // pred_fallthru
      _
    // Predicated region
    $region82: #{tpu_custom_call.1} parent=1 // pred_check
      _
    $region83: #{tpu_custom_call.1} parent=1 // pred_check_branch
      %4305 = sbr.rel (0) target = $region85
    $region84: #{tpu_custom_call.1} parent=1 // pred_region
      %4306 = dma.done [#allocation17], 512
    $region85: #{tpu_custom_call.1} parent=1 // pred_fallthru
      _
    %4307 = vsyncpa [#allocation5], 1
    %4308 = vsyncpa [#allocation8], 1
    %4309 = vsyncpa [#allocation11], 1
    %4310 = vsyncpa [#allocation14], 1
    %4311 = vsyncpa [#allocation6], 1
    %4312 = vsyncpa [#allocation17], 1

</llo_original>
